<compile_context>
chip_gen: v7x
topology: tpu7x:2x2x1
jax: 0.10.0
libtpu: 0.0.40
codegen_flags: <defaults>
</compile_context>

<pallas_src>
import functools

import jax
import jax.numpy as jnp
from jax.experimental import pallas as pl
from jax.experimental.pallas import tpu as pltpu

NEG_SLOPE = 0.1
LANE = 128


def _leaky(x):
    return jnp.where(x > 0, x, NEG_SLOPE * x)


def _round_up(x, m):
    return ((x + m - 1) // m) * m


def _detect_tpu():
    """Generation-aware VMEM limit (bytes) and incidence tile cap."""
    gen7 = False
    try:
        kind = jax.devices()[0].device_kind
        gen7 = "7" in str(kind)
    except Exception:
        pass
    vmem_cap = 64 * 1024 * 1024 if gen7 else 128 * 1024 * 1024
    try:
        info = pltpu.get_tpu_info()
        vmem_cap = int(getattr(info, "vmem_capacity_bytes", vmem_cap))
    except Exception:
        pass
    vmem_limit = min(int(vmem_cap * 3 // 4), 96 * 1024 * 1024)
    tile_cap = 1024 if gen7 else 512
    return vmem_limit, tile_cap


VMEM_LIMIT, TILE_CAP = _detect_tpu()


def _pick_tile(padded, cap=512):
    """Largest multiple of 128 that divides `padded` and is <= cap."""
    t = min(cap, padded)
    t = (t // LANE) * LANE
    while t >= LANE:
        if padded % t == 0:
            return t
        t -= LANE
    return padded


def _row_tile(r, cap=512):
    """Row tile for encoders/heads; guarantee >=2 parallel grid steps (2-TC chips)."""
    tr = _pick_tile(r, cap)
    if r // tr == 1 and (r // 2) % 8 == 0 and r // 2 > 0:
        tr = r // 2
    return tr


def _pad_rows(n):
    p = _round_up(n, LANE)
    if p > 512:
        p = _round_up(n, 512)
    return p


# ----------------------------------------------------------------------------
# Fused MLP kernel (row-tiled): encoders
# ----------------------------------------------------------------------------
def _fused_mlp_kernel(*refs, acts):
    x_ref = refs[0]
    o_ref = refs[-1]
    h = x_ref[...]
    for i, act in enumerate(acts):
        w = refs[1 + 2 * i][...]
        b = refs[2 + 2 * i][...]
        y = jnp.dot(h, w, preferred_element_type=jnp.float32) + b
        if act in ("leaky", "leaky_abs"):
            y = _leaky(y)
        if act == "leaky_abs":
            y = jnp.abs(y)
        # cast only when it feeds the next MXU op (f32 elementwise path otherwise)
        h = y.astype(w.dtype) if i + 1 < len(acts) else y
    o_ref[...] = h.astype(o_ref.dtype)


def pallas_fused_mlp(x, layers, acts, out_dtype=jnp.bfloat16):
    """layers: list of (w_bf16 [k_i,k_{i+1}], b_f32 [1,k_{i+1}]); whole chain in one kernel."""
    r, k0 = x.shape
    tr = _row_tile(r)
    n_out = layers[-1][0].shape[1]
    in_specs = [pl.BlockSpec((tr, k0), lambda i: (i, 0))]
    args = [x]
    for (w, b) in layers:
        in_specs.append(pl.BlockSpec(w.shape, lambda i: (0, 0)))
        in_specs.append(pl.BlockSpec(b.shape, lambda i: (0, 0)))
        args.extend([w, b])
    return pl.pallas_call(
        functools.partial(_fused_mlp_kernel, acts=tuple(acts)),
        grid=(r // tr,),
        in_specs=in_specs,
        out_specs=pl.BlockSpec((tr, n_out), lambda i: (i, 0)),
        out_shape=jax.ShapeDtypeStruct((r, n_out), out_dtype),
        compiler_params=pltpu.CompilerParams(
            dimension_semantics=("parallel",), vmem_limit_bytes=VMEM_LIMIT),
    )(*args)


# ----------------------------------------------------------------------------
# Fully-fused multi-layer HyperConv (small/medium graphs): one pallas_call for
# all layers; h / h_net live in f32 VMEM scratch; each layer writes its slice of
# the stacked head inputs directly (no jnp.stack, no per-layer hnet HBM round-trip).
# ----------------------------------------------------------------------------
def _fused_conv_kernel(a_sum_ref, asink_t_ref, h0_ref, hnet0_ref,
                       wn_ref, bn_ref, wv_ref, bv_ref,
                       h_out_ref, hnet_out_ref, h_sc, hnet_sc):
    l = pl.program_id(0)

    @pl.when(l == 0)
    def _():
        h_sc[...] = h0_ref[...].astype(jnp.float32)
        hnet_sc[...] = hnet0_ref[...].astype(jnp.float32)

    @pl.when(l > 0)
    def _():
        h_bf = h_sc[...].astype(jnp.bfloat16)
        # net update: hnet' = leaky((hnet + A_sum @ h) @ Wn + bn)
        agg = jnp.dot(a_sum_ref[...], h_bf, preferred_element_type=jnp.float32)
        xn = (hnet_sc[...] + agg).astype(jnp.bfloat16)
        hnet_new = _leaky(
            jnp.dot(xn, wn_ref[0], preferred_element_type=jnp.float32) + bn_ref[0])
        # node update: h' = leaky((h + Asink^T @ hnet') @ Wv + bv)
        msg = jnp.dot(asink_t_ref[...], hnet_new.astype(jnp.bfloat16),
                      preferred_element_type=jnp.float32)
        xv = (h_sc[...] + msg).astype(jnp.bfloat16)
        h_new = _leaky(
            jnp.dot(xv, wv_ref[0], preferred_element_type=jnp.float32) + bv_ref[0])
        hnet_sc[...] = hnet_new
        h_sc[...] = h_new

    h_out_ref[0] = h_sc[...].astype(h_out_ref.dtype)
    hnet_out_ref[0] = hnet_sc[...].astype(hnet_out_ref.dtype)


def _fused_conv_fits(n_pad, m_pad, d):
    bytes_needed = (
        2 * 2 * (m_pad * n_pad * 2)                 # a_sum + asink_t (bf16, 2 bufs each)
        + 2 * 2 * (n_pad * d * 2 + m_pad * d * 2)   # h0/hnet0 in + per-layer out slices
        + 2 * 2 * (d * d * 2)                       # Wn, Wv blocks (double buffered)
        + (n_pad + m_pad) * d * 4                   # f32 scratch
    )
    return bytes_needed <= int(VMEM_LIMIT * 0.6)


def pallas_conv_stack(h0, hnet0, a_sum, asink_t, wn_stack, bn_stack, wv_stack, bv_stack,
                      num_layer):
    n_pad, d = h0.shape
    m_pad = hnet0.shape[0]
    num_steps = num_layer + 1
    flops = num_layer * (2 * m_pad * n_pad * d * 2 + 2 * (m_pad + n_pad) * d * d)
    bytes_acc = 2 * (2 * m_pad * n_pad + (num_steps + 1) * (n_pad + m_pad) * d
                     + 2 * num_steps * d * d)
    return pl.pallas_call(
        _fused_conv_kernel,
        grid=(num_steps,),
        in_specs=[
            pl.BlockSpec((m_pad, n_pad), lambda l: (0, 0)),   # a_sum
            pl.BlockSpec((n_pad, m_pad), lambda l: (0, 0)),   # asink^T
            pl.BlockSpec((n_pad, d), lambda l: (0, 0)),       # h0
            pl.BlockSpec((m_pad, d), lambda l: (0, 0)),       # hnet0
            pl.BlockSpec((1, d, d), lambda l: (l, 0, 0)),     # Wn (layer l uses slice l; 0 dummy)
            pl.BlockSpec((1, 1, d), lambda l: (l, 0, 0)),     # bn
            pl.BlockSpec((1, d, d), lambda l: (l, 0, 0)),     # Wv
            pl.BlockSpec((1, 1, d), lambda l: (l, 0, 0)),     # bv
        ],
        out_specs=[
            pl.BlockSpec((1, n_pad, d), lambda l: (l, 0, 0)),
            pl.BlockSpec((1, m_pad, d), lambda l: (l, 0, 0)),
        ],
        out_shape=(jax.ShapeDtypeStruct((num_steps, n_pad, d), jnp.bfloat16),
                   jax.ShapeDtypeStruct((num_steps, m_pad, d), jnp.bfloat16)),
        scratch_shapes=[pltpu.VMEM((n_pad, d), jnp.float32),
                        pltpu.VMEM((m_pad, d), jnp.float32)],
        compiler_params=pltpu.CompilerParams(
            dimension_semantics=("arbitrary",), vmem_limit_bytes=VMEM_LIMIT),
        cost_estimate=pl.CostEstimate(flops=flops, transcendentals=0,
                                      bytes_accessed=bytes_acc),
    )(a_sum, asink_t, h0, hnet0, wn_stack, bn_stack, wv_stack, bv_stack)


# ----------------------------------------------------------------------------
# Tiled two-phase HyperConv (fallback for graphs too large for the fused kernel)
# ----------------------------------------------------------------------------
def _net_update_kernel(a_ref, h_ref, hnet_ref, wn_ref, bn_ref, o_ref, acc_ref):
    k = pl.program_id(1)

    @pl.when(k == 0)
    def _():
        acc_ref[...] = jnp.zeros_like(acc_ref)

    acc_ref[...] += jnp.dot(a_ref[...], h_ref[...], preferred_element_type=jnp.float32)

    @pl.when(k == pl.num_programs(1) - 1)
    def _():
        x = (hnet_ref[...].astype(jnp.float32) + acc_ref[...]).astype(wn_ref.dtype)
        y = _leaky(jnp.dot(x, wn_ref[...], preferred_element_type=jnp.float32) + bn_ref[...])
        o_ref[...] = y.astype(o_ref.dtype)


def _node_update_kernel(at_ref, hnet_ref, h_ref, wv_ref, bv_ref, o_ref, acc_ref):
    k = pl.program_id(1)

    @pl.when(k == 0)
    def _():
        acc_ref[...] = jnp.zeros_like(acc_ref)

    acc_ref[...] += jnp.dot(at_ref[...], hnet_ref[...], preferred_element_type=jnp.float32)

    @pl.when(k == pl.num_programs(1) - 1)
    def _():
        x = (h_ref[...].astype(jnp.float32) + acc_ref[...]).astype(wv_ref.dtype)
        y = _leaky(jnp.dot(x, wv_ref[...], preferred_element_type=jnp.float32) + bv_ref[...])
        o_ref[...] = y.astype(o_ref.dtype)


def pallas_hyperconv(h, hnet, a_sum, asink_t, wn, bn, wv, bv):
    n_pad, d = h.shape
    m_pad = hnet.shape[0]
    tm = _pick_tile(m_pad, TILE_CAP)
    tn = _pick_tile(n_pad, TILE_CAP)

    flops_a = 2 * m_pad * n_pad * d + 2 * m_pad * d * d
    bytes_a = 2 * (m_pad * n_pad + n_pad * d + 2 * m_pad * d + d * d) + 4 * d
    hnet_new = pl.pallas_call(
        _net_update_kernel,
        grid=(m_pad // tm, n_pad // tn),
        in_specs=[
            pl.BlockSpec((tm, tn), lambda m, k: (m, k)),   # a_sum tile
            pl.BlockSpec((tn, d), lambda m, k: (k, 0)),    # h (contraction tile)
            pl.BlockSpec((tm, d), lambda m, k: (m, 0)),    # hnet (row-resident)
            pl.BlockSpec((d, d), lambda m, k: (0, 0)),     # Wn
            pl.BlockSpec((1, d), lambda m, k: (0, 0)),     # bn
        ],
        out_specs=pl.BlockSpec((tm, d), lambda m, k: (m, 0)),
        out_shape=jax.ShapeDtypeStruct((m_pad, d), jnp.bfloat16),
        scratch_shapes=[pltpu.VMEM((tm, d), jnp.float32)],
        compiler_params=pltpu.CompilerParams(
            dimension_semantics=("parallel", "arbitrary"),
            vmem_limit_bytes=VMEM_LIMIT),
        cost_estimate=pl.CostEstimate(flops=flops_a, transcendentals=0,
                                      bytes_accessed=bytes_a),
    )(a_sum, h, hnet, wn, bn)

    flops_b = 2 * m_pad * n_pad * d + 2 * n_pad * d * d
    bytes_b = 2 * (m_pad * n_pad + m_pad * d + 2 * n_pad * d + d * d) + 4 * d
    h_new = pl.pallas_call(
        _node_update_kernel,
        grid=(n_pad // tn, m_pad // tm),
        in_specs=[
            pl.BlockSpec((tn, tm), lambda n, k: (n, k)),   # asink^T tile (plain dot, no transpose)
            pl.BlockSpec((tm, d), lambda n, k: (k, 0)),    # hnet_new (contraction tile)
            pl.BlockSpec((tn, d), lambda n, k: (n, 0)),    # h (row-resident)
            pl.BlockSpec((d, d), lambda n, k: (0, 0)),     # Wv
            pl.BlockSpec((1, d), lambda n, k: (0, 0)),     # bv
        ],
        out_specs=pl.BlockSpec((tn, d), lambda n, k: (n, 0)),
        out_shape=jax.ShapeDtypeStruct((n_pad, d), jnp.bfloat16),
        scratch_shapes=[pltpu.VMEM((tn, d), jnp.float32)],
        compiler_params=pltpu.CompilerParams(
            dimension_semantics=("parallel", "arbitrary"),
            vmem_limit_bytes=VMEM_LIMIT),
        cost_estimate=pl.CostEstimate(flops=flops_b, transcendentals=0,
                                      bytes_accessed=bytes_b),
    )(asink_t, hnet_new, h, wv, bv)

    return hnet_new, h_new


# ----------------------------------------------------------------------------
# Fused head kernel: per-layer fc1 accumulation (no concat) -> fc2 -> (final)
# ----------------------------------------------------------------------------
def _head_kernel(*refs, n_tail, tail_acts):
    h_ref, w1_ref, b1_ref = refs[0], refs[1], refs[2]
    tail = refs[3:3 + 2 * n_tail]
    o_ref = refs[3 + 2 * n_tail]
    acc_ref = refs[4 + 2 * n_tail]
    l = pl.program_id(1)

    @pl.when(l == 0)
    def _():
        acc_ref[...] = jnp.zeros_like(acc_ref)

    acc_ref[...] += jnp.dot(h_ref[0], w1_ref[0], preferred_element_type=jnp.float32)

    @pl.when(l == pl.num_programs(1) - 1)
    def _():
        y = _leaky(acc_ref[...] + b1_ref[...])
        for t in range(n_tail):
            w = tail[2 * t][...]
            b = tail[2 * t + 1][...]
            y = jnp.dot(y.astype(w.dtype), w, preferred_element_type=jnp.float32) + b
            act = tail_acts[t]
            if act in ("leaky", "leaky_abs"):
                y = _leaky(y)
            if act == "leaky_abs":
                y = jnp.abs(y)
        o_ref[...] = y.astype(o_ref.dtype)


def pallas_head(h_stack, w1_stack, b1, tail, tail_acts, out_dtype=jnp.float32):
    """h_stack [L,R,D] bf16, w1_stack [L,D,H1] bf16 (fc1 split per layer), tail=[(W,b),...]."""
    num_l, r, d = h_stack.shape
    h1 = w1_stack.shape[2]
    tr = _row_tile(r)
    n_out = tail[-1][0].shape[1]

    in_specs = [
        pl.BlockSpec((1, tr, d), lambda i, l: (l, i, 0)),
        pl.BlockSpec((1, d, h1), lambda i, l: (l, 0, 0)),
        pl.BlockSpec((1, h1), lambda i, l: (0, 0)),
    ]
    args = [h_stack, w1_stack, b1]
    for (w, b) in tail:
        in_specs.append(pl.BlockSpec(w.shape, lambda i, l: (0, 0)))
        in_specs.append(pl.BlockSpec(b.shape, lambda i, l: (0, 0)))
        args.extend([w, b])

    flops = 2 * num_l * r * d * h1 + sum(2 * r * w.shape[0] * w.shape[1] for (w, _) in tail)
    bytes_acc = 2 * (num_l * r * d + num_l * d * h1) + 4 * r * n_out \
        + sum(2 * w.size for (w, _) in tail)
    return pl.pallas_call(
        functools.partial(_head_kernel, n_tail=len(tail), tail_acts=tuple(tail_acts)),
        grid=(r // tr, num_l),
        in_specs=in_specs,
        out_specs=pl.BlockSpec((tr, n_out), lambda i, l: (i, 0)),
        out_shape=jax.ShapeDtypeStruct((r, n_out), out_dtype),
        scratch_shapes=[pltpu.VMEM((tr, h1), jnp.float32)],
        compiler_params=pltpu.CompilerParams(
            dimension_semantics=("parallel", "arbitrary"),
            vmem_limit_bytes=VMEM_LIMIT),
        cost_estimate=pl.CostEstimate(flops=flops, transcendentals=0,
                                      bytes_accessed=bytes_acc),
    )(*args)


# ----------------------------------------------------------------------------
# Parameter init (deterministic, PyTorch-Linear-style uniform) + packing (pad+bf16)
# ----------------------------------------------------------------------------
def init_linear(key, fan_in, fan_out):
    kw, kb = jax.random.split(key)
    bound = 1.0 / jnp.sqrt(jnp.float32(fan_in))
    w = jax.random.uniform(kw, (fan_in, fan_out), jnp.float32, -bound, bound)
    b = jax.random.uniform(kb, (fan_out,), jnp.float32, -bound, bound)
    return w, b


def _pad2(w, rows, cols):
    return jnp.zeros((rows, cols), w.dtype).at[:w.shape[0], :w.shape[1]].set(w)


def _pack_linear(w, b, rows_pad, cols_pad):
    wp = _pad2(w, rows_pad, cols_pad).astype(jnp.bfloat16)
    bp = jnp.zeros((1, cols_pad), jnp.float32).at[0, :b.shape[0]].set(b)
    return wp, bp


def init_params(key, num_layer, emb_dim, out_node_dim, out_net_dim, node_dim, net_dim):
    keys = jax.random.split(key, 7 + 2 * num_layer)
    D = _round_up(emb_dim, LANE)
    H1_NODE = _round_up(256, LANE)
    H1_NET = _round_up(64, LANE)
    OUTN = _round_up(out_node_dim, LANE)
    OUTE = _round_up(out_net_dim, LANE)
    FIN = LANE  # final scalar output padded to one lane group

    p = {}
    w, b = init_linear(keys[0], node_dim, emb_dim)
    p["node_enc1"] = _pack_linear(w, b, node_dim, D)
    w, b = init_linear(keys[1], emb_dim, emb_dim)
    p["node_enc2"] = _pack_linear(w, b, D, D)
    w, b = init_linear(keys[2], net_dim, emb_dim)
    p["net_enc"] = _pack_linear(w, b, net_dim, D)

    # conv weights stacked with a dummy zero layer 0 (fused conv grid step 0 = encoder copy)
    wn_l = [jnp.zeros((D, D), jnp.bfloat16)]
    bn_l = [jnp.zeros((1, D), jnp.float32)]
    wv_l = [jnp.zeros((D, D), jnp.bfloat16)]
    bv_l = [jnp.zeros((1, D), jnp.float32)]
    for layer in range(num_layer):
        wn, bn = init_linear(keys[3 + 2 * layer], emb_dim, emb_dim)
        wv, bv = init_linear(keys[4 + 2 * layer], emb_dim, emb_dim)
        wn_p, bn_p = _pack_linear(wn, bn, D, D)
        wv_p, bv_p = _pack_linear(wv, bv, D, D)
        wn_l.append(wn_p); bn_l.append(bn_p)
        wv_l.append(wv_p); bv_l.append(bv_p)
    p["wn_stack"] = jnp.stack(wn_l, 0)                 # (L+1, D, D)
    p["bn_stack"] = jnp.stack(bn_l, 0)                 # (L+1, 1, D)
    p["wv_stack"] = jnp.stack(wv_l, 0)
    p["bv_stack"] = jnp.stack(bv_l, 0)

    # fc1 weights split per conv layer so the concat never has to be materialized.
    w, b = init_linear(keys[3 + 2 * num_layer], (num_layer + 1) * emb_dim, 256)
    chunks = [_pad2(w[l * emb_dim:(l + 1) * emb_dim], D, H1_NODE).astype(jnp.bfloat16)
              for l in range(num_layer + 1)]
    p["fc1_node_w"] = jnp.stack(chunks, 0)
    p["fc1_node_b"] = jnp.zeros((1, H1_NODE), jnp.float32).at[0, :256].set(b)

    w, b = init_linear(keys[4 + 2 * num_layer], 256, out_node_dim)
    p["fc2_node"] = _pack_linear(w, b, H1_NODE, OUTN)

    w, b = init_linear(keys[5 + 2 * num_layer], (num_layer + 1) * emb_dim, 64)
    chunks = [_pad2(w[l * emb_dim:(l + 1) * emb_dim], D, H1_NET).astype(jnp.bfloat16)
              for l in range(num_layer + 1)]
    p["fc1_net_w"] = jnp.stack(chunks, 0)
    p["fc1_net_b"] = jnp.zeros((1, H1_NET), jnp.float32).at[0, :64].set(b)

    w, b = init_linear(keys[6 + 2 * num_layer], 64, out_net_dim)
    p["fc2_net"] = _pack_linear(w, b, H1_NET, OUTE)

    w, b = init_linear(jax.random.fold_in(key, 999), out_node_dim, 1)
    p["final_node_mlp"] = _pack_linear(w, b, OUTN, FIN)
    return p


# ----------------------------------------------------------------------------
# Forward pass (glue in plain JAX, hot path in the Pallas kernels above)
# ----------------------------------------------------------------------------
def gnn_node_forward(params, node_x, net_x,
                     edge_index_sink, edge_weight_sink, edge_mask,
                     edge_index_source, num_layer, num_nodes, num_nets,
                     out_net_dim):
    n_pad = _pad_rows(num_nodes)
    m_pad = _pad_rows(num_nets)
    D = params["wn_stack"].shape[-1]

    # pad rows + cast inputs to bf16 (padded rows never reach real outputs: incidence
    # entries for them are zero and the padded rows are sliced away at the end)
    node_x_p = jnp.zeros((n_pad, node_x.shape[1]), jnp.bfloat16
                         ).at[:num_nodes].set(node_x.astype(jnp.bfloat16))
    net_x_p = jnp.zeros((m_pad, net_x.shape[1]), jnp.bfloat16
                        ).at[:num_nets].set(net_x.astype(jnp.bfloat16))

    # dense bf16 incidence arrays, built directly in bf16, source+sink pre-summed,
    # sink incidence built directly transposed (see TODO(synk) re: CSR path).
    src_nodes, src_nets = edge_index_source[0], edge_index_source[1]
    sink_nodes, sink_nets = edge_index_sink[0], edge_index_sink[1]
    w_eff = (edge_weight_sink * edge_mask).astype(jnp.bfloat16)  # dropout folded into weights
    a_sum = jnp.zeros((m_pad, n_pad), jnp.bfloat16)
    a_sum = a_sum.at[src_nets, src_nodes].add(jnp.ones(src_nodes.shape, jnp.bfloat16))
    a_sum = a_sum.at[sink_nets, sink_nodes].add(w_eff)
    asink_t = jnp.zeros((n_pad, m_pad), jnp.bfloat16).at[sink_nodes, sink_nets].add(w_eff)

    # fused encoders
    h = pallas_fused_mlp(node_x_p, [params["node_enc1"], params["node_enc2"]],
                         acts=("leaky", "leaky"))
    h_net = pallas_fused_mlp(net_x_p, [params["net_enc"]], acts=("leaky",))

    if _fused_conv_fits(n_pad, m_pad, D):
        # all conv layers in one kernel; stacked head inputs written directly
        h_stack, h_net_stack = pallas_conv_stack(
            h, h_net, a_sum, asink_t,
            params["wn_stack"], params["bn_stack"],
            params["wv_stack"], params["bv_stack"], num_layer)
    else:
        h_list = [h]
        h_net_list = [h_net]
        for layer in range(num_layer):
            wn = params["wn_stack"][layer + 1]
            bn = params["bn_stack"][layer + 1]
            wv = params["wv_stack"][layer + 1]
            bv = params["bv_stack"][layer + 1]
            h_net_new, h_new = pallas_hyperconv(h_list[-1], h_net_list[-1],
                                                a_sum, asink_t, wn, bn, wv, bv)
            h_list.append(h_new)
            h_net_list.append(h_net_new)
        h_stack = jnp.stack(h_list, axis=0)
        h_net_stack = jnp.stack(h_net_list, axis=0)

    # heads: fc1 split per layer and accumulated inside the kernel (no HBM concat)
    node_out = pallas_head(h_stack, params["fc1_node_w"], params["fc1_node_b"],
                           tail=[params["fc2_node"], params["final_node_mlp"]],
                           tail_acts=("leaky", "none"))
    net_out = pallas_head(h_net_stack, params["fc1_net_w"], params["fc1_net_b"],
                          tail=[params["fc2_net"]],
                          tail_acts=("leaky_abs",))

    return node_out[:num_nodes, :1], net_out[:num_nets, :out_net_dim]


# ----------------------------------------------------------------------------
if __name__ == "__main__":
    # hyperparameters (vn=False path of GNN_node)
    num_layer = 2
    emb_dim = 32
    out_node_dim = 8
    out_net_dim = 4
    node_dim = 6
    net_dim = 5

    num_nodes = 16
    num_nets = 8
    num_sink_edges = 24

    key = jax.random.PRNGKey(0)
    k_par, k_nx, k_netx, k_sn, k_st, k_w, k_src, k_drop = jax.random.split(key, 8)

    params = init_params(k_par, num_layer, emb_dim, out_node_dim, out_net_dim,
                         node_dim, net_dim)

    node_x = jax.random.normal(k_nx, (num_nodes, node_dim), jnp.float32)
    net_x = jax.random.normal(k_netx, (num_nets, net_dim), jnp.float32)

    # ('node','as_a_sink_of','net') edges: row0 = node idx, row1 = net idx
    sink_nodes = jax.random.randint(k_sn, (num_sink_edges,), 0, num_nodes)
    sink_nets = jax.random.randint(k_st, (num_sink_edges,), 0, num_nets)
    edge_index_sink = jnp.stack([sink_nodes, sink_nets], axis=0)
    edge_weight_sink = jax.random.uniform(k_w, (num_sink_edges,), jnp.float32, 0.1, 1.0)
    # deterministic dropout_edge(p=0.4) mask (keep prob 0.6)
    edge_mask = jax.random.bernoulli(k_drop, 0.6, (num_sink_edges,)).astype(jnp.float32)

    # ('node','as_a_source_of','net') edges: one driver node per net
    source_nodes = jax.random.randint(k_src, (num_nets,), 0, num_nodes)
    source_nets = jnp.arange(num_nets, dtype=jnp.int32)
    edge_index_source = jnp.stack([source_nodes, source_nets], axis=0)

    fwd = jax.jit(functools.partial(
        gnn_node_forward, num_layer=num_layer, num_nodes=num_nodes,
        num_nets=num_nets, out_net_dim=out_net_dim))
    node_out, net_out = fwd(params, node_x, net_x,
                            edge_index_sink, edge_weight_sink, edge_mask,
                            edge_index_source)
    jax.block_until_ready(node_out)
    jax.block_until_ready(net_out)

    assert node_out.shape == (num_nodes, 1)
    assert net_out.shape == (num_nets, out_net_dim)
    print("KERNEL_OK")
</pallas_src>

<mosaic_0001>
module attributes {stable_mosaic.version = 11 : i64} {
  func.func @_fused_mlp_kernel(%arg0: i32, %arg1: memref<64x6xbf16, #tpu.memory_space<vmem>>, %arg2: memref<6x128xbf16, #tpu.memory_space<vmem>>, %arg3: memref<1x128xf32, #tpu.memory_space<vmem>>, %arg4: memref<128x128xbf16, #tpu.memory_space<vmem>>, %arg5: memref<1x128xf32, #tpu.memory_space<vmem>>, %arg6: memref<64x128xbf16, #tpu.memory_space<vmem>>) attributes {dimension_semantics = [#tpu.dimension_semantics<parallel>], iteration_bounds = array<i64: 2>, scalar_prefetch = 0 : i64, scratch_operands = 0 : i64, tpu.core_type = #tpu.core_type<tc>, window_params = [{transform_indices = @transform_0, window_bounds = array<i64: 64, 6>}, {pipeline_mode = #tpu.pipeline_mode<synchronous>, transform_indices = @transform_1, window_bounds = array<i64: 6, 128>}, {pipeline_mode = #tpu.pipeline_mode<synchronous>, transform_indices = @transform_2, window_bounds = array<i64: 1, 128>}, {pipeline_mode = #tpu.pipeline_mode<synchronous>, transform_indices = @transform_3, window_bounds = array<i64: 128, 128>}, {pipeline_mode = #tpu.pipeline_mode<synchronous>, transform_indices = @transform_4, window_bounds = array<i64: 1, 128>}, {transform_indices = @transform_5, window_bounds = array<i64: 64, 128>}]} {
    %c0 = arith.constant 0 : index
    %c0_0 = arith.constant 0 : index
    %0 = vector.load %arg1[%c0, %c0_0] : memref<64x6xbf16, #tpu.memory_space<vmem>>, vector<64x6xbf16>
    %c0_1 = arith.constant 0 : index
    %c0_2 = arith.constant 0 : index
    %1 = vector.load %arg2[%c0_1, %c0_2] : memref<6x128xbf16, #tpu.memory_space<vmem>>, vector<6x128xbf16>
    %c0_3 = arith.constant 0 : index
    %c0_4 = arith.constant 0 : index
    %2 = vector.load %arg3[%c0_3, %c0_4] : memref<1x128xf32, #tpu.memory_space<vmem>>, vector<1x128xf32>
    %cst = arith.constant dense<0.000000e+00> : vector<64x128xf32>
    %3 = tpu.matmul %0, %1, %cst {dimension_numbers = #tpu.dot_dimension_numbers<[1], [0], [0], [1], [0, 0, 1, 1], [], []>} : vector<64x6xbf16>, vector<6x128xbf16>, vector<64x128xf32> -> vector<64x128xf32>
    %4 = vector.broadcast %2 : vector<1x128xf32> to vector<64x128xf32>
    %5 = arith.addf %3, %4 : vector<64x128xf32>
    %cst_5 = arith.constant 0.000000e+00 : f32
    %6 = vector.broadcast %cst_5 : f32 to vector<64x128xf32>
    %7 = arith.cmpf ogt, %5, %6 : vector<64x128xf32>
    %cst_6 = arith.constant 1.000000e-01 : f32
    %8 = vector.broadcast %cst_6 : f32 to vector<64x128xf32>
    %9 = arith.mulf %8, %5 : vector<64x128xf32>
    %10 = arith.select %7, %5, %9 : vector<64x128xi1>, vector<64x128xf32>
    %11 = arith.truncf %10 : vector<64x128xf32> to vector<64x128xbf16>
    %c0_7 = arith.constant 0 : index
    %c0_8 = arith.constant 0 : index
    %12 = vector.load %arg4[%c0_7, %c0_8] : memref<128x128xbf16, #tpu.memory_space<vmem>>, vector<128x128xbf16>
    %c0_9 = arith.constant 0 : index
    %c0_10 = arith.constant 0 : index
    %13 = vector.load %arg5[%c0_9, %c0_10] : memref<1x128xf32, #tpu.memory_space<vmem>>, vector<1x128xf32>
    %cst_11 = arith.constant dense<0.000000e+00> : vector<64x128xf32>
    %14 = tpu.matmul %11, %12, %cst_11 {dimension_numbers = #tpu.dot_dimension_numbers<[1], [0], [0], [1], [0, 0, 1, 1], [], []>} : vector<64x128xbf16>, vector<128x128xbf16>, vector<64x128xf32> -> vector<64x128xf32>
    %15 = vector.broadcast %13 : vector<1x128xf32> to vector<64x128xf32>
    %16 = arith.addf %14, %15 : vector<64x128xf32>
    %cst_12 = arith.constant 0.000000e+00 : f32
    %17 = vector.broadcast %cst_12 : f32 to vector<64x128xf32>
    %18 = arith.cmpf ogt, %16, %17 : vector<64x128xf32>
    %cst_13 = arith.constant 1.000000e-01 : f32
    %19 = vector.broadcast %cst_13 : f32 to vector<64x128xf32>
    %20 = arith.mulf %19, %16 : vector<64x128xf32>
    %21 = arith.select %18, %16, %20 : vector<64x128xi1>, vector<64x128xf32>
    %22 = arith.truncf %21 : vector<64x128xf32> to vector<64x128xbf16>
    %c0_14 = arith.constant 0 : index
    %c0_15 = arith.constant 0 : index
    %23 = vector.load %arg6[%c0_14, %c0_15] : memref<64x128xbf16, #tpu.memory_space<vmem>>, vector<64x128xbf16>
    tpu.vector_store %arg6[%c0_14, %c0_15], %22 {strides = array<i32>} : memref<64x128xbf16, #tpu.memory_space<vmem>>, vector<64x128xbf16>,
    return
  }
  func.func @transform_0(%arg0: i32) -> (i32, i32) {
    %c0_i32 = arith.constant 0 : i32
    %c0_i32_0 = arith.constant 0 : i32
    return %arg0, %c0_i32 : i32, i32
  }
  func.func @transform_1(%arg0: i32) -> (i32, i32) {
    %c0_i32 = arith.constant 0 : i32
    %c0_i32_0 = arith.constant 0 : i32
    %c0_i32_1 = arith.constant 0 : i32
    return %c0_i32, %c0_i32_0 : i32, i32
  }
  func.func @transform_2(%arg0: i32) -> (i32, i32) {
    %c0_i32 = arith.constant 0 : i32
    %c0_i32_0 = arith.constant 0 : i32
    %c0_i32_1 = arith.constant 0 : i32
    return %c0_i32, %c0_i32_0 : i32, i32
  }
  func.func @transform_3(%arg0: i32) -> (i32, i32) {
    %c0_i32 = arith.constant 0 : i32
    %c0_i32_0 = arith.constant 0 : i32
    %c0_i32_1 = arith.constant 0 : i32
    return %c0_i32, %c0_i32_0 : i32, i32
  }
  func.func @transform_4(%arg0: i32) -> (i32, i32) {
    %c0_i32 = arith.constant 0 : i32
    %c0_i32_0 = arith.constant 0 : i32
    %c0_i32_1 = arith.constant 0 : i32
    return %c0_i32, %c0_i32_0 : i32, i32
  }
  func.func @transform_5(%arg0: i32) -> (i32, i32) {
    %c0_i32 = arith.constant 0 : i32
    %c0_i32_0 = arith.constant 0 : i32
    return %arg0, %c0_i32 : i32, i32
  }
}

module attributes {stable_mosaic.version = 11 : i64} {
  func.func @_fused_mlp_kernel(%arg0: i32, %arg1: memref<64x5xbf16, #tpu.memory_space<vmem>>, %arg2: memref<5x128xbf16, #tpu.memory_space<vmem>>, %arg3: memref<1x128xf32, #tpu.memory_space<vmem>>, %arg4: memref<64x128xbf16, #tpu.memory_space<vmem>>) attributes {dimension_semantics = [#tpu.dimension_semantics<parallel>], iteration_bounds = array<i64: 2>, scalar_prefetch = 0 : i64, scratch_operands = 0 : i64, tpu.core_type = #tpu.core_type<tc>, window_params = [{transform_indices = @transform_0, window_bounds = array<i64: 64, 5>}, {pipeline_mode = #tpu.pipeline_mode<synchronous>, transform_indices = @transform_1, window_bounds = array<i64: 5, 128>}, {pipeline_mode = #tpu.pipeline_mode<synchronous>, transform_indices = @transform_2, window_bounds = array<i64: 1, 128>}, {transform_indices = @transform_3, window_bounds = array<i64: 64, 128>}]} {
    %c0 = arith.constant 0 : index
    %c0_0 = arith.constant 0 : index
    %0 = vector.load %arg1[%c0, %c0_0] : memref<64x5xbf16, #tpu.memory_space<vmem>>, vector<64x5xbf16>
    %c0_1 = arith.constant 0 : index
    %c0_2 = arith.constant 0 : index
    %1 = vector.load %arg2[%c0_1, %c0_2] : memref<5x128xbf16, #tpu.memory_space<vmem>>, vector<5x128xbf16>
    %c0_3 = arith.constant 0 : index
    %c0_4 = arith.constant 0 : index
    %2 = vector.load %arg3[%c0_3, %c0_4] : memref<1x128xf32, #tpu.memory_space<vmem>>, vector<1x128xf32>
    %cst = arith.constant dense<0.000000e+00> : vector<64x128xf32>
    %3 = tpu.matmul %0, %1, %cst {dimension_numbers = #tpu.dot_dimension_numbers<[1], [0], [0], [1], [0, 0, 1, 1], [], []>} : vector<64x5xbf16>, vector<5x128xbf16>, vector<64x128xf32> -> vector<64x128xf32>
    %4 = vector.broadcast %2 : vector<1x128xf32> to vector<64x128xf32>
    %5 = arith.addf %3, %4 : vector<64x128xf32>
    %cst_5 = arith.constant 0.000000e+00 : f32
    %6 = vector.broadcast %cst_5 : f32 to vector<64x128xf32>
    %7 = arith.cmpf ogt, %5, %6 : vector<64x128xf32>
    %cst_6 = arith.constant 1.000000e-01 : f32
    %8 = vector.broadcast %cst_6 : f32 to vector<64x128xf32>
    %9 = arith.mulf %8, %5 : vector<64x128xf32>
    %10 = arith.select %7, %5, %9 : vector<64x128xi1>, vector<64x128xf32>
    %11 = arith.truncf %10 : vector<64x128xf32> to vector<64x128xbf16>
    %c0_7 = arith.constant 0 : index
    %c0_8 = arith.constant 0 : index
    %12 = vector.load %arg4[%c0_7, %c0_8] : memref<64x128xbf16, #tpu.memory_space<vmem>>, vector<64x128xbf16>
    tpu.vector_store %arg4[%c0_7, %c0_8], %11 {strides = array<i32>} : memref<64x128xbf16, #tpu.memory_space<vmem>>, vector<64x128xbf16>,
    return
  }
  func.func @transform_0(%arg0: i32) -> (i32, i32) {
    %c0_i32 = arith.constant 0 : i32
    %c0_i32_0 = arith.constant 0 : i32
    return %arg0, %c0_i32 : i32, i32
  }
  func.func @transform_1(%arg0: i32) -> (i32, i32) {
    %c0_i32 = arith.constant 0 : i32
    %c0_i32_0 = arith.constant 0 : i32
    %c0_i32_1 = arith.constant 0 : i32
    return %c0_i32, %c0_i32_0 : i32, i32
  }
  func.func @transform_2(%arg0: i32) -> (i32, i32) {
    %c0_i32 = arith.constant 0 : i32
    %c0_i32_0 = arith.constant 0 : i32
    %c0_i32_1 = arith.constant 0 : i32
    return %c0_i32, %c0_i32_0 : i32, i32
  }
  func.func @transform_3(%arg0: i32) -> (i32, i32) {
    %c0_i32 = arith.constant 0 : i32
    %c0_i32_0 = arith.constant 0 : i32
    return %arg0, %c0_i32 : i32, i32
  }
}

module attributes {stable_mosaic.version = 11 : i64} {
  func.func @_fused_conv_kernel(%arg0: i32, %arg1: memref<128x128xbf16, #tpu.memory_space<vmem>>, %arg2: memref<128x128xbf16, #tpu.memory_space<vmem>>, %arg3: memref<128x128xbf16, #tpu.memory_space<vmem>>, %arg4: memref<128x128xbf16, #tpu.memory_space<vmem>>, %arg5: memref<1x128x128xbf16, #tpu.memory_space<vmem>>, %arg6: memref<1x1x128xf32, #tpu.memory_space<vmem>>, %arg7: memref<1x128x128xbf16, #tpu.memory_space<vmem>>, %arg8: memref<1x1x128xf32, #tpu.memory_space<vmem>>, %arg9: memref<1x128x128xbf16, #tpu.memory_space<vmem>>, %arg10: memref<1x128x128xbf16, #tpu.memory_space<vmem>>, %arg11: memref<128x128xf32, #tpu.memory_space<vmem>>, %arg12: memref<128x128xf32, #tpu.memory_space<vmem>>) attributes {dimension_semantics = [#tpu.dimension_semantics<arbitrary>], iteration_bounds = array<i64: 3>, scalar_prefetch = 0 : i64, scratch_operands = 2 : i64, tpu.core_type = #tpu.core_type<tc>, window_params = [{pipeline_mode = #tpu.pipeline_mode<synchronous>, transform_indices = @transform_0, window_bounds = array<i64: 128, 128>}, {pipeline_mode = #tpu.pipeline_mode<synchronous>, transform_indices = @transform_1, window_bounds = array<i64: 128, 128>}, {pipeline_mode = #tpu.pipeline_mode<synchronous>, transform_indices = @transform_2, window_bounds = array<i64: 128, 128>}, {pipeline_mode = #tpu.pipeline_mode<synchronous>, transform_indices = @transform_3, window_bounds = array<i64: 128, 128>}, {transform_indices = @transform_4, window_bounds = array<i64: 1, 128, 128>}, {transform_indices = @transform_5, window_bounds = array<i64: 1, 1, 128>}, {transform_indices = @transform_6, window_bounds = array<i64: 1, 128, 128>}, {transform_indices = @transform_7, window_bounds = array<i64: 1, 1, 128>}, {transform_indices = @transform_8, window_bounds = array<i64: 1, 128, 128>}, {transform_indices = @transform_9, window_bounds = array<i64: 1, 128, 128>}]} {
    %c0_i32 = arith.constant 0 : i32
    %0 = arith.cmpi eq, %arg0, %c0_i32 : i32
    %1 = arith.extui %0 : i1 to i32
    %c0_i32_0 = arith.constant 0 : i32
    %2 = arith.cmpi ne, %1, %c0_i32_0 : i32
    scf.if %2 {
      %c0_12 = arith.constant 0 : index
      %c0_13 = arith.constant 0 : index
      %16 = vector.load %arg3[%c0_12, %c0_13] : memref<128x128xbf16, #tpu.memory_space<vmem>>, vector<128x128xbf16>
      %17 = arith.extf %16 : vector<128x128xbf16> to vector<128x128xf32>
      %c0_14 = arith.constant 0 : index
      %c0_15 = arith.constant 0 : index
      %18 = vector.load %arg11[%c0_14, %c0_15] : memref<128x128xf32, #tpu.memory_space<vmem>>, vector<128x128xf32>
      tpu.vector_store %arg11[%c0_14, %c0_15], %17 {strides = array<i32>} : memref<128x128xf32, #tpu.memory_space<vmem>>, vector<128x128xf32>,
      %c0_16 = arith.constant 0 : index
      %c0_17 = arith.constant 0 : index
      %19 = vector.load %arg4[%c0_16, %c0_17] : memref<128x128xbf16, #tpu.memory_space<vmem>>, vector<128x128xbf16>
      %20 = arith.extf %19 : vector<128x128xbf16> to vector<128x128xf32>
      %c0_18 = arith.constant 0 : index
      %c0_19 = arith.constant 0 : index
      %21 = vector.load %arg12[%c0_18, %c0_19] : memref<128x128xf32, #tpu.memory_space<vmem>>, vector<128x128xf32>
      tpu.vector_store %arg12[%c0_18, %c0_19], %20 {strides = array<i32>} : memref<128x128xf32, #tpu.memory_space<vmem>>, vector<128x128xf32>,
    } else {
    }
    %c0_i32_1 = arith.constant 0 : i32
    %3 = arith.cmpi sgt, %arg0, %c0_i32_1 : i32
    %4 = arith.extui %3 : i1 to i32
    %c0_i32_2 = arith.constant 0 : i32
    %5 = arith.cmpi ne, %4, %c0_i32_2 : i32
    scf.if %5 {
      %c0_12 = arith.constant 0 : index
      %c0_13 = arith.constant 0 : index
      %16 = vector.load %arg11[%c0_12, %c0_13] : memref<128x128xf32, #tpu.memory_space<vmem>>, vector<128x128xf32>
      %17 = arith.truncf %16 : vector<128x128xf32> to vector<128x128xbf16>
      %c0_14 = arith.constant 0 : index
      %c0_15 = arith.constant 0 : index
      %18 = vector.load %arg1[%c0_14, %c0_15] : memref<128x128xbf16, #tpu.memory_space<vmem>>, vector<128x128xbf16>
      %cst = arith.constant dense<0.000000e+00> : vector<128x128xf32>
      %19 = tpu.matmul %18, %17, %cst {dimension_numbers = #tpu.dot_dimension_numbers<[1], [0], [0], [1], [0, 0, 1, 1], [], []>} : vector<128x128xbf16>, vector<128x128xbf16>, vector<128x128xf32> -> vector<128x128xf32>
      %c0_16 = arith.constant 0 : index
      %c0_17 = arith.constant 0 : index
      %20 = vector.load %arg12[%c0_16, %c0_17] : memref<128x128xf32, #tpu.memory_space<vmem>>, vector<128x128xf32>
      %21 = arith.addf %20, %19 : vector<128x128xf32>
      %22 = arith.truncf %21 : vector<128x128xf32> to vector<128x128xbf16>
      %c0_18 = arith.constant 0 : index
      %c0_19 = arith.constant 0 : index
      %c0_20 = arith.constant 0 : index
      %23 = vector.load %arg5[%c0_18, %c0_19, %c0_20] : memref<1x128x128xbf16, #tpu.memory_space<vmem>>, vector<1x128x128xbf16>
      %24 = vector.shape_cast %23 : vector<1x128x128xbf16> to vector<128x128xbf16>
      %cst_21 = arith.constant dense<0.000000e+00> : vector<128x128xf32>
      %25 = tpu.matmul %22, %24, %cst_21 {dimension_numbers = #tpu.dot_dimension_numbers<[1], [0], [0], [1], [0, 0, 1, 1], [], []>} : vector<128x128xbf16>, vector<128x128xbf16>, vector<128x128xf32> -> vector<128x128xf32>
      %c0_22 = arith.constant 0 : index
      %c0_23 = arith.constant 0 : index
      %c0_24 = arith.constant 0 : index
      %26 = vector.load %arg6[%c0_22, %c0_23, %c0_24] : memref<1x1x128xf32, #tpu.memory_space<vmem>>, vector<1x1x128xf32>
      %27 = vector.shape_cast %26 : vector<1x1x128xf32> to vector<1x128xf32>
      %28 = vector.broadcast %27 : vector<1x128xf32> to vector<128x128xf32>
      %29 = arith.addf %25, %28 : vector<128x128xf32>
      %cst_25 = arith.constant 0.000000e+00 : f32
      %30 = vector.broadcast %cst_25 : f32 to vector<128x128xf32>
      %31 = arith.cmpf ogt, %29, %30 : vector<128x128xf32>
      %cst_26 = arith.constant 1.000000e-01 : f32
      %32 = vector.broadcast %cst_26 : f32 to vector<128x128xf32>
      %33 = arith.mulf %32, %29 : vector<128x128xf32>
      %34 = arith.select %31, %29, %33 : vector<128x128xi1>, vector<128x128xf32>
      %c0_27 = arith.constant 0 : index
      %c0_28 = arith.constant 0 : index
      %35 = vector.load %arg2[%c0_27, %c0_28] : memref<128x128xbf16, #tpu.memory_space<vmem>>, vector<128x128xbf16>
      %36 = arith.truncf %34 : vector<128x128xf32> to vector<128x128xbf16>
      %cst_29 = arith.constant dense<0.000000e+00> : vector<128x128xf32>
      %37 = tpu.matmul %35, %36, %cst_29 {dimension_numbers = #tpu.dot_dimension_numbers<[1], [0], [0], [1], [0, 0, 1, 1], [], []>} : vector<128x128xbf16>, vector<128x128xbf16>, vector<128x128xf32> -> vector<128x128xf32>
      %c0_30 = arith.constant 0 : index
      %c0_31 = arith.constant 0 : index
      %38 = vector.load %arg11[%c0_30, %c0_31] : memref<128x128xf32, #tpu.memory_space<vmem>>, vector<128x128xf32>
      %39 = arith.addf %38, %37 : vector<128x128xf32>
      %40 = arith.truncf %39 : vector<128x128xf32> to vector<128x128xbf16>
      %c0_32 = arith.constant 0 : index
      %c0_33 = arith.constant 0 : index
      %c0_34 = arith.constant 0 : index
      %41 = vector.load %arg7[%c0_32, %c0_33, %c0_34] : memref<1x128x128xbf16, #tpu.memory_space<vmem>>, vector<1x128x128xbf16>
      %42 = vector.shape_cast %41 : vector<1x128x128xbf16> to vector<128x128xbf16>
      %cst_35 = arith.constant dense<0.000000e+00> : vector<128x128xf32>
      %43 = tpu.matmul %40, %42, %cst_35 {dimension_numbers = #tpu.dot_dimension_numbers<[1], [0], [0], [1], [0, 0, 1, 1], [], []>} : vector<128x128xbf16>, vector<128x128xbf16>, vector<128x128xf32> -> vector<128x128xf32>
      %c0_36 = arith.constant 0 : index
      %c0_37 = arith.constant 0 : index
      %c0_38 = arith.constant 0 : index
      %44 = vector.load %arg8[%c0_36, %c0_37, %c0_38] : memref<1x1x128xf32, #tpu.memory_space<vmem>>, vector<1x1x128xf32>
      %45 = vector.shape_cast %44 : vector<1x1x128xf32> to vector<1x128xf32>
      %46 = vector.broadcast %45 : vector<1x128xf32> to vector<128x128xf32>
      %47 = arith.addf %43, %46 : vector<128x128xf32>
      %cst_39 = arith.constant 0.000000e+00 : f32
      %48 = vector.broadcast %cst_39 : f32 to vector<128x128xf32>
      %49 = arith.cmpf ogt, %47, %48 : vector<128x128xf32>
      %cst_40 = arith.constant 1.000000e-01 : f32
      %50 = vector.broadcast %cst_40 : f32 to vector<128x128xf32>
      %51 = arith.mulf %50, %47 : vector<128x128xf32>
      %52 = arith.select %49, %47, %51 : vector<128x128xi1>, vector<128x128xf32>
      %c0_41 = arith.constant 0 : index
      %c0_42 = arith.constant 0 : index
      %53 = vector.load %arg12[%c0_41, %c0_42] : memref<128x128xf32, #tpu.memory_space<vmem>>, vector<128x128xf32>
      tpu.vector_store %arg12[%c0_41, %c0_42], %34 {strides = array<i32>} : memref<128x128xf32, #tpu.memory_space<vmem>>, vector<128x128xf32>,
      %c0_43 = arith.constant 0 : index
      %c0_44 = arith.constant 0 : index
      %54 = vector.load %arg11[%c0_43, %c0_44] : memref<128x128xf32, #tpu.memory_space<vmem>>, vector<128x128xf32>
      tpu.vector_store %arg11[%c0_43, %c0_44], %52 {strides = array<i32>} : memref<128x128xf32, #tpu.memory_space<vmem>>, vector<128x128xf32>,
    } else {
    }
    %c0 = arith.constant 0 : index
    %c0_3 = arith.constant 0 : index
    %6 = vector.load %arg11[%c0, %c0_3] : memref<128x128xf32, #tpu.memory_space<vmem>>, vector<128x128xf32>
    %7 = arith.truncf %6 : vector<128x128xf32> to vector<128x128xbf16>
    %c0_4 = arith.constant 0 : index
    %c0_5 = arith.constant 0 : index
    %c0_6 = arith.constant 0 : index
    %8 = vector.load %arg9[%c0_4, %c0_5, %c0_6] : memref<1x128x128xbf16, #tpu.memory_space<vmem>>, vector<1x128x128xbf16>
    %9 = vector.shape_cast %8 : vector<1x128x128xbf16> to vector<128x128xbf16>
    %10 = vector.shape_cast %7 : vector<128x128xbf16> to vector<1x128x128xbf16>
    tpu.vector_store %arg9[%c0_4, %c0_5, %c0_6], %10 {strides = array<i32>} : memref<1x128x128xbf16, #tpu.memory_space<vmem>>, vector<1x128x128xbf16>,
    %c0_7 = arith.constant 0 : index
    %c0_8 = arith.constant 0 : index
    %11 = vector.load %arg12[%c0_7, %c0_8] : memref<128x128xf32, #tpu.memory_space<vmem>>, vector<128x128xf32>
    %12 = arith.truncf %11 : vector<128x128xf32> to vector<128x128xbf16>
    %c0_9 = arith.constant 0 : index
    %c0_10 = arith.constant 0 : index
    %c0_11 = arith.constant 0 : index
    %13 = vector.load %arg10[%c0_9, %c0_10, %c0_11] : memref<1x128x128xbf16, #tpu.memory_space<vmem>>, vector<1x128x128xbf16>
    %14 = vector.shape_cast %13 : vector<1x128x128xbf16> to vector<128x128xbf16>
    %15 = vector.shape_cast %12 : vector<128x128xbf16> to vector<1x128x128xbf16>
    tpu.vector_store %arg10[%c0_9, %c0_10, %c0_11], %15 {strides = array<i32>} : memref<1x128x128xbf16, #tpu.memory_space<vmem>>, vector<1x128x128xbf16>,
    return
  }
  func.func @transform_0(%arg0: i32) -> (i32, i32) {
    %c0_i32 = arith.constant 0 : i32
    %c0_i32_0 = arith.constant 0 : i32
    %c0_i32_1 = arith.constant 0 : i32
    return %c0_i32, %c0_i32_0 : i32, i32
  }
  func.func @transform_1(%arg0: i32) -> (i32, i32) {
    %c0_i32 = arith.constant 0 : i32
    %c0_i32_0 = arith.constant 0 : i32
    %c0_i32_1 = arith.constant 0 : i32
    return %c0_i32, %c0_i32_0 : i32, i32
  }
  func.func @transform_2(%arg0: i32) -> (i32, i32) {
    %c0_i32 = arith.constant 0 : i32
    %c0_i32_0 = arith.constant 0 : i32
    %c0_i32_1 = arith.constant 0 : i32
    return %c0_i32, %c0_i32_0 : i32, i32
  }
  func.func @transform_3(%arg0: i32) -> (i32, i32) {
    %c0_i32 = arith.constant 0 : i32
    %c0_i32_0 = arith.constant 0 : i32
    %c0_i32_1 = arith.constant 0 : i32
    return %c0_i32, %c0_i32_0 : i32, i32
  }
  func.func @transform_4(%arg0: i32) -> (i32, i32, i32) {
    %c0_i32 = arith.constant 0 : i32
    %c0_i32_0 = arith.constant 0 : i32
    %c0_i32_1 = arith.constant 0 : i32
    return %arg0, %c0_i32, %c0_i32_0 : i32, i32, i32
  }
  func.func @transform_5(%arg0: i32) -> (i32, i32, i32) {
    %c0_i32 = arith.constant 0 : i32
    %c0_i32_0 = arith.constant 0 : i32
    %c0_i32_1 = arith.constant 0 : i32
    return %arg0, %c0_i32, %c0_i32_0 : i32, i32, i32
  }
  func.func @transform_6(%arg0: i32) -> (i32, i32, i32) {
    %c0_i32 = arith.constant 0 : i32
    %c0_i32_0 = arith.constant 0 : i32
    %c0_i32_1 = arith.constant 0 : i32
    return %arg0, %c0_i32, %c0_i32_0 : i32, i32, i32
  }
  func.func @transform_7(%arg0: i32) -> (i32, i32, i32) {
    %c0_i32 = arith.constant 0 : i32
    %c0_i32_0 = arith.constant 0 : i32
    %c0_i32_1 = arith.constant 0 : i32
    return %arg0, %c0_i32, %c0_i32_0 : i32, i32, i32
  }
  func.func @transform_8(%arg0: i32) -> (i32, i32, i32) {
    %c0_i32 = arith.constant 0 : i32
    %c0_i32_0 = arith.constant 0 : i32
    %c0_i32_1 = arith.constant 0 : i32
    return %arg0, %c0_i32, %c0_i32_0 : i32, i32, i32
  }
  func.func @transform_9(%arg0: i32) -> (i32, i32, i32) {
    %c0_i32 = arith.constant 0 : i32
    %c0_i32_0 = arith.constant 0 : i32
    %c0_i32_1 = arith.constant 0 : i32
    return %arg0, %c0_i32, %c0_i32_0 : i32, i32, i32
  }
}

module attributes {stable_mosaic.version = 11 : i64} {
  func.func @_head_kernel(%arg0: i32, %arg1: i32, %arg2: memref<1x64x128xbf16, #tpu.memory_space<vmem>>, %arg3: memref<1x128x256xbf16, #tpu.memory_space<vmem>>, %arg4: memref<1x256xf32, #tpu.memory_space<vmem>>, %arg5: memref<256x128xbf16, #tpu.memory_space<vmem>>, %arg6: memref<1x128xf32, #tpu.memory_space<vmem>>, %arg7: memref<128x128xbf16, #tpu.memory_space<vmem>>, %arg8: memref<1x128xf32, #tpu.memory_space<vmem>>, %arg9: memref<64x128xf32, #tpu.memory_space<vmem>>, %arg10: memref<64x256xf32, #tpu.memory_space<vmem>>) attributes {dimension_semantics = [#tpu.dimension_semantics<parallel>, #tpu.dimension_semantics<arbitrary>], iteration_bounds = array<i64: 2, 3>, scalar_prefetch = 0 : i64, scratch_operands = 1 : i64, tpu.core_type = #tpu.core_type<tc>, window_params = [{transform_indices = @transform_0, window_bounds = array<i64: 1, 64, 128>}, {transform_indices = @transform_1, window_bounds = array<i64: 1, 128, 256>}, {pipeline_mode = #tpu.pipeline_mode<synchronous>, transform_indices = @transform_2, window_bounds = array<i64: 1, 256>}, {pipeline_mode = #tpu.pipeline_mode<synchronous>, transform_indices = @transform_3, window_bounds = array<i64: 256, 128>}, {pipeline_mode = #tpu.pipeline_mode<synchronous>, transform_indices = @transform_4, window_bounds = array<i64: 1, 128>}, {pipeline_mode = #tpu.pipeline_mode<synchronous>, transform_indices = @transform_5, window_bounds = array<i64: 128, 128>}, {pipeline_mode = #tpu.pipeline_mode<synchronous>, transform_indices = @transform_6, window_bounds = array<i64: 1, 128>}, {transform_indices = @transform_7, window_bounds = array<i64: 64, 128>}]} {
    %c0_i32 = arith.constant 0 : i32
    %0 = arith.cmpi eq, %arg1, %c0_i32 : i32
    %1 = arith.extui %0 : i1 to i32
    %c0_i32_0 = arith.constant 0 : i32
    %2 = arith.cmpi ne, %1, %c0_i32_0 : i32
    scf.if %2 {
      %cst_11 = arith.constant 0.000000e+00 : f32
      %14 = vector.broadcast %cst_11 : f32 to vector<64x256xf32>
      %c0_12 = arith.constant 0 : index
      %c0_13 = arith.constant 0 : index
      %15 = vector.load %arg10[%c0_12, %c0_13] : memref<64x256xf32, #tpu.memory_space<vmem>>, vector<64x256xf32>
      tpu.vector_store %arg10[%c0_12, %c0_13], %14 {strides = array<i32>} : memref<64x256xf32, #tpu.memory_space<vmem>>, vector<64x256xf32>,
    } else {
    }
    %c0 = arith.constant 0 : index
    %c0_1 = arith.constant 0 : index
    %3 = vector.load %arg10[%c0, %c0_1] : memref<64x256xf32, #tpu.memory_space<vmem>>, vector<64x256xf32>
    %c0_2 = arith.constant 0 : index
    %c0_3 = arith.constant 0 : index
    %c0_4 = arith.constant 0 : index
    %4 = vector.load %arg2[%c0_2, %c0_3, %c0_4] : memref<1x64x128xbf16, #tpu.memory_space<vmem>>, vector<1x64x128xbf16>
    %5 = vector.shape_cast %4 : vector<1x64x128xbf16> to vector<64x128xbf16>
    %c0_5 = arith.constant 0 : index
    %c0_6 = arith.constant 0 : index
    %c0_7 = arith.constant 0 : index
    %6 = vector.load %arg3[%c0_5, %c0_6, %c0_7] : memref<1x128x256xbf16, #tpu.memory_space<vmem>>, vector<1x128x256xbf16>
    %7 = vector.shape_cast %6 : vector<1x128x256xbf16> to vector<128x256xbf16>
    %cst = arith.constant dense<0.000000e+00> : vector<64x256xf32>
    %8 = tpu.matmul %5, %7, %cst {dimension_numbers = #tpu.dot_dimension_numbers<[1], [0], [0], [1], [0, 0, 1, 1], [], []>} : vector<64x128xbf16>, vector<128x256xbf16>, vector<64x256xf32> -> vector<64x256xf32>
    %9 = arith.addf %3, %8 : vector<64x256xf32>
    %c0_8 = arith.constant 0 : index
    %c0_9 = arith.constant 0 : index
    %10 = vector.load %arg10[%c0_8, %c0_9] : memref<64x256xf32, #tpu.memory_space<vmem>>, vector<64x256xf32>
    tpu.vector_store %arg10[%c0_8, %c0_9], %9 {strides = array<i32>} : memref<64x256xf32, #tpu.memory_space<vmem>>, vector<64x256xf32>,
    %c2_i32 = arith.constant 2 : i32
    %11 = arith.cmpi eq, %arg1, %c2_i32 : i32
    %12 = arith.extui %11 : i1 to i32
    %c0_i32_10 = arith.constant 0 : i32
    %13 = arith.cmpi ne, %12, %c0_i32_10 : i32
    scf.if %13 {
      %c0_11 = arith.constant 0 : index
      %c0_12 = arith.constant 0 : index
      %14 = vector.load %arg10[%c0_11, %c0_12] : memref<64x256xf32, #tpu.memory_space<vmem>>, vector<64x256xf32>
      %c0_13 = arith.constant 0 : index
      %c0_14 = arith.constant 0 : index
      %15 = vector.load %arg4[%c0_13, %c0_14] : memref<1x256xf32, #tpu.memory_space<vmem>>, vector<1x256xf32>
      %16 = vector.broadcast %15 : vector<1x256xf32> to vector<64x256xf32>
      %17 = arith.addf %14, %16 : vector<64x256xf32>
      %cst_15 = arith.constant 0.000000e+00 : f32
      %18 = vector.broadcast %cst_15 : f32 to vector<64x256xf32>
      %19 = arith.cmpf ogt, %17, %18 : vector<64x256xf32>
      %cst_16 = arith.constant 1.000000e-01 : f32
      %20 = vector.broadcast %cst_16 : f32 to vector<64x256xf32>
      %21 = arith.mulf %20, %17 : vector<64x256xf32>
      %22 = arith.select %19, %17, %21 : vector<64x256xi1>, vector<64x256xf32>
      %c0_17 = arith.constant 0 : index
      %c0_18 = arith.constant 0 : index
      %23 = vector.load %arg5[%c0_17, %c0_18] : memref<256x128xbf16, #tpu.memory_space<vmem>>, vector<256x128xbf16>
      %c0_19 = arith.constant 0 : index
      %c0_20 = arith.constant 0 : index
      %24 = vector.load %arg6[%c0_19, %c0_20] : memref<1x128xf32, #tpu.memory_space<vmem>>, vector<1x128xf32>
      %25 = arith.truncf %22 : vector<64x256xf32> to vector<64x256xbf16>
      %cst_21 = arith.constant dense<0.000000e+00> : vector<64x128xf32>
      %26 = tpu.matmul %25, %23, %cst_21 {dimension_numbers = #tpu.dot_dimension_numbers<[1], [0], [0], [1], [0, 0, 1, 1], [], []>} : vector<64x256xbf16>, vector<256x128xbf16>, vector<64x128xf32> -> vector<64x128xf32>
      %27 = vector.broadcast %24 : vector<1x128xf32> to vector<64x128xf32>
      %28 = arith.addf %26, %27 : vector<64x128xf32>
      %cst_22 = arith.constant 0.000000e+00 : f32
      %29 = vector.broadcast %cst_22 : f32 to vector<64x128xf32>
      %30 = arith.cmpf ogt, %28, %29 : vector<64x128xf32>
      %cst_23 = arith.constant 1.000000e-01 : f32
      %31 = vector.broadcast %cst_23 : f32 to vector<64x128xf32>
      %32 = arith.mulf %31, %28 : vector<64x128xf32>
      %33 = arith.select %30, %28, %32 : vector<64x128xi1>, vector<64x128xf32>
      %c0_24 = arith.constant 0 : index
      %c0_25 = arith.constant 0 : index
      %34 = vector.load %arg7[%c0_24, %c0_25] : memref<128x128xbf16, #tpu.memory_space<vmem>>, vector<128x128xbf16>
      %c0_26 = arith.constant 0 : index
      %c0_27 = arith.constant 0 : index
      %35 = vector.load %arg8[%c0_26, %c0_27] : memref<1x128xf32, #tpu.memory_space<vmem>>, vector<1x128xf32>
      %36 = arith.truncf %33 : vector<64x128xf32> to vector<64x128xbf16>
      %cst_28 = arith.constant dense<0.000000e+00> : vector<64x128xf32>
      %37 = tpu.matmul %36, %34, %cst_28 {dimension_numbers = #tpu.dot_dimension_numbers<[1], [0], [0], [1], [0, 0, 1, 1], [], []>} : vector<64x128xbf16>, vector<128x128xbf16>, vector<64x128xf32> -> vector<64x128xf32>
      %38 = vector.broadcast %35 : vector<1x128xf32> to vector<64x128xf32>
      %39 = arith.addf %37, %38 : vector<64x128xf32>
      %c0_29 = arith.constant 0 : index
      %c0_30 = arith.constant 0 : index
      %40 = vector.load %arg9[%c0_29, %c0_30] : memref<64x128xf32, #tpu.memory_space<vmem>>, vector<64x128xf32>
      tpu.vector_store %arg9[%c0_29, %c0_30], %39 {strides = array<i32>} : memref<64x128xf32, #tpu.memory_space<vmem>>, vector<64x128xf32>,
    } else {
    }
    return
  }
  func.func @transform_0(%arg0: i32, %arg1: i32) -> (i32, i32, i32) {
    %c0_i32 = arith.constant 0 : i32
    %c0_i32_0 = arith.constant 0 : i32
    return %arg1, %arg0, %c0_i32 : i32, i32, i32
  }
  func.func @transform_1(%arg0: i32, %arg1: i32) -> (i32, i32, i32) {
    %c0_i32 = arith.constant 0 : i32
    %c0_i32_0 = arith.constant 0 : i32
    %c0_i32_1 = arith.constant 0 : i32
    return %arg1, %c0_i32, %c0_i32_0 : i32, i32, i32
  }
  func.func @transform_2(%arg0: i32, %arg1: i32) -> (i32, i32) {
    %c0_i32 = arith.constant 0 : i32
    %c0_i32_0 = arith.constant 0 : i32
    %c0_i32_1 = arith.constant 0 : i32
    return %c0_i32, %c0_i32_0 : i32, i32
  }
  func.func @transform_3(%arg0: i32, %arg1: i32) -> (i32, i32) {
    %c0_i32 = arith.constant 0 : i32
    %c0_i32_0 = arith.constant 0 : i32
    %c0_i32_1 = arith.constant 0 : i32
    return %c0_i32, %c0_i32_0 : i32, i32
  }
  func.func @transform_4(%arg0: i32, %arg1: i32) -> (i32, i32) {
    %c0_i32 = arith.constant 0 : i32
    %c0_i32_0 = arith.constant 0 : i32
    %c0_i32_1 = arith.constant 0 : i32
    return %c0_i32, %c0_i32_0 : i32, i32
  }
  func.func @transform_5(%arg0: i32, %arg1: i32) -> (i32, i32) {
    %c0_i32 = arith.constant 0 : i32
    %c0_i32_0 = arith.constant 0 : i32
    %c0_i32_1 = arith.constant 0 : i32
    return %c0_i32, %c0_i32_0 : i32, i32
  }
  func.func @transform_6(%arg0: i32, %arg1: i32) -> (i32, i32) {
    %c0_i32 = arith.constant 0 : i32
    %c0_i32_0 = arith.constant 0 : i32
    %c0_i32_1 = arith.constant 0 : i32
    return %c0_i32, %c0_i32_0 : i32, i32
  }
  func.func @transform_7(%arg0: i32, %arg1: i32) -> (i32, i32) {
    %c0_i32 = arith.constant 0 : i32
    %c0_i32_0 = arith.constant 0 : i32
    return %arg0, %c0_i32 : i32, i32
  }
}

module attributes {stable_mosaic.version = 11 : i64} {
  func.func @_head_kernel(%arg0: i32, %arg1: i32, %arg2: memref<1x64x128xbf16, #tpu.memory_space<vmem>>, %arg3: memref<1x128x128xbf16, #tpu.memory_space<vmem>>, %arg4: memref<1x128xf32, #tpu.memory_space<vmem>>, %arg5: memref<128x128xbf16, #tpu.memory_space<vmem>>, %arg6: memref<1x128xf32, #tpu.memory_space<vmem>>, %arg7: memref<64x128xf32, #tpu.memory_space<vmem>>, %arg8: memref<64x128xf32, #tpu.memory_space<vmem>>) attributes {dimension_semantics = [#tpu.dimension_semantics<parallel>, #tpu.dimension_semantics<arbitrary>], iteration_bounds = array<i64: 2, 3>, scalar_prefetch = 0 : i64, scratch_operands = 1 : i64, tpu.core_type = #tpu.core_type<tc>, window_params = [{transform_indices = @transform_0, window_bounds = array<i64: 1, 64, 128>}, {transform_indices = @transform_1, window_bounds = array<i64: 1, 128, 128>}, {pipeline_mode = #tpu.pipeline_mode<synchronous>, transform_indices = @transform_2, window_bounds = array<i64: 1, 128>}, {pipeline_mode = #tpu.pipeline_mode<synchronous>, transform_indices = @transform_3, window_bounds = array<i64: 128, 128>}, {pipeline_mode = #tpu.pipeline_mode<synchronous>, transform_indices = @transform_4, window_bounds = array<i64: 1, 128>}, {transform_indices = @transform_5, window_bounds = array<i64: 64, 128>}]} {
    %c0_i32 = arith.constant 0 : i32
    %0 = arith.cmpi eq, %arg1, %c0_i32 : i32
    %1 = arith.extui %0 : i1 to i32
    %c0_i32_0 = arith.constant 0 : i32
    %2 = arith.cmpi ne, %1, %c0_i32_0 : i32
    scf.if %2 {
      %cst_11 = arith.constant 0.000000e+00 : f32
      %14 = vector.broadcast %cst_11 : f32 to vector<64x128xf32>
      %c0_12 = arith.constant 0 : index
      %c0_13 = arith.constant 0 : index
      %15 = vector.load %arg8[%c0_12, %c0_13] : memref<64x128xf32, #tpu.memory_space<vmem>>, vector<64x128xf32>
      tpu.vector_store %arg8[%c0_12, %c0_13], %14 {strides = array<i32>} : memref<64x128xf32, #tpu.memory_space<vmem>>, vector<64x128xf32>,
    } else {
    }
    %c0 = arith.constant 0 : index
    %c0_1 = arith.constant 0 : index
    %3 = vector.load %arg8[%c0, %c0_1] : memref<64x128xf32, #tpu.memory_space<vmem>>, vector<64x128xf32>
    %c0_2 = arith.constant 0 : index
    %c0_3 = arith.constant 0 : index
    %c0_4 = arith.constant 0 : index
    %4 = vector.load %arg2[%c0_2, %c0_3, %c0_4] : memref<1x64x128xbf16, #tpu.memory_space<vmem>>, vector<1x64x128xbf16>
    %5 = vector.shape_cast %4 : vector<1x64x128xbf16> to vector<64x128xbf16>
    %c0_5 = arith.constant 0 : index
    %c0_6 = arith.constant 0 : index
    %c0_7 = arith.constant 0 : index
    %6 = vector.load %arg3[%c0_5, %c0_6, %c0_7] : memref<1x128x128xbf16, #tpu.memory_space<vmem>>, vector<1x128x128xbf16>
    %7 = vector.shape_cast %6 : vector<1x128x128xbf16> to vector<128x128xbf16>
    %cst = arith.constant dense<0.000000e+00> : vector<64x128xf32>
    %8 = tpu.matmul %5, %7, %cst {dimension_numbers = #tpu.dot_dimension_numbers<[1], [0], [0], [1], [0, 0, 1, 1], [], []>} : vector<64x128xbf16>, vector<128x128xbf16>, vector<64x128xf32> -> vector<64x128xf32>
    %9 = arith.addf %3, %8 : vector<64x128xf32>
    %c0_8 = arith.constant 0 : index
    %c0_9 = arith.constant 0 : index
    %10 = vector.load %arg8[%c0_8, %c0_9] : memref<64x128xf32, #tpu.memory_space<vmem>>, vector<64x128xf32>
    tpu.vector_store %arg8[%c0_8, %c0_9], %9 {strides = array<i32>} : memref<64x128xf32, #tpu.memory_space<vmem>>, vector<64x128xf32>,
    %c2_i32 = arith.constant 2 : i32
    %11 = arith.cmpi eq, %arg1, %c2_i32 : i32
    %12 = arith.extui %11 : i1 to i32
    %c0_i32_10 = arith.constant 0 : i32
    %13 = arith.cmpi ne, %12, %c0_i32_10 : i32
    scf.if %13 {
      %c0_11 = arith.constant 0 : index
      %c0_12 = arith.constant 0 : index
      %14 = vector.load %arg8[%c0_11, %c0_12] : memref<64x128xf32, #tpu.memory_space<vmem>>, vector<64x128xf32>
      %c0_13 = arith.constant 0 : index
      %c0_14 = arith.constant 0 : index
      %15 = vector.load %arg4[%c0_13, %c0_14] : memref<1x128xf32, #tpu.memory_space<vmem>>, vector<1x128xf32>
      %16 = vector.broadcast %15 : vector<1x128xf32> to vector<64x128xf32>
      %17 = arith.addf %14, %16 : vector<64x128xf32>
      %cst_15 = arith.constant 0.000000e+00 : f32
      %18 = vector.broadcast %cst_15 : f32 to vector<64x128xf32>
      %19 = arith.cmpf ogt, %17, %18 : vector<64x128xf32>
      %cst_16 = arith.constant 1.000000e-01 : f32
      %20 = vector.broadcast %cst_16 : f32 to vector<64x128xf32>
      %21 = arith.mulf %20, %17 : vector<64x128xf32>
      %22 = arith.select %19, %17, %21 : vector<64x128xi1>, vector<64x128xf32>
      %c0_17 = arith.constant 0 : index
      %c0_18 = arith.constant 0 : index
      %23 = vector.load %arg5[%c0_17, %c0_18] : memref<128x128xbf16, #tpu.memory_space<vmem>>, vector<128x128xbf16>
      %c0_19 = arith.constant 0 : index
      %c0_20 = arith.constant 0 : index
      %24 = vector.load %arg6[%c0_19, %c0_20] : memref<1x128xf32, #tpu.memory_space<vmem>>, vector<1x128xf32>
      %25 = arith.truncf %22 : vector<64x128xf32> to vector<64x128xbf16>
      %cst_21 = arith.constant dense<0.000000e+00> : vector<64x128xf32>
      %26 = tpu.matmul %25, %23, %cst_21 {dimension_numbers = #tpu.dot_dimension_numbers<[1], [0], [0], [1], [0, 0, 1, 1], [], []>} : vector<64x128xbf16>, vector<128x128xbf16>, vector<64x128xf32> -> vector<64x128xf32>
      %27 = vector.broadcast %24 : vector<1x128xf32> to vector<64x128xf32>
      %28 = arith.addf %26, %27 : vector<64x128xf32>
      %cst_22 = arith.constant 0.000000e+00 : f32
      %29 = vector.broadcast %cst_22 : f32 to vector<64x128xf32>
      %30 = arith.cmpf ogt, %28, %29 : vector<64x128xf32>
      %cst_23 = arith.constant 1.000000e-01 : f32
      %31 = vector.broadcast %cst_23 : f32 to vector<64x128xf32>
      %32 = arith.mulf %31, %28 : vector<64x128xf32>
      %33 = arith.select %30, %28, %32 : vector<64x128xi1>, vector<64x128xf32>
      %34 = math.absf %33 : vector<64x128xf32>
      %c0_24 = arith.constant 0 : index
      %c0_25 = arith.constant 0 : index
      %35 = vector.load %arg7[%c0_24, %c0_25] : memref<64x128xf32, #tpu.memory_space<vmem>>, vector<64x128xf32>
      tpu.vector_store %arg7[%c0_24, %c0_25], %34 {strides = array<i32>} : memref<64x128xf32, #tpu.memory_space<vmem>>, vector<64x128xf32>,
    } else {
    }
    return
  }
  func.func @transform_0(%arg0: i32, %arg1: i32) -> (i32, i32, i32) {
    %c0_i32 = arith.constant 0 : i32
    %c0_i32_0 = arith.constant 0 : i32
    return %arg1, %arg0, %c0_i32 : i32, i32, i32
  }
  func.func @transform_1(%arg0: i32, %arg1: i32) -> (i32, i32, i32) {
    %c0_i32 = arith.constant 0 : i32
    %c0_i32_0 = arith.constant 0 : i32
    %c0_i32_1 = arith.constant 0 : i32
    return %arg1, %c0_i32, %c0_i32_0 : i32, i32, i32
  }
  func.func @transform_2(%arg0: i32, %arg1: i32) -> (i32, i32) {
    %c0_i32 = arith.constant 0 : i32
    %c0_i32_0 = arith.constant 0 : i32
    %c0_i32_1 = arith.constant 0 : i32
    return %c0_i32, %c0_i32_0 : i32, i32
  }
  func.func @transform_3(%arg0: i32, %arg1: i32) -> (i32, i32) {
    %c0_i32 = arith.constant 0 : i32
    %c0_i32_0 = arith.constant 0 : i32
    %c0_i32_1 = arith.constant 0 : i32
    return %c0_i32, %c0_i32_0 : i32, i32
  }
  func.func @transform_4(%arg0: i32, %arg1: i32) -> (i32, i32) {
    %c0_i32 = arith.constant 0 : i32
    %c0_i32_0 = arith.constant 0 : i32
    %c0_i32_1 = arith.constant 0 : i32
    return %c0_i32, %c0_i32_0 : i32, i32
  }
  func.func @transform_5(%arg0: i32, %arg1: i32) -> (i32, i32) {
    %c0_i32 = arith.constant 0 : i32
    %c0_i32_0 = arith.constant 0 : i32
    return %arg0, %c0_i32 : i32, i32
  }
}

</mosaic_0001>

<llo_original>
// kernel: gnn_node_forward.6
$region0: #{gnn_node_forward.6}
  #allocation0 [shape = 'u32[]', space=smem, size = 0x4, offset = 0x4, fixed_abs, tag = 'smem constant byte address 0x4 - core index']
  #allocation1 [shape = 'u32[144,128]{1,0:T(1,128)}', space=vmem, size = 0x12000, scoped, tag = 'internal scratch']
  %s0 = inlined_call_operand.hbm [shape: bf16[128,5], index: 0, kind: input, shape index: {}]
  %s1 = inlined_call_operand.hbm [shape: bf16[5,128], index: 1, kind: input, shape index: {}]
  %s2 = inlined_call_operand.hbm [shape: f32[1,128], index: 2, kind: input, shape index: {}]
  %s3 = inlined_call_operand.hbm [shape: bf16[128,128], index: 3, kind: output, shape index: {}]
  %s4 = sld [smem:[#allocation0]]
  $region57: #{gnn_node_forward.6} parent=0
    _
  %s6 = ssub.s32 1, %s4
  %s7 = scalar_select 0, %s6, %s4
  $region1: #{gnn_node_forward.6} parent=0
    #allocation2 [shape = 'u8[32768]{0}', space=vmem, size = 0x8000, scoped, tag = 'input window, operand 0']
    #allocation3 [shape = 's32[2]{0}', space=sflag, size = 0x8, scoped, tag = 'scoped memory for gnn_node_forward.6']
    #allocation4 [shape = 's32[2]{0}', space=sflag, size = 0x8, scoped, tag = 'scoped memory for gnn_node_forward.6']
    #allocation5 [shape = 'u8[2048]{0}', space=vmem, size = 0x800, scoped, tag = 'input window, operand 1, single buffered']
    #allocation6 [shape = 's32[1]{0}', space=sflag, size = 0x4, scoped, tag = 'scoped memory for gnn_node_forward.6']
    #allocation7 [shape = 'u8[512]{0}', space=vmem, size = 0x400, scoped, tag = 'input window, operand 2, single buffered']
    #allocation8 [shape = 'u8[32768]{0}', space=vmem, size = 0x8000, scoped, tag = 'output window, operand 0']
    %8 = vsyncpa [#allocation3], 0
    %s9 = scalar_lea.sflag [#allocation3], 1
    %10 = vsyncpa %s9, 0
    %11 = vsyncpa [#allocation6], 0
    %12 = vsyncpa [#allocation4], 0
    %s13 = scalar_lea.sflag [#allocation4], 1
    %14 = vsyncpa %s13, 0
    loop: start=0, step=1, limit=4
    $region2: #{gnn_node_forward.6} parent=1 // loop_pre_header
      _
    $region3: #{gnn_node_forward.6} parent=1 // loop_header
      %s16 = sphi 0, %s20
      %p17 = scmp.ge.s32.totalorder %s16, 4
      %s26 = sphi 0, %s28
      %s29 = sphi 0, %s26
      %s30 = sphi 0, %s29
      %s46 = sphi 0, %s30
      %s50 = sphi 0, %s50
      %s52 = sphi 0, %s50
      %s53 = sphi 0, %s52
      %s67 = sphi 0, %s53
      %s71 = sphi 0, %s71
      %s73 = sphi 0, %s71
      %s74 = sphi 0, %s73
      %s88 = sphi 0, %s74
      %s94 = sphi 0, %s96
      %s97 = sphi 0, %s94
      %s98 = sphi 0, %s97
      %s114 = sphi 0, %s98
    $region4: #{gnn_node_forward.6} parent=1 // loop_header_branch
      %19 = sbr.rel (%p17) target = $region8
    $region5: #{gnn_node_forward.6} parent=1 // loop_body
      %s21 = ssub.s32 %s16, 1
      %s22 = ssub.s32 %s16, 2
      %s23 = sadd.s32 %s16, 1
      %s24 = ssub.s32 %s16, %s23
      %p25 = scmp.eq.s32.totalorder %s24, 0
      %s27 = sadd.s32 %s26, 1
      %s28 = scalar_select %p25, %s26, %s27
      %p31 = pneg %p25
      %p32 = scmp.eq.s32.totalorder %s16, 1
      %p33 = por %p31, %p32
      %p34 = scmp.ne.s32.totalorder %s26, %s29
      %p35 = scmp.eq.s32.totalorder %s16, 0
      %p36 = por %p34, %p35
      %p37 = scmp.ne.s32.totalorder %s26, %s29
      %p38 = scmp.eq.s32.totalorder %s21, 1
      %p39 = por %p37, %p38
      %p40 = scmp.ne.s32.totalorder %s29, %s30
      %p41 = scmp.eq.s32.totalorder %s21, 0
      %p42 = por %p40, %p41
      %p43 = scmp.ne.s32.totalorder %s29, %s30
      %p44 = scmp.eq.s32.totalorder %s22, 1
      %p45 = por %p43, %p44
      %p47 = scmp.ne.s32.totalorder %s30, %s46
      %p48 = scmp.eq.s32.totalorder %s22, 0
      %p49 = por %p47, %p48
      %s51 = sadd.s32 %s50, 1
      %p54 = scmp.eq.s32.totalorder %s16, 1
      %p55 = scmp.ne.s32.totalorder %s50, %s52
      %p56 = scmp.eq.s32.totalorder %s16, 0
      %p57 = por %p55, %p56
      %p58 = scmp.ne.s32.totalorder %s50, %s52
      %p59 = scmp.eq.s32.totalorder %s21, 1
      %p60 = por %p58, %p59
      %p61 = scmp.ne.s32.totalorder %s52, %s53
      %p62 = scmp.eq.s32.totalorder %s21, 0
      %p63 = por %p61, %p62
      %p64 = scmp.ne.s32.totalorder %s52, %s53
      %p65 = scmp.eq.s32.totalorder %s22, 1
      %p66 = por %p64, %p65
      %p68 = scmp.ne.s32.totalorder %s53, %s67
      %p69 = scmp.eq.s32.totalorder %s22, 0
      %p70 = por %p68, %p69
      %s72 = sadd.s32 %s71, 1
      %p75 = scmp.eq.s32.totalorder %s16, 1
      %p76 = scmp.ne.s32.totalorder %s71, %s73
      %p77 = scmp.eq.s32.totalorder %s16, 0
      %p78 = por %p76, %p77
      %p79 = scmp.ne.s32.totalorder %s71, %s73
      %p80 = scmp.eq.s32.totalorder %s21, 1
      %p81 = por %p79, %p80
      %p82 = scmp.ne.s32.totalorder %s73, %s74
      %p83 = scmp.eq.s32.totalorder %s21, 0
      %p84 = por %p82, %p83
      %p85 = scmp.ne.s32.totalorder %s73, %s74
      %p86 = scmp.eq.s32.totalorder %s22, 1
      %p87 = por %p85, %p86
      %p89 = scmp.ne.s32.totalorder %s74, %s88
      %p90 = scmp.eq.s32.totalorder %s22, 0
      %p91 = por %p89, %p90
      %s92 = ssub.s32 %s16, %s23
      %p93 = scmp.eq.s32.totalorder %s92, 0
      %s95 = sadd.s32 %s94, 1
      %s96 = scalar_select %p93, %s94, %s95
      %p99 = pneg %p93
      %p100 = scmp.eq.s32.totalorder %s16, 1
      %p101 = por %p99, %p100
      %p102 = scmp.ne.s32.totalorder %s94, %s97
      %p103 = scmp.eq.s32.totalorder %s16, 0
      %p104 = por %p102, %p103
      %p105 = scmp.ne.s32.totalorder %s94, %s97
      %p106 = scmp.eq.s32.totalorder %s21, 1
      %p107 = por %p105, %p106
      %p108 = scmp.ne.s32.totalorder %s97, %s98
      %p109 = scmp.eq.s32.totalorder %s21, 0
      %p110 = por %p108, %p109
      %p111 = scmp.ne.s32.totalorder %s97, %s98
      %p112 = scmp.eq.s32.totalorder %s22, 1
      %p113 = por %p111, %p112
      %p115 = scmp.ne.s32.totalorder %s98, %s114
      %p116 = scmp.eq.s32.totalorder %s22, 0
      %p117 = por %p115, %p116
      %p118 = scmp.le.s32.totalorder 1, %s16
      %p119 = scmp.lt.s32.totalorder %s16, 3
      %p120 = pnand %p118, %p119
      %p121 = pneg %p120
      // Predicated region
      $region9: #{gnn_node_forward.6} parent=5 // pred_check
        _
      $region10: #{gnn_node_forward.6} parent=5 // pred_check_branch
        %123 = sbr.rel (%p120) target = $region12
      $region11: #{gnn_node_forward.6} parent=5 // pred_region
        %s124 = ssub.s32 %s16, 1
        // Predicated region
        $region13: #{gnn_node_forward.6} parent=11 // pred_check
          %p125 = pneg %p63
        $region14: #{gnn_node_forward.6} parent=11 // pred_check_branch
          %127 = sbr.rel (%p125) target = $region16
        $region15: #{gnn_node_forward.6} parent=11 // pred_region
          %s129 = ssub.s32 64, 64
          %130 = vsyncadd [#allocation6], %s129
          %s132 = sshll.u32 [#allocation5], 4
          %s133 = int_to_ptr.vmem [resolvable:$true] %s132
          %135 = dma.hbm_to_vmem [thread:$0]  %s1, 64, %s133, [#allocation6]
        $region16: #{gnn_node_forward.6} parent=11 // pred_fallthru
          _
        // Predicated region
        $region17: #{gnn_node_forward.6} parent=11 // pred_check
          %p136 = pneg %p84
        $region18: #{gnn_node_forward.6} parent=11 // pred_check_branch
          %138 = sbr.rel (%p136) target = $region20
        $region19: #{gnn_node_forward.6} parent=11 // pred_region
          %s140 = ssub.s32 16, 16
          %141 = vsyncadd [#allocation6], %s140
          %s143 = sshll.u32 [#allocation7], 4
          %s144 = int_to_ptr.vmem [resolvable:$true] %s143
          %146 = dma.hbm_to_vmem [thread:$0]  %s2, 16, %s144, [#allocation6]
        $region20: #{gnn_node_forward.6} parent=11 // pred_fallthru
          _
      $region12: #{gnn_node_forward.6} parent=5 // pred_fallthru
        _
      %p147 = scmp.lt.s32.totalorder %s16, 2
      // Predicated region
      $region21: #{gnn_node_forward.6} parent=5 // pred_check
        %p148 = pneg %p147
      $region22: #{gnn_node_forward.6} parent=5 // pred_check_branch
        %150 = sbr.rel (%p148) target = $region24
      $region23: #{gnn_node_forward.6} parent=5 // pred_region
        // Predicated region
        $region25: #{gnn_node_forward.6} parent=23 // pred_check
          %p151 = pneg %p36
        $region26: #{gnn_node_forward.6} parent=23 // pred_check_branch
          %153 = sbr.rel (%p151) target = $region28
        $region27: #{gnn_node_forward.6} parent=23 // pred_region
          %s154 = sand.u32 %s26, 1
          %s155 = scalar_lea.sflag [#allocation3], %s154
          %s156 = sand.u32 %s26, 1
          %s157 = smul.addr %s156, 32
          %s158 = scalar_lea.vmem [#allocation2], %s157
          %s159 = smul.u32 8, %s16
          %s161 = ssub.s32 512, 512
          %162 = vsyncadd %s155, %s161
          %s163 = smul.addr %s159, 64
          %s164 = scalar_lea.hbm %s0, %s163
          %s165 = sshll.u32 %s158, 4
          %s166 = int_to_ptr.vmem [resolvable:$true] %s165
          %171 = dma.hbm_to_vmem [thread:$0]  %s164, 512, %s166, %s155, 64, 64, 4
        $region28: #{gnn_node_forward.6} parent=23 // pred_fallthru
          _
      $region24: #{gnn_node_forward.6} parent=5 // pred_fallthru
        _
      %p172 = scmp.le.s32.totalorder 1, %s16
      %p173 = scmp.lt.s32.totalorder %s16, 3
      %p174 = pnand %p172, %p173
      %p175 = pneg %p174
      // Predicated region
      $region29: #{gnn_node_forward.6} parent=5 // pred_check
        _
      $region30: #{gnn_node_forward.6} parent=5 // pred_check_branch
        %177 = sbr.rel (%p174) target = $region32
      $region31: #{gnn_node_forward.6} parent=5 // pred_region
        %s178 = ssub.s32 %s16, 1
        %s179 = sand.u32 %s29, 1
        %s180 = scalar_lea.sflag [#allocation3], %s179
        %s181 = sand.u32 %s29, 1
        %s182 = smul.addr %s181, 32
        %s183 = scalar_lea.vmem [#allocation2], %s182
        // Predicated region
        $region33: #{gnn_node_forward.6} parent=31 // pred_check
          %p184 = pneg %p42
        $region34: #{gnn_node_forward.6} parent=31 // pred_check_branch
          %186 = sbr.rel (%p184) target = $region36
        $region35: #{gnn_node_forward.6} parent=31 // pred_region
          %187 = dma.done %s180, 512
        $region36: #{gnn_node_forward.6} parent=31 // pred_fallthru
          _
        // Predicated region
        $region37: #{gnn_node_forward.6} parent=31 // pred_check
          %p188 = pneg %p63
        $region38: #{gnn_node_forward.6} parent=31 // pred_check_branch
          %190 = sbr.rel (%p188) target = $region40
        $region39: #{gnn_node_forward.6} parent=31 // pred_region
          %191 = dma.done [#allocation6], 64
        $region40: #{gnn_node_forward.6} parent=31 // pred_fallthru
          _
        // Predicated region
        $region41: #{gnn_node_forward.6} parent=31 // pred_check
          %p192 = pneg %p84
        $region42: #{gnn_node_forward.6} parent=31 // pred_check_branch
          %194 = sbr.rel (%p192) target = $region44
        $region43: #{gnn_node_forward.6} parent=31 // pred_region
          %195 = dma.done [#allocation6], 16
        $region44: #{gnn_node_forward.6} parent=31 // pred_fallthru
          _
        %s196 = sand.u32 %s29, 1
        %s197 = scalar_lea.sflag [#allocation3], %s196
        %s198 = sand.u32 %s29, 1
        %s199 = smul.addr %s198, 32
        %s200 = scalar_lea.vmem [#allocation2], %s199
        %p201 = pneg %p42
        %p202 = pneg %p39
        %p203 = pneg %p63
        %p204 = pneg %p60
        %p205 = pneg %p84
        %p206 = pneg %p81
        %p207 = pneg %p110
        %p208 = pneg %p107
        %s209 = sand.u32 %s97, 1
        %s210 = scalar_lea.sflag [#allocation4], %s209
        %s211 = sand.u32 %s97, 1
        %s212 = smul.addr %s211, 32
        %s213 = scalar_lea.vmem [#allocation8], %s212
        %s214 = smul.u32 8, %s21
        %s215 = smul.u32 8, %s21
        %v217 = vld [vmem:[%s183] sm:$0xf]
        %v218 = vld [vmem:[%s183 + $0x4] sm:$0xf]
        %v219 = vld [vmem:[%s183 + $0x8] sm:$0xf]
        %v220 = vld [vmem:[%s183 + $0xc] sm:$0xf]
        %v221 = vld [vmem:[%s183 + $0x10] sm:$0xf]
        %v222 = vld [vmem:[%s183 + $0x14] sm:$0xf]
        %v223 = vld [vmem:[%s183 + $0x18] sm:$0xf]
        %v224 = vld [vmem:[%s183 + $0x1c] sm:$0xf]
        %v225 = vld [vmem:[#allocation5] sm:$0x7]
        %v226 = vld [vmem:[#allocation7] sm:$0x1]
        %v228 = vlaneseq
        %v229 = vshrl.u32 %v228, 7
        %v230 = vsub.s32 0, %v229
        %v231 = vrot.slane %v226, %v230
        %v241 = vunpack.c.l.b16 %v217
        %v242 = vunpack.c.l.b16 %v218
        %v243 = vunpack.c.l.b16 %v219
        %v244 = vunpack.c.l.b16 %v220
        %v245 = vunpack.c.l.b16 %v221
        %v246 = vunpack.c.l.b16 %v222
        %v247 = vunpack.c.l.b16 %v223
        %v248 = vunpack.c.l.b16 %v224
        %v249 = vpack.c.b16 %v242, %v241
        %v250 = vpack.c.b16 %v244, %v243
        %v251 = vpack.c.b16 %v246, %v245
        %v252 = vpack.c.b16 %v248, %v247
        %vm253 = vcmask 39936
        %v255 = vsel %vm253, %v249, 0
        %v258 = vsel %vm253, %v250, 0
        %v261 = vsel %vm253, %v251, 0
        %v264 = vsel %vm253, %v252, 0
        %vm266 = vcmask 1041408
        %vm267 = vcmask 1042432
        %v268 = vsel %vm266, 4294967295, 65535
        %v269 = vsel %vm267, %v268, 0
        %v271 = vand.u32 %v225, %v269
        %273 = vmatprep.subr.bf16.mxu0 0
        %274 = vmatpush1.bf16.msra.mxu0 %v271
        %275 = vmatprep.subr.bf16.mxu0 0
        %276 = vmatpush1.bf16.msra.mxu0 0
        %277 = vmatprep.subr.bf16.mxu0 0
        %278 = vmatpush1.bf16.msra.mxu0 0
        %279 = vmatprep.subr.bf16.mxu0 0
        %280 = vmatpush1.bf16.msra.mxu0 0
        %281 = vmatprep.subr.bf16.mxu0 0
        %282 = vmatpush1.bf16.msra.mxu0 0
        %283 = vmatprep.subr.bf16.mxu0 0
        %284 = vmatpush1.bf16.msra.mxu0 0
        %285 = vmatprep.subr.bf16.mxu0 0
        %286 = vmatpush1.bf16.msra.mxu0 0
        %287 = vmatprep.subr.bf16.mxu0 0
        %288 = vmatpush1.bf16.msra.mxu0 0
        %289 = vmatprep.subr.bf16.mxu0 0
        %290 = vmatpush1.bf16.msra.mxu0 0
        %291 = vmatprep.subr.bf16.mxu0 0
        %292 = vmatpush1.bf16.msra.mxu0 0
        %293 = vmatprep.subr.bf16.mxu0 0
        %294 = vmatpush1.bf16.msra.mxu0 0
        %295 = vmatprep.subr.bf16.mxu0 0
        %296 = vmatpush1.bf16.msra.mxu0 0
        %297 = vmatprep.subr.bf16.mxu0 0
        %298 = vmatpush1.bf16.msra.mxu0 0
        %299 = vmatprep.subr.bf16.mxu0 0
        %300 = vmatpush1.bf16.msra.mxu0 0
        %301 = vmatprep.subr.bf16.mxu0 0
        %302 = vmatpush1.bf16.msra.mxu0 0
        %303 = vmatprep.subr.bf16.mxu0 0
        %304 = vmatpush1.bf16.msra.mxu0 0
        %305 = vmatprep.mubr.bf16.mxu0 0
        %306 = vmatmul.mubr.bf16.gmra.mrb[0].mxu0 %v255
        %v307 = vpop.f32.mrb[0].mxu0
        %v308 = vadd.f32 %v231, %v307
        %v309 = vpop.f32.mrb[0].mxu0
        %v310 = vpop.f32.mrb[0].mxu0
        %v311 = vadd.f32 %v231, %v310
        %v312 = vpop.f32.mrb[0].mxu0
        %313 = vmatprep.mubr.bf16.mxu0 0
        %314 = vmatmul.mubr.bf16.gmra.mrb[0].mxu0 %v258
        %v315 = vpop.f32.mrb[0].mxu0
        %v316 = vadd.f32 %v231, %v315
        %v317 = vpop.f32.mrb[0].mxu0
        %v318 = vpop.f32.mrb[0].mxu0
        %v319 = vadd.f32 %v231, %v318
        %v320 = vpop.f32.mrb[0].mxu0
        %321 = vmatprep.mubr.bf16.mxu0 0
        %322 = vmatmul.mubr.bf16.gmra.mrb[0].mxu0 %v261
        %v323 = vpop.f32.mrb[0].mxu0
        %v324 = vadd.f32 %v231, %v323
        %v325 = vpop.f32.mrb[0].mxu0
        %v326 = vpop.f32.mrb[0].mxu0
        %v327 = vadd.f32 %v231, %v326
        %v328 = vpop.f32.mrb[0].mxu0
        %329 = vmatprep.mubr.bf16.mxu0 0
        %330 = vmatmul.mubr.bf16.gmra.mrb[0].mxu0 %v264
        %v331 = vpop.f32.mrb[0].mxu0
        %v332 = vadd.f32 %v231, %v331
        %v333 = vpop.f32.mrb[0].mxu0
        %v334 = vpop.f32.mrb[0].mxu0
        %v335 = vadd.f32 %v231, %v334
        %v336 = vpop.f32.mrb[0].mxu0
        %337 = vdwg.mxu0
        %vm338 = vcmp.gt.f32.partialorder %v308, 0.0
        %vm339 = vcmp.gt.f32.partialorder %v311, 0.0
        %vm340 = vcmp.gt.f32.partialorder %v316, 0.0
        %vm341 = vcmp.gt.f32.partialorder %v319, 0.0
        %vm342 = vcmp.gt.f32.partialorder %v324, 0.0
        %vm343 = vcmp.gt.f32.partialorder %v327, 0.0
        %vm344 = vcmp.gt.f32.partialorder %v332, 0.0
        %vm345 = vcmp.gt.f32.partialorder %v335, 0.0
        %v346 = vmul.f32 %v308, 0.1
        %v347 = vmul.f32 %v311, 0.1
        %v348 = vmul.f32 %v316, 0.1
        %v349 = vmul.f32 %v319, 0.1
        %v350 = vmul.f32 %v324, 0.1
        %v351 = vmul.f32 %v327, 0.1
        %v352 = vmul.f32 %v332, 0.1
        %v353 = vmul.f32 %v335, 0.1
        %v354 = vsel %vm338, %v308, %v346
        %v355 = vsel %vm339, %v311, %v347
        %v356 = vsel %vm340, %v316, %v348
        %v357 = vsel %vm341, %v319, %v349
        %v358 = vsel %vm342, %v324, %v350
        %v359 = vsel %vm343, %v327, %v351
        %v360 = vsel %vm344, %v332, %v352
        %v361 = vsel %vm345, %v335, %v353
        %v362 = vpack.c.bf16 %v355, %v354
        %v363 = vpack.c.bf16 %v357, %v356
        %v364 = vpack.c.bf16 %v359, %v358
        %v365 = vpack.c.bf16 %v361, %v360
        %v370 = vunpack.c.l.b16 %v362
        %v371 = vunpack.c.h.b16 %v362
        %v372 = vunpack.c.l.b16 %v363
        %v373 = vunpack.c.h.b16 %v363
        %v374 = vunpack.c.l.b16 %v364
        %v375 = vunpack.c.h.b16 %v364
        %v376 = vunpack.c.l.b16 %v365
        %v377 = vunpack.c.h.b16 %v365
        %v378 = vpack.c.b16 %v370, %v370
        %v379 = vpack.c.b16 %v371, %v371
        %v380 = vpack.c.b16 %v372, %v372
        %v381 = vpack.c.b16 %v373, %v373
        %v382 = vpack.c.b16 %v374, %v374
        %v383 = vpack.c.b16 %v375, %v375
        %v384 = vpack.c.b16 %v376, %v376
        %v385 = vpack.c.b16 %v377, %v377
        %394 = vst [vmem:[%s213] sm:$0xf] %v378
        %395 = vst [vmem:[%s213 + $0x4] sm:$0xf] %v379
        %396 = vst [vmem:[%s213 + $0x8] sm:$0xf] %v380
        %397 = vst [vmem:[%s213 + $0xc] sm:$0xf] %v381
        %398 = vst [vmem:[%s213 + $0x10] sm:$0xf] %v382
        %399 = vst [vmem:[%s213 + $0x14] sm:$0xf] %v383
        %400 = vst [vmem:[%s213 + $0x18] sm:$0xf] %v384
        %401 = vst [vmem:[%s213 + $0x1c] sm:$0xf] %v385
        %s402 = sand.u32 %s97, 1
        %s403 = scalar_lea.sflag [#allocation4], %s402
        %s404 = sand.u32 %s97, 1
        %s405 = smul.addr %s404, 32
        %s406 = scalar_lea.vmem [#allocation8], %s405
        // Predicated region
        $region45: #{gnn_node_forward.6} parent=31 // pred_check
          %p407 = pneg %p107
        $region46: #{gnn_node_forward.6} parent=31 // pred_check_branch
          %409 = sbr.rel (%p407) target = $region48
        $region47: #{gnn_node_forward.6} parent=31 // pred_region
          %s410 = smul.u32 8, %s21
          %s412 = ssub.s32 512, 512
          %413 = vsyncadd %s403, %s412
          %s414 = smul.addr %s410, 64
          %s415 = scalar_lea.hbm %s3, %s414
          %s416 = sshll.u32 %s406, 4
          %s417 = int_to_ptr.vmem [resolvable:$true] %s416
          %422 = dma.vmem_to_hbm [thread:$0]  %s417, 512, %s415, %s403, 64, 64, 4
        $region48: #{gnn_node_forward.6} parent=31 // pred_fallthru
          _
      $region32: #{gnn_node_forward.6} parent=5 // pred_fallthru
        _
      %p423 = scmp.le.s32.totalorder 2, %s16
      // Predicated region
      $region49: #{gnn_node_forward.6} parent=5 // pred_check
        %p424 = pneg %p423
      $region50: #{gnn_node_forward.6} parent=5 // pred_check_branch
        %426 = sbr.rel (%p424) target = $region52
      $region51: #{gnn_node_forward.6} parent=5 // pred_region
        %s427 = ssub.s32 %s16, 2
        // Predicated region
        $region53: #{gnn_node_forward.6} parent=51 // pred_check
          %p428 = pneg %p113
        $region54: #{gnn_node_forward.6} parent=51 // pred_check_branch
          %430 = sbr.rel (%p428) target = $region56
        $region55: #{gnn_node_forward.6} parent=51 // pred_region
          %s431 = sand.u32 %s98, 1
          %s432 = scalar_lea.sflag [#allocation4], %s431
          %s433 = sand.u32 %s98, 1
          %s434 = smul.addr %s433, 32
          %s435 = scalar_lea.vmem [#allocation8], %s434
          %436 = dma.done %s432, 512
        $region56: #{gnn_node_forward.6} parent=51 // pred_fallthru
          _
      $region52: #{gnn_node_forward.6} parent=5 // pred_fallthru
        _
    $region6: #{gnn_node_forward.6} parent=1 // loop_footer
      %s20 = sadd.s32 1, %s16
    $region7: #{gnn_node_forward.6} parent=1 // loop_footer_branch
      %15 = sbr.rel target = $region3
    $region8: #{gnn_node_forward.6} parent=1 // loop_exit
      _
    %437 = vsyncpa [#allocation3], 1
    %s438 = scalar_lea.sflag [#allocation3], 1
    %439 = vsyncpa %s438, 1
    %440 = vsyncpa [#allocation6], 1
    %441 = vsyncpa [#allocation4], 1
    %s442 = scalar_lea.sflag [#allocation4], 1
    %443 = vsyncpa %s442, 1

// kernel: gnn_node_forward.5
$region0: #{gnn_node_forward.5}
  #allocation0 [shape = 'u32[]', space=smem, size = 0x4, offset = 0x4, fixed_abs, tag = 'smem constant byte address 0x4 - core index']
  #allocation1 [shape = 'u32[144,128]{1,0:T(1,128)}', space=vmem, size = 0x12000, scoped, tag = 'internal scratch']
  %s0 = inlined_call_operand.hbm [shape: bf16[128,6], index: 0, kind: input, shape index: {}]
  %s1 = inlined_call_operand.hbm [shape: bf16[6,128], index: 1, kind: input, shape index: {}]
  %s2 = inlined_call_operand.hbm [shape: f32[1,128], index: 2, kind: input, shape index: {}]
  %s3 = inlined_call_operand.hbm [shape: bf16[128,128], index: 3, kind: input, shape index: {}]
  %s4 = inlined_call_operand.hbm [shape: f32[1,128], index: 4, kind: input, shape index: {}]
  %s5 = inlined_call_operand.hbm [shape: bf16[128,128], index: 5, kind: output, shape index: {}]
  %s6 = sld [smem:[#allocation0]]
  $region73: #{gnn_node_forward.5} parent=0
    _
  %s8 = ssub.s32 1, %s6
  %s9 = scalar_select 0, %s8, %s6
  $region1: #{gnn_node_forward.5} parent=0
    #allocation2 [shape = 'u8[32768]{0}', space=vmem, size = 0x8000, scoped, tag = 'input window, operand 0']
    #allocation3 [shape = 's32[2]{0}', space=sflag, size = 0x8, scoped, tag = 'scoped memory for gnn_node_forward.5']
    #allocation4 [shape = 's32[2]{0}', space=sflag, size = 0x8, scoped, tag = 'scoped memory for gnn_node_forward.5']
    #allocation5 [shape = 'u8[2048]{0}', space=vmem, size = 0x800, scoped, tag = 'input window, operand 1, single buffered']
    #allocation6 [shape = 's32[1]{0}', space=sflag, size = 0x4, scoped, tag = 'scoped memory for gnn_node_forward.5']
    #allocation7 [shape = 'u8[512]{0}', space=vmem, size = 0x400, scoped, tag = 'input window, operand 2, single buffered']
    #allocation8 [shape = 'u8[32768]{0}', space=vmem, size = 0x8000, scoped, tag = 'input window, operand 3, single buffered']
    #allocation9 [shape = 's32[1]{0}', space=sflag, size = 0x4, scoped, tag = 'scoped memory for gnn_node_forward.5']
    #allocation10 [shape = 'u8[512]{0}', space=vmem, size = 0x400, scoped, tag = 'input window, operand 4, single buffered']
    #allocation11 [shape = 'u8[32768]{0}', space=vmem, size = 0x8000, scoped, tag = 'output window, operand 0']
    %10 = vsyncpa [#allocation3], 0
    %s11 = scalar_lea.sflag [#allocation3], 1
    %12 = vsyncpa %s11, 0
    %13 = vsyncpa [#allocation6], 0
    %14 = vsyncpa [#allocation9], 0
    %15 = vsyncpa [#allocation4], 0
    %s16 = scalar_lea.sflag [#allocation4], 1
    %17 = vsyncpa %s16, 0
    loop: start=0, step=1, limit=4
    $region2: #{gnn_node_forward.5} parent=1 // loop_pre_header
      _
    $region3: #{gnn_node_forward.5} parent=1 // loop_header
      %s19 = sphi 0, %s23
      %p20 = scmp.ge.s32.totalorder %s19, 4
      %s29 = sphi 0, %s31
      %s32 = sphi 0, %s29
      %s33 = sphi 0, %s32
      %s49 = sphi 0, %s33
      %s53 = sphi 0, %s53
      %s55 = sphi 0, %s53
      %s56 = sphi 0, %s55
      %s70 = sphi 0, %s56
      %s74 = sphi 0, %s74
      %s76 = sphi 0, %s74
      %s77 = sphi 0, %s76
      %s91 = sphi 0, %s77
      %s95 = sphi 0, %s95
      %s97 = sphi 0, %s95
      %s98 = sphi 0, %s97
      %s112 = sphi 0, %s98
      %s116 = sphi 0, %s116
      %s118 = sphi 0, %s116
      %s119 = sphi 0, %s118
      %s133 = sphi 0, %s119
      %s139 = sphi 0, %s141
      %s142 = sphi 0, %s139
      %s143 = sphi 0, %s142
      %s159 = sphi 0, %s143
    $region4: #{gnn_node_forward.5} parent=1 // loop_header_branch
      %22 = sbr.rel (%p20) target = $region8
    $region5: #{gnn_node_forward.5} parent=1 // loop_body
      %s24 = ssub.s32 %s19, 1
      %s25 = ssub.s32 %s19, 2
      %s26 = sadd.s32 %s19, 1
      %s27 = ssub.s32 %s19, %s26
      %p28 = scmp.eq.s32.totalorder %s27, 0
      %s30 = sadd.s32 %s29, 1
      %s31 = scalar_select %p28, %s29, %s30
      %p34 = pneg %p28
      %p35 = scmp.eq.s32.totalorder %s19, 1
      %p36 = por %p34, %p35
      %p37 = scmp.ne.s32.totalorder %s29, %s32
      %p38 = scmp.eq.s32.totalorder %s19, 0
      %p39 = por %p37, %p38
      %p40 = scmp.ne.s32.totalorder %s29, %s32
      %p41 = scmp.eq.s32.totalorder %s24, 1
      %p42 = por %p40, %p41
      %p43 = scmp.ne.s32.totalorder %s32, %s33
      %p44 = scmp.eq.s32.totalorder %s24, 0
      %p45 = por %p43, %p44
      %p46 = scmp.ne.s32.totalorder %s32, %s33
      %p47 = scmp.eq.s32.totalorder %s25, 1
      %p48 = por %p46, %p47
      %p50 = scmp.ne.s32.totalorder %s33, %s49
      %p51 = scmp.eq.s32.totalorder %s25, 0
      %p52 = por %p50, %p51
      %s54 = sadd.s32 %s53, 1
      %p57 = scmp.eq.s32.totalorder %s19, 1
      %p58 = scmp.ne.s32.totalorder %s53, %s55
      %p59 = scmp.eq.s32.totalorder %s19, 0
      %p60 = por %p58, %p59
      %p61 = scmp.ne.s32.totalorder %s53, %s55
      %p62 = scmp.eq.s32.totalorder %s24, 1
      %p63 = por %p61, %p62
      %p64 = scmp.ne.s32.totalorder %s55, %s56
      %p65 = scmp.eq.s32.totalorder %s24, 0
      %p66 = por %p64, %p65
      %p67 = scmp.ne.s32.totalorder %s55, %s56
      %p68 = scmp.eq.s32.totalorder %s25, 1
      %p69 = por %p67, %p68
      %p71 = scmp.ne.s32.totalorder %s56, %s70
      %p72 = scmp.eq.s32.totalorder %s25, 0
      %p73 = por %p71, %p72
      %s75 = sadd.s32 %s74, 1
      %p78 = scmp.eq.s32.totalorder %s19, 1
      %p79 = scmp.ne.s32.totalorder %s74, %s76
      %p80 = scmp.eq.s32.totalorder %s19, 0
      %p81 = por %p79, %p80
      %p82 = scmp.ne.s32.totalorder %s74, %s76
      %p83 = scmp.eq.s32.totalorder %s24, 1
      %p84 = por %p82, %p83
      %p85 = scmp.ne.s32.totalorder %s76, %s77
      %p86 = scmp.eq.s32.totalorder %s24, 0
      %p87 = por %p85, %p86
      %p88 = scmp.ne.s32.totalorder %s76, %s77
      %p89 = scmp.eq.s32.totalorder %s25, 1
      %p90 = por %p88, %p89
      %p92 = scmp.ne.s32.totalorder %s77, %s91
      %p93 = scmp.eq.s32.totalorder %s25, 0
      %p94 = por %p92, %p93
      %s96 = sadd.s32 %s95, 1
      %p99 = scmp.eq.s32.totalorder %s19, 1
      %p100 = scmp.ne.s32.totalorder %s95, %s97
      %p101 = scmp.eq.s32.totalorder %s19, 0
      %p102 = por %p100, %p101
      %p103 = scmp.ne.s32.totalorder %s95, %s97
      %p104 = scmp.eq.s32.totalorder %s24, 1
      %p105 = por %p103, %p104
      %p106 = scmp.ne.s32.totalorder %s97, %s98
      %p107 = scmp.eq.s32.totalorder %s24, 0
      %p108 = por %p106, %p107
      %p109 = scmp.ne.s32.totalorder %s97, %s98
      %p110 = scmp.eq.s32.totalorder %s25, 1
      %p111 = por %p109, %p110
      %p113 = scmp.ne.s32.totalorder %s98, %s112
      %p114 = scmp.eq.s32.totalorder %s25, 0
      %p115 = por %p113, %p114
      %s117 = sadd.s32 %s116, 1
      %p120 = scmp.eq.s32.totalorder %s19, 1
      %p121 = scmp.ne.s32.totalorder %s116, %s118
      %p122 = scmp.eq.s32.totalorder %s19, 0
      %p123 = por %p121, %p122
      %p124 = scmp.ne.s32.totalorder %s116, %s118
      %p125 = scmp.eq.s32.totalorder %s24, 1
      %p126 = por %p124, %p125
      %p127 = scmp.ne.s32.totalorder %s118, %s119
      %p128 = scmp.eq.s32.totalorder %s24, 0
      %p129 = por %p127, %p128
      %p130 = scmp.ne.s32.totalorder %s118, %s119
      %p131 = scmp.eq.s32.totalorder %s25, 1
      %p132 = por %p130, %p131
      %p134 = scmp.ne.s32.totalorder %s119, %s133
      %p135 = scmp.eq.s32.totalorder %s25, 0
      %p136 = por %p134, %p135
      %s137 = ssub.s32 %s19, %s26
      %p138 = scmp.eq.s32.totalorder %s137, 0
      %s140 = sadd.s32 %s139, 1
      %s141 = scalar_select %p138, %s139, %s140
      %p144 = pneg %p138
      %p145 = scmp.eq.s32.totalorder %s19, 1
      %p146 = por %p144, %p145
      %p147 = scmp.ne.s32.totalorder %s139, %s142
      %p148 = scmp.eq.s32.totalorder %s19, 0
      %p149 = por %p147, %p148
      %p150 = scmp.ne.s32.totalorder %s139, %s142
      %p151 = scmp.eq.s32.totalorder %s24, 1
      %p152 = por %p150, %p151
      %p153 = scmp.ne.s32.totalorder %s142, %s143
      %p154 = scmp.eq.s32.totalorder %s24, 0
      %p155 = por %p153, %p154
      %p156 = scmp.ne.s32.totalorder %s142, %s143
      %p157 = scmp.eq.s32.totalorder %s25, 1
      %p158 = por %p156, %p157
      %p160 = scmp.ne.s32.totalorder %s143, %s159
      %p161 = scmp.eq.s32.totalorder %s25, 0
      %p162 = por %p160, %p161
      %p163 = scmp.le.s32.totalorder 1, %s19
      %p164 = scmp.lt.s32.totalorder %s19, 3
      %p165 = pnand %p163, %p164
      %p166 = pneg %p165
      // Predicated region
      $region9: #{gnn_node_forward.5} parent=5 // pred_check
        _
      $region10: #{gnn_node_forward.5} parent=5 // pred_check_branch
        %168 = sbr.rel (%p165) target = $region12
      $region11: #{gnn_node_forward.5} parent=5 // pred_region
        %s169 = ssub.s32 %s19, 1
        // Predicated region
        $region13: #{gnn_node_forward.5} parent=11 // pred_check
          %p170 = pneg %p66
        $region14: #{gnn_node_forward.5} parent=11 // pred_check_branch
          %172 = sbr.rel (%p170) target = $region16
        $region15: #{gnn_node_forward.5} parent=11 // pred_region
          %s174 = ssub.s32 64, 64
          %175 = vsyncadd [#allocation6], %s174
          %s177 = sshll.u32 [#allocation5], 4
          %s178 = int_to_ptr.vmem [resolvable:$true] %s177
          %180 = dma.hbm_to_vmem [thread:$0]  %s1, 64, %s178, [#allocation6]
        $region16: #{gnn_node_forward.5} parent=11 // pred_fallthru
          _
        // Predicated region
        $region17: #{gnn_node_forward.5} parent=11 // pred_check
          %p181 = pneg %p87
        $region18: #{gnn_node_forward.5} parent=11 // pred_check_branch
          %183 = sbr.rel (%p181) target = $region20
        $region19: #{gnn_node_forward.5} parent=11 // pred_region
          %s185 = ssub.s32 16, 16
          %186 = vsyncadd [#allocation6], %s185
          %s188 = sshll.u32 [#allocation7], 4
          %s189 = int_to_ptr.vmem [resolvable:$true] %s188
          %191 = dma.hbm_to_vmem [thread:$0]  %s2, 16, %s189, [#allocation6]
        $region20: #{gnn_node_forward.5} parent=11 // pred_fallthru
          _
        // Predicated region
        $region21: #{gnn_node_forward.5} parent=11 // pred_check
          %p192 = pneg %p108
        $region22: #{gnn_node_forward.5} parent=11 // pred_check_branch
          %194 = sbr.rel (%p192) target = $region24
        $region23: #{gnn_node_forward.5} parent=11 // pred_region
          %s196 = ssub.s32 1024, 1024
          %197 = vsyncadd [#allocation9], %s196
          %s198 = sshll.u32 [#allocation8], 4
          %s199 = int_to_ptr.vmem [resolvable:$true] %s198
          %204 = dma.hbm_to_vmem [thread:$0]  %s3, 1024, %s199, [#allocation9], 64, 64, 4
        $region24: #{gnn_node_forward.5} parent=11 // pred_fallthru
          _
        // Predicated region
        $region25: #{gnn_node_forward.5} parent=11 // pred_check
          %p205 = pneg %p129
        $region26: #{gnn_node_forward.5} parent=11 // pred_check_branch
          %207 = sbr.rel (%p205) target = $region28
        $region27: #{gnn_node_forward.5} parent=11 // pred_region
          %s209 = ssub.s32 16, 16
          %210 = vsyncadd [#allocation9], %s209
          %s212 = sshll.u32 [#allocation10], 4
          %s213 = int_to_ptr.vmem [resolvable:$true] %s212
          %215 = dma.hbm_to_vmem [thread:$0]  %s4, 16, %s213, [#allocation9]
        $region28: #{gnn_node_forward.5} parent=11 // pred_fallthru
          _
      $region12: #{gnn_node_forward.5} parent=5 // pred_fallthru
        _
      %p216 = scmp.lt.s32.totalorder %s19, 2
      // Predicated region
      $region29: #{gnn_node_forward.5} parent=5 // pred_check
        %p217 = pneg %p216
      $region30: #{gnn_node_forward.5} parent=5 // pred_check_branch
        %219 = sbr.rel (%p217) target = $region32
      $region31: #{gnn_node_forward.5} parent=5 // pred_region
        // Predicated region
        $region33: #{gnn_node_forward.5} parent=31 // pred_check
          %p220 = pneg %p39
        $region34: #{gnn_node_forward.5} parent=31 // pred_check_branch
          %222 = sbr.rel (%p220) target = $region36
        $region35: #{gnn_node_forward.5} parent=31 // pred_region
          %s223 = sand.u32 %s29, 1
          %s224 = scalar_lea.sflag [#allocation3], %s223
          %s225 = sand.u32 %s29, 1
          %s226 = smul.addr %s225, 32
          %s227 = scalar_lea.vmem [#allocation2], %s226
          %s228 = smul.u32 8, %s19
          %s230 = ssub.s32 512, 512
          %231 = vsyncadd %s224, %s230
          %s232 = smul.addr %s228, 64
          %s233 = scalar_lea.hbm %s0, %s232
          %s234 = sshll.u32 %s227, 4
          %s235 = int_to_ptr.vmem [resolvable:$true] %s234
          %240 = dma.hbm_to_vmem [thread:$0]  %s233, 512, %s235, %s224, 64, 64, 4
        $region36: #{gnn_node_forward.5} parent=31 // pred_fallthru
          _
      $region32: #{gnn_node_forward.5} parent=5 // pred_fallthru
        _
      %p241 = scmp.le.s32.totalorder 1, %s19
      %p242 = scmp.lt.s32.totalorder %s19, 3
      %p243 = pnand %p241, %p242
      %p244 = pneg %p243
      // Predicated region
      $region37: #{gnn_node_forward.5} parent=5 // pred_check
        _
      $region38: #{gnn_node_forward.5} parent=5 // pred_check_branch
        %246 = sbr.rel (%p243) target = $region40
      $region39: #{gnn_node_forward.5} parent=5 // pred_region
        %s247 = ssub.s32 %s19, 1
        %s248 = sand.u32 %s32, 1
        %s249 = scalar_lea.sflag [#allocation3], %s248
        %s250 = sand.u32 %s32, 1
        %s251 = smul.addr %s250, 32
        %s252 = scalar_lea.vmem [#allocation2], %s251
        // Predicated region
        $region41: #{gnn_node_forward.5} parent=39 // pred_check
          %p253 = pneg %p45
        $region42: #{gnn_node_forward.5} parent=39 // pred_check_branch
          %255 = sbr.rel (%p253) target = $region44
        $region43: #{gnn_node_forward.5} parent=39 // pred_region
          %256 = dma.done %s249, 512
        $region44: #{gnn_node_forward.5} parent=39 // pred_fallthru
          _
        // Predicated region
        $region45: #{gnn_node_forward.5} parent=39 // pred_check
          %p257 = pneg %p66
        $region46: #{gnn_node_forward.5} parent=39 // pred_check_branch
          %259 = sbr.rel (%p257) target = $region48
        $region47: #{gnn_node_forward.5} parent=39 // pred_region
          %260 = dma.done [#allocation6], 64
        $region48: #{gnn_node_forward.5} parent=39 // pred_fallthru
          _
        // Predicated region
        $region49: #{gnn_node_forward.5} parent=39 // pred_check
          %p261 = pneg %p87
        $region50: #{gnn_node_forward.5} parent=39 // pred_check_branch
          %263 = sbr.rel (%p261) target = $region52
        $region51: #{gnn_node_forward.5} parent=39 // pred_region
          %264 = dma.done [#allocation6], 16
        $region52: #{gnn_node_forward.5} parent=39 // pred_fallthru
          _
        // Predicated region
        $region53: #{gnn_node_forward.5} parent=39 // pred_check
          %p265 = pneg %p108
        $region54: #{gnn_node_forward.5} parent=39 // pred_check_branch
          %267 = sbr.rel (%p265) target = $region56
        $region55: #{gnn_node_forward.5} parent=39 // pred_region
          %268 = dma.done [#allocation9], 1024
        $region56: #{gnn_node_forward.5} parent=39 // pred_fallthru
          _
        // Predicated region
        $region57: #{gnn_node_forward.5} parent=39 // pred_check
          %p269 = pneg %p129
        $region58: #{gnn_node_forward.5} parent=39 // pred_check_branch
          %271 = sbr.rel (%p269) target = $region60
        $region59: #{gnn_node_forward.5} parent=39 // pred_region
          %272 = dma.done [#allocation9], 16
        $region60: #{gnn_node_forward.5} parent=39 // pred_fallthru
          _
        %s273 = sand.u32 %s32, 1
        %s274 = scalar_lea.sflag [#allocation3], %s273
        %s275 = sand.u32 %s32, 1
        %s276 = smul.addr %s275, 32
        %s277 = scalar_lea.vmem [#allocation2], %s276
        %p278 = pneg %p45
        %p279 = pneg %p42
        %p280 = pneg %p66
        %p281 = pneg %p63
        %p282 = pneg %p87
        %p283 = pneg %p84
        %p284 = pneg %p108
        %p285 = pneg %p105
        %p286 = pneg %p129
        %p287 = pneg %p126
        %p288 = pneg %p155
        %p289 = pneg %p152
        %s290 = sand.u32 %s142, 1
        %s291 = scalar_lea.sflag [#allocation4], %s290
        %s292 = sand.u32 %s142, 1
        %s293 = smul.addr %s292, 32
        %s294 = scalar_lea.vmem [#allocation11], %s293
        %s295 = smul.u32 8, %s24
        %s296 = smul.u32 8, %s24
        %v298 = vld [vmem:[%s252] sm:$0xf]
        %v299 = vld [vmem:[%s252 + $0x4] sm:$0xf]
        %v300 = vld [vmem:[%s252 + $0x8] sm:$0xf]
        %v301 = vld [vmem:[%s252 + $0xc] sm:$0xf]
        %v302 = vld [vmem:[%s252 + $0x10] sm:$0xf]
        %v303 = vld [vmem:[%s252 + $0x14] sm:$0xf]
        %v304 = vld [vmem:[%s252 + $0x18] sm:$0xf]
        %v305 = vld [vmem:[%s252 + $0x1c] sm:$0xf]
        %v306 = vld [vmem:[#allocation5] sm:$0x7]
        %v307 = vld [vmem:[#allocation7] sm:$0x1]
        %v309 = vlaneseq
        %v310 = vshrl.u32 %v309, 7
        %v311 = vsub.s32 0, %v310
        %v312 = vrot.slane %v307, %v311
        %v322 = vunpack.c.l.b16 %v298
        %v323 = vunpack.c.l.b16 %v299
        %v324 = vunpack.c.l.b16 %v300
        %v325 = vunpack.c.l.b16 %v301
        %v326 = vunpack.c.l.b16 %v302
        %v327 = vunpack.c.l.b16 %v303
        %v328 = vunpack.c.l.b16 %v304
        %v329 = vunpack.c.l.b16 %v305
        %v330 = vpack.c.b16 %v323, %v322
        %v331 = vpack.c.b16 %v325, %v324
        %v332 = vpack.c.b16 %v327, %v326
        %v333 = vpack.c.b16 %v329, %v328
        %vm334 = vcmask 48128
        %v336 = vsel %vm334, %v330, 0
        %v339 = vsel %vm334, %v331, 0
        %v342 = vsel %vm334, %v332, 0
        %v345 = vsel %vm334, %v333, 0
        %vm347 = vcmask 1042432
        %v349 = vsel %vm347, %v306, 0
        %351 = vmatprep.subr.bf16.mxu0 0
        %352 = vmatpush1.bf16.msra.mxu0 %v349
        %353 = vmatprep.subr.bf16.mxu0 0
        %354 = vmatpush1.bf16.msra.mxu0 0
        %355 = vmatprep.subr.bf16.mxu0 0
        %356 = vmatpush1.bf16.msra.mxu0 0
        %357 = vmatprep.subr.bf16.mxu0 0
        %358 = vmatpush1.bf16.msra.mxu0 0
        %359 = vmatprep.subr.bf16.mxu0 0
        %360 = vmatpush1.bf16.msra.mxu0 0
        %361 = vmatprep.subr.bf16.mxu0 0
        %362 = vmatpush1.bf16.msra.mxu0 0
        %363 = vmatprep.subr.bf16.mxu0 0
        %364 = vmatpush1.bf16.msra.mxu0 0
        %365 = vmatprep.subr.bf16.mxu0 0
        %366 = vmatpush1.bf16.msra.mxu0 0
        %367 = vmatprep.subr.bf16.mxu0 0
        %368 = vmatpush1.bf16.msra.mxu0 0
        %369 = vmatprep.subr.bf16.mxu0 0
        %370 = vmatpush1.bf16.msra.mxu0 0
        %371 = vmatprep.subr.bf16.mxu0 0
        %372 = vmatpush1.bf16.msra.mxu0 0
        %373 = vmatprep.subr.bf16.mxu0 0
        %374 = vmatpush1.bf16.msra.mxu0 0
        %375 = vmatprep.subr.bf16.mxu0 0
        %376 = vmatpush1.bf16.msra.mxu0 0
        %377 = vmatprep.subr.bf16.mxu0 0
        %378 = vmatpush1.bf16.msra.mxu0 0
        %379 = vmatprep.subr.bf16.mxu0 0
        %380 = vmatpush1.bf16.msra.mxu0 0
        %381 = vmatprep.subr.bf16.mxu0 0
        %382 = vmatpush1.bf16.msra.mxu0 0
        %383 = vmatprep.mubr.bf16.mxu0 0
        %384 = vmatmul.mubr.bf16.gmra.mrb[0].mxu0 %v336
        %v385 = vpop.f32.mrb[0].mxu0
        %v386 = vadd.f32 %v312, %v385
        %v387 = vpop.f32.mrb[0].mxu0
        %v388 = vpop.f32.mrb[0].mxu0
        %v389 = vadd.f32 %v312, %v388
        %v390 = vpop.f32.mrb[0].mxu0
        %391 = vmatprep.mubr.bf16.mxu0 0
        %392 = vmatmul.mubr.bf16.gmra.mrb[0].mxu0 %v339
        %v393 = vpop.f32.mrb[0].mxu0
        %v394 = vadd.f32 %v312, %v393
        %v395 = vpop.f32.mrb[0].mxu0
        %v396 = vpop.f32.mrb[0].mxu0
        %v397 = vadd.f32 %v312, %v396
        %v398 = vpop.f32.mrb[0].mxu0
        %399 = vmatprep.mubr.bf16.mxu0 0
        %400 = vmatmul.mubr.bf16.gmra.mrb[0].mxu0 %v342
        %v401 = vpop.f32.mrb[0].mxu0
        %v402 = vadd.f32 %v312, %v401
        %v403 = vpop.f32.mrb[0].mxu0
        %v404 = vpop.f32.mrb[0].mxu0
        %v405 = vadd.f32 %v312, %v404
        %v406 = vpop.f32.mrb[0].mxu0
        %407 = vmatprep.mubr.bf16.mxu0 0
        %408 = vmatmul.mubr.bf16.gmra.mrb[0].mxu0 %v345
        %v409 = vpop.f32.mrb[0].mxu0
        %v410 = vadd.f32 %v312, %v409
        %v411 = vpop.f32.mrb[0].mxu0
        %v412 = vpop.f32.mrb[0].mxu0
        %v413 = vadd.f32 %v312, %v412
        %v414 = vpop.f32.mrb[0].mxu0
        %415 = vdwg.mxu0
        %vm416 = vcmp.gt.f32.partialorder %v386, 0.0
        %vm417 = vcmp.gt.f32.partialorder %v389, 0.0
        %vm418 = vcmp.gt.f32.partialorder %v394, 0.0
        %vm419 = vcmp.gt.f32.partialorder %v397, 0.0
        %vm420 = vcmp.gt.f32.partialorder %v402, 0.0
        %vm421 = vcmp.gt.f32.partialorder %v405, 0.0
        %vm422 = vcmp.gt.f32.partialorder %v410, 0.0
        %vm423 = vcmp.gt.f32.partialorder %v413, 0.0
        %v424 = vmul.f32 %v386, 0.1
        %v425 = vmul.f32 %v389, 0.1
        %v426 = vmul.f32 %v394, 0.1
        %v427 = vmul.f32 %v397, 0.1
        %v428 = vmul.f32 %v402, 0.1
        %v429 = vmul.f32 %v405, 0.1
        %v430 = vmul.f32 %v410, 0.1
        %v431 = vmul.f32 %v413, 0.1
        %v432 = vsel %vm416, %v386, %v424
        %v433 = vsel %vm417, %v389, %v425
        %v434 = vsel %vm418, %v394, %v426
        %v435 = vsel %vm419, %v397, %v427
        %v436 = vsel %vm420, %v402, %v428
        %v437 = vsel %vm421, %v405, %v429
        %v438 = vsel %vm422, %v410, %v430
        %v439 = vsel %vm423, %v413, %v431
        %v440 = vpack.c.bf16 %v433, %v432
        %v441 = vpack.c.bf16 %v435, %v434
        %v442 = vpack.c.bf16 %v437, %v436
        %v443 = vpack.c.bf16 %v439, %v438
        %v444 = vld [vmem:[#allocation8] sm:$0xf]
        %v445 = vld [vmem:[#allocation8 + $0x4] sm:$0xf]
        %v446 = vld [vmem:[#allocation8 + $0x8] sm:$0xf]
        %v447 = vld [vmem:[#allocation8 + $0xc] sm:$0xf]
        %v448 = vld [vmem:[#allocation8 + $0x10] sm:$0xf]
        %v449 = vld [vmem:[#allocation8 + $0x14] sm:$0xf]
        %v450 = vld [vmem:[#allocation8 + $0x18] sm:$0xf]
        %v451 = vld [vmem:[#allocation8 + $0x1c] sm:$0xf]
        %v452 = vld [vmem:[#allocation8 + $0x20] sm:$0xf]
        %v453 = vld [vmem:[#allocation8 + $0x24] sm:$0xf]
        %v454 = vld [vmem:[#allocation8 + $0x28] sm:$0xf]
        %v455 = vld [vmem:[#allocation8 + $0x2c] sm:$0xf]
        %v456 = vld [vmem:[#allocation8 + $0x30] sm:$0xf]
        %v457 = vld [vmem:[#allocation8 + $0x34] sm:$0xf]
        %v458 = vld [vmem:[#allocation8 + $0x38] sm:$0xf]
        %v459 = vld [vmem:[#allocation8 + $0x3c] sm:$0xf]
        %v460 = vld [vmem:[#allocation10] sm:$0x1]
        %v462 = vlaneseq
        %v463 = vshrl.u32 %v462, 7
        %v464 = vsub.s32 0, %v463
        %v465 = vrot.slane %v460, %v464
        %v483 = vunpack.c.l.b16 %v444
        %v484 = vunpack.c.l.b16 %v445
        %v485 = vunpack.c.l.b16 %v446
        %v486 = vunpack.c.l.b16 %v447
        %v487 = vunpack.c.l.b16 %v448
        %v488 = vunpack.c.l.b16 %v449
        %v489 = vunpack.c.l.b16 %v450
        %v490 = vunpack.c.l.b16 %v451
        %v491 = vunpack.c.l.b16 %v452
        %v492 = vunpack.c.l.b16 %v453
        %v493 = vunpack.c.l.b16 %v454
        %v494 = vunpack.c.l.b16 %v455
        %v495 = vunpack.c.l.b16 %v456
        %v496 = vunpack.c.l.b16 %v457
        %v497 = vunpack.c.l.b16 %v458
        %v498 = vunpack.c.l.b16 %v459
        %v499 = vpack.c.b16 %v484, %v483
        %v500 = vpack.c.b16 %v486, %v485
        %v501 = vpack.c.b16 %v488, %v487
        %v502 = vpack.c.b16 %v490, %v489
        %v503 = vpack.c.b16 %v492, %v491
        %v504 = vpack.c.b16 %v494, %v493
        %v505 = vpack.c.b16 %v496, %v495
        %v506 = vpack.c.b16 %v498, %v497
        %515 = vmatprep.subr.bf16.mxu0 0
        %516 = vmatpush1.bf16.msra.mxu0 %v499
        %517 = vmatprep.subr.bf16.mxu0 0
        %518 = vmatpush1.bf16.msra.mxu0 %v500
        %519 = vmatprep.subr.bf16.mxu0 0
        %520 = vmatpush1.bf16.msra.mxu0 %v501
        %521 = vmatprep.subr.bf16.mxu0 0
        %522 = vmatpush1.bf16.msra.mxu0 %v502
        %523 = vmatprep.subr.bf16.mxu0 0
        %524 = vmatpush1.bf16.msra.mxu0 %v503
        %525 = vmatprep.subr.bf16.mxu0 0
        %526 = vmatpush1.bf16.msra.mxu0 %v504
        %527 = vmatprep.subr.bf16.mxu0 0
        %528 = vmatpush1.bf16.msra.mxu0 %v505
        %529 = vmatprep.subr.bf16.mxu0 0
        %530 = vmatpush1.bf16.msra.mxu0 %v506
        %531 = vmatprep.subr.bf16.mxu0 0
        %532 = vmatpush1.bf16.msra.mxu0 0
        %533 = vmatprep.subr.bf16.mxu0 0
        %534 = vmatpush1.bf16.msra.mxu0 0
        %535 = vmatprep.subr.bf16.mxu0 0
        %536 = vmatpush1.bf16.msra.mxu0 0
        %537 = vmatprep.subr.bf16.mxu0 0
        %538 = vmatpush1.bf16.msra.mxu0 0
        %539 = vmatprep.subr.bf16.mxu0 0
        %540 = vmatpush1.bf16.msra.mxu0 0
        %541 = vmatprep.subr.bf16.mxu0 0
        %542 = vmatpush1.bf16.msra.mxu0 0
        %543 = vmatprep.subr.bf16.mxu0 0
        %544 = vmatpush1.bf16.msra.mxu0 0
        %545 = vmatprep.subr.bf16.mxu0 0
        %546 = vmatpush1.bf16.msra.mxu0 0
        %547 = vmatprep.mubr.bf16.mxu0 0
        %548 = vmatmul.mubr.bf16.gmra.mrb[0].mxu0 %v440
        %v549 = vpop.f32.mrb[0].mxu0
        %v550 = vadd.f32 %v465, %v549
        %v551 = vpop.f32.mrb[0].mxu0
        %v552 = vpop.f32.mrb[0].mxu0
        %v553 = vadd.f32 %v465, %v552
        %v554 = vpop.f32.mrb[0].mxu0
        %555 = vmatprep.mubr.bf16.mxu0 0
        %556 = vmatmul.mubr.bf16.gmra.mrb[0].mxu0 %v441
        %v557 = vpop.f32.mrb[0].mxu0
        %v558 = vadd.f32 %v465, %v557
        %v559 = vpop.f32.mrb[0].mxu0
        %v560 = vpop.f32.mrb[0].mxu0
        %v561 = vadd.f32 %v465, %v560
        %v562 = vpop.f32.mrb[0].mxu0
        %563 = vmatprep.mubr.bf16.mxu0 0
        %564 = vmatmul.mubr.bf16.gmra.mrb[0].mxu0 %v442
        %v565 = vpop.f32.mrb[0].mxu0
        %v566 = vadd.f32 %v465, %v565
        %v567 = vpop.f32.mrb[0].mxu0
        %v568 = vpop.f32.mrb[0].mxu0
        %v569 = vadd.f32 %v465, %v568
        %v570 = vpop.f32.mrb[0].mxu0
        %571 = vmatprep.mubr.bf16.mxu0 0
        %572 = vmatmul.mubr.bf16.gmra.mrb[0].mxu0 %v443
        %v573 = vpop.f32.mrb[0].mxu0
        %v574 = vadd.f32 %v465, %v573
        %v575 = vpop.f32.mrb[0].mxu0
        %v576 = vpop.f32.mrb[0].mxu0
        %v577 = vadd.f32 %v465, %v576
        %v578 = vpop.f32.mrb[0].mxu0
        %579 = vdwg.mxu0
        %vm580 = vcmp.gt.f32.partialorder %v550, 0.0
        %vm581 = vcmp.gt.f32.partialorder %v553, 0.0
        %vm582 = vcmp.gt.f32.partialorder %v558, 0.0
        %vm583 = vcmp.gt.f32.partialorder %v561, 0.0
        %vm584 = vcmp.gt.f32.partialorder %v566, 0.0
        %vm585 = vcmp.gt.f32.partialorder %v569, 0.0
        %vm586 = vcmp.gt.f32.partialorder %v574, 0.0
        %vm587 = vcmp.gt.f32.partialorder %v577, 0.0
        %v588 = vmul.f32 %v550, 0.1
        %v589 = vmul.f32 %v553, 0.1
        %v590 = vmul.f32 %v558, 0.1
        %v591 = vmul.f32 %v561, 0.1
        %v592 = vmul.f32 %v566, 0.1
        %v593 = vmul.f32 %v569, 0.1
        %v594 = vmul.f32 %v574, 0.1
        %v595 = vmul.f32 %v577, 0.1
        %v596 = vsel %vm580, %v550, %v588
        %v597 = vsel %vm581, %v553, %v589
        %v598 = vsel %vm582, %v558, %v590
        %v599 = vsel %vm583, %v561, %v591
        %v600 = vsel %vm584, %v566, %v592
        %v601 = vsel %vm585, %v569, %v593
        %v602 = vsel %vm586, %v574, %v594
        %v603 = vsel %vm587, %v577, %v595
        %v604 = vpack.c.bf16 %v597, %v596
        %v605 = vpack.c.bf16 %v599, %v598
        %v606 = vpack.c.bf16 %v601, %v600
        %v607 = vpack.c.bf16 %v603, %v602
        %v612 = vunpack.c.l.b16 %v604
        %v613 = vunpack.c.h.b16 %v604
        %v614 = vunpack.c.l.b16 %v605
        %v615 = vunpack.c.h.b16 %v605
        %v616 = vunpack.c.l.b16 %v606
        %v617 = vunpack.c.h.b16 %v606
        %v618 = vunpack.c.l.b16 %v607
        %v619 = vunpack.c.h.b16 %v607
        %v620 = vpack.c.b16 %v612, %v612
        %v621 = vpack.c.b16 %v613, %v613
        %v622 = vpack.c.b16 %v614, %v614
        %v623 = vpack.c.b16 %v615, %v615
        %v624 = vpack.c.b16 %v616, %v616
        %v625 = vpack.c.b16 %v617, %v617
        %v626 = vpack.c.b16 %v618, %v618
        %v627 = vpack.c.b16 %v619, %v619
        %636 = vst [vmem:[%s294] sm:$0xf] %v620
        %637 = vst [vmem:[%s294 + $0x4] sm:$0xf] %v621
        %638 = vst [vmem:[%s294 + $0x8] sm:$0xf] %v622
        %639 = vst [vmem:[%s294 + $0xc] sm:$0xf] %v623
        %640 = vst [vmem:[%s294 + $0x10] sm:$0xf] %v624
        %641 = vst [vmem:[%s294 + $0x14] sm:$0xf] %v625
        %642 = vst [vmem:[%s294 + $0x18] sm:$0xf] %v626
        %643 = vst [vmem:[%s294 + $0x1c] sm:$0xf] %v627
        %s644 = sand.u32 %s142, 1
        %s645 = scalar_lea.sflag [#allocation4], %s644
        %s646 = sand.u32 %s142, 1
        %s647 = smul.addr %s646, 32
        %s648 = scalar_lea.vmem [#allocation11], %s647
        // Predicated region
        $region61: #{gnn_node_forward.5} parent=39 // pred_check
          %p649 = pneg %p152
        $region62: #{gnn_node_forward.5} parent=39 // pred_check_branch
          %651 = sbr.rel (%p649) target = $region64
        $region63: #{gnn_node_forward.5} parent=39 // pred_region
          %s652 = smul.u32 8, %s24
          %s654 = ssub.s32 512, 512
          %655 = vsyncadd %s645, %s654
          %s656 = smul.addr %s652, 64
          %s657 = scalar_lea.hbm %s5, %s656
          %s658 = sshll.u32 %s648, 4
          %s659 = int_to_ptr.vmem [resolvable:$true] %s658
          %664 = dma.vmem_to_hbm [thread:$0]  %s659, 512, %s657, %s645, 64, 64, 4
        $region64: #{gnn_node_forward.5} parent=39 // pred_fallthru
          _
      $region40: #{gnn_node_forward.5} parent=5 // pred_fallthru
        _
      %p665 = scmp.le.s32.totalorder 2, %s19
      // Predicated region
      $region65: #{gnn_node_forward.5} parent=5 // pred_check
        %p666 = pneg %p665
      $region66: #{gnn_node_forward.5} parent=5 // pred_check_branch
        %668 = sbr.rel (%p666) target = $region68
      $region67: #{gnn_node_forward.5} parent=5 // pred_region
        %s669 = ssub.s32 %s19, 2
        // Predicated region
        $region69: #{gnn_node_forward.5} parent=67 // pred_check
          %p670 = pneg %p158
        $region70: #{gnn_node_forward.5} parent=67 // pred_check_branch
          %672 = sbr.rel (%p670) target = $region72
        $region71: #{gnn_node_forward.5} parent=67 // pred_region
          %s673 = sand.u32 %s143, 1
          %s674 = scalar_lea.sflag [#allocation4], %s673
          %s675 = sand.u32 %s143, 1
          %s676 = smul.addr %s675, 32
          %s677 = scalar_lea.vmem [#allocation11], %s676
          %678 = dma.done %s674, 512
        $region72: #{gnn_node_forward.5} parent=67 // pred_fallthru
          _
      $region68: #{gnn_node_forward.5} parent=5 // pred_fallthru
        _
    $region6: #{gnn_node_forward.5} parent=1 // loop_footer
      %s23 = sadd.s32 1, %s19
    $region7: #{gnn_node_forward.5} parent=1 // loop_footer_branch
      %18 = sbr.rel target = $region3
    $region8: #{gnn_node_forward.5} parent=1 // loop_exit
      _
    %679 = vsyncpa [#allocation3], 1
    %s680 = scalar_lea.sflag [#allocation3], 1
    %681 = vsyncpa %s680, 1
    %682 = vsyncpa [#allocation6], 1
    %683 = vsyncpa [#allocation9], 1
    %684 = vsyncpa [#allocation4], 1
    %s685 = scalar_lea.sflag [#allocation4], 1
    %686 = vsyncpa %s685, 1

// kernel: gnn_node_forward.9
$region0: #{gnn_node_forward.9}
  #allocation0 [shape = 'u32[]', space=smem, size = 0x4, offset = 0x4, fixed_abs, tag = 'smem constant byte address 0x4 - core index']
  #allocation1 [shape = 'u32[144,128]{1,0:T(1,128)}', space=vmem, size = 0x12000, scoped, tag = 'internal scratch']
  #allocation2 [shape = 'f32[64,128]{1,0:T(8,128)}', space=vmem, size = 0x8000, scoped, tag = 'scratch operand']
  %s0 = inlined_call_operand.hbm [shape: bf16[3,128,128], index: 0, kind: input, shape index: {}]
  %s1 = inlined_call_operand.hbm [shape: bf16[3,128,128], index: 1, kind: input, shape index: {}]
  %s2 = inlined_call_operand.hbm [shape: f32[1,128], index: 2, kind: input, shape index: {}]
  %s3 = inlined_call_operand.hbm [shape: bf16[128,128], index: 3, kind: input, shape index: {}]
  %s4 = inlined_call_operand.hbm [shape: f32[1,128], index: 4, kind: input, shape index: {}]
  %s5 = inlined_call_operand.hbm [shape: f32[128,128], index: 5, kind: output, shape index: {}]
  %s6 = sld [smem:[#allocation0]]
  $region81: #{gnn_node_forward.9} parent=0
    _
  %s8 = ssub.s32 1, %s6
  %s9 = scalar_select 0, %s8, %s6
  $region1: #{gnn_node_forward.9} parent=0
    #allocation3 [shape = 'u8[32768]{0}', space=vmem, size = 0x8000, scoped, tag = 'input window, operand 0']
    #allocation4 [shape = 's32[2]{0}', space=sflag, size = 0x8, scoped, tag = 'scoped memory for gnn_node_forward.9']
    #allocation5 [shape = 's32[2]{0}', space=sflag, size = 0x8, scoped, tag = 'scoped memory for gnn_node_forward.9']
    #allocation6 [shape = 'u8[65536]{0}', space=vmem, size = 0x10000, scoped, tag = 'input window, operand 1']
    #allocation7 [shape = 's32[2]{0}', space=sflag, size = 0x8, scoped, tag = 'scoped memory for gnn_node_forward.9']
    #allocation8 [shape = 'u8[512]{0}', space=vmem, size = 0x400, scoped, tag = 'input window, operand 2, single buffered']
    #allocation9 [shape = 'u8[32768]{0}', space=vmem, size = 0x8000, scoped, tag = 'input window, operand 3, single buffered']
    #allocation10 [shape = 's32[1]{0}', space=sflag, size = 0x4, scoped, tag = 'scoped memory for gnn_node_forward.9']
    #allocation11 [shape = 'u8[512]{0}', space=vmem, size = 0x400, scoped, tag = 'input window, operand 4, single buffered']
    #allocation12 [shape = 'u8[65536]{0}', space=vmem, size = 0x10000, scoped, tag = 'output window, operand 0']
    %10 = vsyncpa [#allocation4], 0
    %s11 = scalar_lea.sflag [#allocation4], 1
    %12 = vsyncpa %s11, 0
    %13 = vsyncpa [#allocation7], 0
    %s14 = scalar_lea.sflag [#allocation7], 1
    %15 = vsyncpa %s14, 0
    %16 = vsyncpa [#allocation10], 0
    %17 = vsyncpa [#allocation5], 0
    %s18 = scalar_lea.sflag [#allocation5], 1
    %19 = vsyncpa %s18, 0
    loop: start=0, step=1, limit=8
    $region2: #{gnn_node_forward.9} parent=1 // loop_pre_header
      _
    $region3: #{gnn_node_forward.9} parent=1 // loop_header
      %s21 = sphi 0, %s25
      %p22 = scmp.ge.s32.totalorder %s21, 8
      %s28 = sphi 0, %s40
      %s29 = sphi 0, %s36
      %s30 = sphi 0, %s28
      %s31 = sphi 0, %s29
      %s32 = sphi 0, %s30
      %s33 = sphi 0, %s31
      %s45 = sphi 0, %s47
      %s48 = sphi 0, %s45
      %s49 = sphi 0, %s48
      %s65 = sphi 0, %s49
      %s71 = sphi 0, %s73
      %s74 = sphi 0, %s71
      %s75 = sphi 0, %s74
      %s91 = sphi 0, %s75
      %s95 = sphi 0, %s95
      %s97 = sphi 0, %s95
      %s98 = sphi 0, %s97
      %s112 = sphi 0, %s98
      %s116 = sphi 0, %s116
      %s118 = sphi 0, %s116
      %s119 = sphi 0, %s118
      %s133 = sphi 0, %s119
      %s137 = sphi 0, %s137
      %s139 = sphi 0, %s137
      %s140 = sphi 0, %s139
      %s154 = sphi 0, %s140
      %s160 = sphi 0, %s162
      %s163 = sphi 0, %s160
      %s164 = sphi 0, %s163
      %s180 = sphi 0, %s164
    $region4: #{gnn_node_forward.9} parent=1 // loop_header_branch
      %24 = sbr.rel (%p22) target = $region8
    $region5: #{gnn_node_forward.9} parent=1 // loop_body
      %s26 = ssub.s32 %s21, 1
      %s27 = ssub.s32 %s21, 2
      %s34 = sadd.s32 1, %s29
      %p35 = scmp.ge.s32.totalorder %s34, 3
      %s36 = scalar_select %p35, 0, %s34
      %s37 = sadd.s32 1, %s28
      %s38 = scalar_select %p35, %s37, %s28
      %p39 = scmp.ge.s32.totalorder %s38, 2
      %s40 = scalar_select %p39, 0, %s38
      %s41 = ssub.s32 %s29, %s36
      %s42 = ssub.s32 %s28, %s40
      %s43 = sor.u32 %s41, %s42
      %p44 = scmp.eq.s32.totalorder %s43, 0
      %s46 = sadd.s32 %s45, 1
      %s47 = scalar_select %p44, %s45, %s46
      %p50 = pneg %p44
      %p51 = scmp.eq.s32.totalorder %s21, 5
      %p52 = por %p50, %p51
      %p53 = scmp.ne.s32.totalorder %s45, %s48
      %p54 = scmp.eq.s32.totalorder %s21, 0
      %p55 = por %p53, %p54
      %p56 = scmp.ne.s32.totalorder %s45, %s48
      %p57 = scmp.eq.s32.totalorder %s26, 5
      %p58 = por %p56, %p57
      %p59 = scmp.ne.s32.totalorder %s48, %s49
      %p60 = scmp.eq.s32.totalorder %s26, 0
      %p61 = por %p59, %p60
      %p62 = scmp.ne.s32.totalorder %s48, %s49
      %p63 = scmp.eq.s32.totalorder %s27, 5
      %p64 = por %p62, %p63
      %p66 = scmp.ne.s32.totalorder %s49, %s65
      %p67 = scmp.eq.s32.totalorder %s27, 0
      %p68 = por %p66, %p67
      %s69 = ssub.s32 %s29, %s36
      %p70 = scmp.eq.s32.totalorder %s69, 0
      %s72 = sadd.s32 %s71, 1
      %s73 = scalar_select %p70, %s71, %s72
      %p76 = pneg %p70
      %p77 = scmp.eq.s32.totalorder %s21, 5
      %p78 = por %p76, %p77
      %p79 = scmp.ne.s32.totalorder %s71, %s74
      %p80 = scmp.eq.s32.totalorder %s21, 0
      %p81 = por %p79, %p80
      %p82 = scmp.ne.s32.totalorder %s71, %s74
      %p83 = scmp.eq.s32.totalorder %s26, 5
      %p84 = por %p82, %p83
      %p85 = scmp.ne.s32.totalorder %s74, %s75
      %p86 = scmp.eq.s32.totalorder %s26, 0
      %p87 = por %p85, %p86
      %p88 = scmp.ne.s32.totalorder %s74, %s75
      %p89 = scmp.eq.s32.totalorder %s27, 5
      %p90 = por %p88, %p89
      %p92 = scmp.ne.s32.totalorder %s75, %s91
      %p93 = scmp.eq.s32.totalorder %s27, 0
      %p94 = por %p92, %p93
      %s96 = sadd.s32 %s95, 1
      %p99 = scmp.eq.s32.totalorder %s21, 5
      %p100 = scmp.ne.s32.totalorder %s95, %s97
      %p101 = scmp.eq.s32.totalorder %s21, 0
      %p102 = por %p100, %p101
      %p103 = scmp.ne.s32.totalorder %s95, %s97
      %p104 = scmp.eq.s32.totalorder %s26, 5
      %p105 = por %p103, %p104
      %p106 = scmp.ne.s32.totalorder %s97, %s98
      %p107 = scmp.eq.s32.totalorder %s26, 0
      %p108 = por %p106, %p107
      %p109 = scmp.ne.s32.totalorder %s97, %s98
      %p110 = scmp.eq.s32.totalorder %s27, 5
      %p111 = por %p109, %p110
      %p113 = scmp.ne.s32.totalorder %s98, %s112
      %p114 = scmp.eq.s32.totalorder %s27, 0
      %p115 = por %p113, %p114
      %s117 = sadd.s32 %s116, 1
      %p120 = scmp.eq.s32.totalorder %s21, 5
      %p121 = scmp.ne.s32.totalorder %s116, %s118
      %p122 = scmp.eq.s32.totalorder %s21, 0
      %p123 = por %p121, %p122
      %p124 = scmp.ne.s32.totalorder %s116, %s118
      %p125 = scmp.eq.s32.totalorder %s26, 5
      %p126 = por %p124, %p125
      %p127 = scmp.ne.s32.totalorder %s118, %s119
      %p128 = scmp.eq.s32.totalorder %s26, 0
      %p129 = por %p127, %p128
      %p130 = scmp.ne.s32.totalorder %s118, %s119
      %p131 = scmp.eq.s32.totalorder %s27, 5
      %p132 = por %p130, %p131
      %p134 = scmp.ne.s32.totalorder %s119, %s133
      %p135 = scmp.eq.s32.totalorder %s27, 0
      %p136 = por %p134, %p135
      %s138 = sadd.s32 %s137, 1
      %p141 = scmp.eq.s32.totalorder %s21, 5
      %p142 = scmp.ne.s32.totalorder %s137, %s139
      %p143 = scmp.eq.s32.totalorder %s21, 0
      %p144 = por %p142, %p143
      %p145 = scmp.ne.s32.totalorder %s137, %s139
      %p146 = scmp.eq.s32.totalorder %s26, 5
      %p147 = por %p145, %p146
      %p148 = scmp.ne.s32.totalorder %s139, %s140
      %p149 = scmp.eq.s32.totalorder %s26, 0
      %p150 = por %p148, %p149
      %p151 = scmp.ne.s32.totalorder %s139, %s140
      %p152 = scmp.eq.s32.totalorder %s27, 5
      %p153 = por %p151, %p152
      %p155 = scmp.ne.s32.totalorder %s140, %s154
      %p156 = scmp.eq.s32.totalorder %s27, 0
      %p157 = por %p155, %p156
      %s158 = ssub.s32 %s28, %s40
      %p159 = scmp.eq.s32.totalorder %s158, 0
      %s161 = sadd.s32 %s160, 1
      %s162 = scalar_select %p159, %s160, %s161
      %p165 = pneg %p159
      %p166 = scmp.eq.s32.totalorder %s21, 5
      %p167 = por %p165, %p166
      %p168 = scmp.ne.s32.totalorder %s160, %s163
      %p169 = scmp.eq.s32.totalorder %s21, 0
      %p170 = por %p168, %p169
      %p171 = scmp.ne.s32.totalorder %s160, %s163
      %p172 = scmp.eq.s32.totalorder %s26, 5
      %p173 = por %p171, %p172
      %p174 = scmp.ne.s32.totalorder %s163, %s164
      %p175 = scmp.eq.s32.totalorder %s26, 0
      %p176 = por %p174, %p175
      %p177 = scmp.ne.s32.totalorder %s163, %s164
      %p178 = scmp.eq.s32.totalorder %s27, 5
      %p179 = por %p177, %p178
      %p181 = scmp.ne.s32.totalorder %s164, %s180
      %p182 = scmp.eq.s32.totalorder %s27, 0
      %p183 = por %p181, %p182
      %p184 = scmp.le.s32.totalorder 1, %s21
      %p185 = scmp.lt.s32.totalorder %s21, 7
      %p186 = pnand %p184, %p185
      %p187 = pneg %p186
      // Predicated region
      $region9: #{gnn_node_forward.9} parent=5 // pred_check
        _
      $region10: #{gnn_node_forward.9} parent=5 // pred_check_branch
        %189 = sbr.rel (%p186) target = $region12
      $region11: #{gnn_node_forward.9} parent=5 // pred_region
        %s190 = ssub.s32 %s21, 1
        // Predicated region
        $region13: #{gnn_node_forward.9} parent=11 // pred_check
          %p191 = pneg %p108
        $region14: #{gnn_node_forward.9} parent=11 // pred_check_branch
          %193 = sbr.rel (%p191) target = $region16
        $region15: #{gnn_node_forward.9} parent=11 // pred_region
          %s195 = ssub.s32 16, 16
          %196 = vsyncadd [#allocation7], %s195
          %s198 = sshll.u32 [#allocation8], 4
          %s199 = int_to_ptr.vmem [resolvable:$true] %s198
          %201 = dma.hbm_to_vmem [thread:$0]  %s2, 16, %s199, [#allocation7]
        $region16: #{gnn_node_forward.9} parent=11 // pred_fallthru
          _
        // Predicated region
        $region17: #{gnn_node_forward.9} parent=11 // pred_check
          %p202 = pneg %p129
        $region18: #{gnn_node_forward.9} parent=11 // pred_check_branch
          %204 = sbr.rel (%p202) target = $region20
        $region19: #{gnn_node_forward.9} parent=11 // pred_region
          %s206 = ssub.s32 1024, 1024
          %207 = vsyncadd [#allocation10], %s206
          %s208 = sshll.u32 [#allocation9], 4
          %s209 = int_to_ptr.vmem [resolvable:$true] %s208
          %214 = dma.hbm_to_vmem [thread:$0]  %s3, 1024, %s209, [#allocation10], 64, 64, 4
        $region20: #{gnn_node_forward.9} parent=11 // pred_fallthru
          _
        // Predicated region
        $region21: #{gnn_node_forward.9} parent=11 // pred_check
          %p215 = pneg %p150
        $region22: #{gnn_node_forward.9} parent=11 // pred_check_branch
          %217 = sbr.rel (%p215) target = $region24
        $region23: #{gnn_node_forward.9} parent=11 // pred_region
          %s219 = ssub.s32 16, 16
          %220 = vsyncadd [#allocation10], %s219
          %s222 = sshll.u32 [#allocation11], 4
          %s223 = int_to_ptr.vmem [resolvable:$true] %s222
          %225 = dma.hbm_to_vmem [thread:$0]  %s4, 16, %s223, [#allocation10]
        $region24: #{gnn_node_forward.9} parent=11 // pred_fallthru
          _
      $region12: #{gnn_node_forward.9} parent=5 // pred_fallthru
        _
      %p226 = scmp.lt.s32.totalorder %s21, 6
      // Predicated region
      $region25: #{gnn_node_forward.9} parent=5 // pred_check
        %p227 = pneg %p226
      $region26: #{gnn_node_forward.9} parent=5 // pred_check_branch
        %229 = sbr.rel (%p227) target = $region28
      $region27: #{gnn_node_forward.9} parent=5 // pred_region
        // Predicated region
        $region29: #{gnn_node_forward.9} parent=27 // pred_check
          %p230 = pneg %p55
        $region30: #{gnn_node_forward.9} parent=27 // pred_check_branch
          %232 = sbr.rel (%p230) target = $region32
        $region31: #{gnn_node_forward.9} parent=27 // pred_region
          %s233 = sand.u32 %s45, 1
          %s234 = scalar_lea.sflag [#allocation4], %s233
          %s235 = sand.u32 %s45, 1
          %s236 = smul.addr %s235, 32
          %s237 = scalar_lea.vmem [#allocation3], %s236
          %s238 = smul.u32 8, %s28
          %s240 = ssub.s32 512, 512
          %241 = vsyncadd %s234, %s240
          %s242 = smul.addr %s29, 16
          %s243 = sadd.s32 %s238, %s242
          %s244 = smul.addr %s243, 64
          %s245 = scalar_lea.hbm %s0, %s244
          %s246 = sshll.u32 %s237, 4
          %s247 = int_to_ptr.vmem [resolvable:$true] %s246
          %252 = dma.hbm_to_vmem [thread:$0]  %s245, 512, %s247, %s234, 64, 64, 4
        $region32: #{gnn_node_forward.9} parent=27 // pred_fallthru
          _
        // Predicated region
        $region33: #{gnn_node_forward.9} parent=27 // pred_check
          %p253 = pneg %p81
        $region34: #{gnn_node_forward.9} parent=27 // pred_check_branch
          %255 = sbr.rel (%p253) target = $region36
        $region35: #{gnn_node_forward.9} parent=27 // pred_region
          %s256 = sand.u32 %s21, 1
          %s257 = scalar_lea.sflag [#allocation7], %s256
          %s258 = sand.u32 %s71, 1
          %s259 = smul.addr %s258, 64
          %s260 = scalar_lea.vmem [#allocation6], %s259
          %s262 = ssub.s32 1024, 1024
          %263 = vsyncadd %s257, %s262
          %s264 = smul.addr %s29, 16
          %s265 = smul.addr %s264, 64
          %s266 = scalar_lea.hbm %s1, %s265
          %s267 = sshll.u32 %s260, 4
          %s268 = int_to_ptr.vmem [resolvable:$true] %s267
          %273 = dma.hbm_to_vmem [thread:$0]  %s266, 1024, %s268, %s257, 64, 64, 4
        $region36: #{gnn_node_forward.9} parent=27 // pred_fallthru
          _
      $region28: #{gnn_node_forward.9} parent=5 // pred_fallthru
        _
      %p274 = scmp.le.s32.totalorder 1, %s21
      %p275 = scmp.lt.s32.totalorder %s21, 7
      %p276 = pnand %p274, %p275
      %p277 = pneg %p276
      // Predicated region
      $region37: #{gnn_node_forward.9} parent=5 // pred_check
        _
      $region38: #{gnn_node_forward.9} parent=5 // pred_check_branch
        %279 = sbr.rel (%p276) target = $region40
      $region39: #{gnn_node_forward.9} parent=5 // pred_region
        %s280 = ssub.s32 %s21, 1
        %s281 = sand.u32 %s48, 1
        %s282 = scalar_lea.sflag [#allocation4], %s281
        %s283 = sand.u32 %s48, 1
        %s284 = smul.addr %s283, 32
        %s285 = scalar_lea.vmem [#allocation3], %s284
        // Predicated region
        $region41: #{gnn_node_forward.9} parent=39 // pred_check
          %p286 = pneg %p61
        $region42: #{gnn_node_forward.9} parent=39 // pred_check_branch
          %288 = sbr.rel (%p286) target = $region44
        $region43: #{gnn_node_forward.9} parent=39 // pred_region
          %289 = dma.done %s282, 512
        $region44: #{gnn_node_forward.9} parent=39 // pred_fallthru
          _
        %s290 = sand.u32 %s26, 1
        %s291 = scalar_lea.sflag [#allocation7], %s290
        %s292 = sand.u32 %s74, 1
        %s293 = smul.addr %s292, 64
        %s294 = scalar_lea.vmem [#allocation6], %s293
        // Predicated region
        $region45: #{gnn_node_forward.9} parent=39 // pred_check
          %p295 = pneg %p87
        $region46: #{gnn_node_forward.9} parent=39 // pred_check_branch
          %297 = sbr.rel (%p295) target = $region48
        $region47: #{gnn_node_forward.9} parent=39 // pred_region
          %298 = dma.done %s291, 1024
        $region48: #{gnn_node_forward.9} parent=39 // pred_fallthru
          _
        // Predicated region
        $region49: #{gnn_node_forward.9} parent=39 // pred_check
          %p299 = pneg %p108
        $region50: #{gnn_node_forward.9} parent=39 // pred_check_branch
          %301 = sbr.rel (%p299) target = $region52
        $region51: #{gnn_node_forward.9} parent=39 // pred_region
          %302 = dma.done [#allocation7], 16
        $region52: #{gnn_node_forward.9} parent=39 // pred_fallthru
          _
        // Predicated region
        $region53: #{gnn_node_forward.9} parent=39 // pred_check
          %p303 = pneg %p129
        $region54: #{gnn_node_forward.9} parent=39 // pred_check_branch
          %305 = sbr.rel (%p303) target = $region56
        $region55: #{gnn_node_forward.9} parent=39 // pred_region
          %306 = dma.done [#allocation10], 1024
        $region56: #{gnn_node_forward.9} parent=39 // pred_fallthru
          _
        // Predicated region
        $region57: #{gnn_node_forward.9} parent=39 // pred_check
          %p307 = pneg %p150
        $region58: #{gnn_node_forward.9} parent=39 // pred_check_branch
          %309 = sbr.rel (%p307) target = $region60
        $region59: #{gnn_node_forward.9} parent=39 // pred_region
          %310 = dma.done [#allocation10], 16
        $region60: #{gnn_node_forward.9} parent=39 // pred_fallthru
          _
        %s311 = sand.u32 %s48, 1
        %s312 = scalar_lea.sflag [#allocation4], %s311
        %s313 = sand.u32 %s48, 1
        %s314 = smul.addr %s313, 32
        %s315 = scalar_lea.vmem [#allocation3], %s314
        %p316 = pneg %p61
        %p317 = pneg %p58
        %s318 = sand.u32 %s26, 1
        %s319 = scalar_lea.sflag [#allocation7], %s318
        %s320 = sand.u32 %s74, 1
        %s321 = smul.addr %s320, 64
        %s322 = scalar_lea.vmem [#allocation6], %s321
        %p323 = pneg %p87
        %p324 = pneg %p84
        %p325 = pneg %p108
        %p326 = pneg %p105
        %p327 = pneg %p129
        %p328 = pneg %p126
        %p329 = pneg %p150
        %p330 = pneg %p147
        %p331 = pneg %p176
        %p332 = pneg %p173
        %s333 = sand.u32 %s163, 1
        %s334 = scalar_lea.sflag [#allocation5], %s333
        %s335 = sand.u32 %s163, 1
        %s336 = smul.addr %s335, 64
        %s337 = scalar_lea.vmem [#allocation12], %s336
        %s338 = smul.u32 8, %s30
        %s339 = smul.u32 8, %s30
        %p341 = scmp.eq.s32.totalorder %s31, 0
        // Predicated region
        $region61: #{gnn_node_forward.9} parent=39 // pred_check
          %p342 = pneg %p341
        $region62: #{gnn_node_forward.9} parent=39 // pred_check_branch
          %344 = sbr.rel (%p342) target = $region64
        $region63: #{gnn_node_forward.9} parent=39 // pred_region
          %345 = vst [vmem:[#allocation2] sm:$0xff] 0.0
          %346 = vst [vmem:[#allocation2 + $0x8] sm:$0xff] 0.0
          %347 = vst [vmem:[#allocation2 + $0x10] sm:$0xff] 0.0
          %348 = vst [vmem:[#allocation2 + $0x18] sm:$0xff] 0.0
          %349 = vst [vmem:[#allocation2 + $0x20] sm:$0xff] 0.0
          %350 = vst [vmem:[#allocation2 + $0x28] sm:$0xff] 0.0
          %351 = vst [vmem:[#allocation2 + $0x30] sm:$0xff] 0.0
          %352 = vst [vmem:[#allocation2 + $0x38] sm:$0xff] 0.0
        $region64: #{gnn_node_forward.9} parent=39 // pred_fallthru
          _
        %v353 = vld [vmem:[#allocation2] sm:$0xff]
        %v354 = vld [vmem:[#allocation2 + $0x8] sm:$0xff]
        %v355 = vld [vmem:[#allocation2 + $0x10] sm:$0xff]
        %v356 = vld [vmem:[#allocation2 + $0x18] sm:$0xff]
        %v357 = vld [vmem:[#allocation2 + $0x20] sm:$0xff]
        %v358 = vld [vmem:[#allocation2 + $0x28] sm:$0xff]
        %v359 = vld [vmem:[#allocation2 + $0x30] sm:$0xff]
        %v360 = vld [vmem:[#allocation2 + $0x38] sm:$0xff]
        %v361 = vld [vmem:[%s285] sm:$0xf]
        %v362 = vld [vmem:[%s285 + $0x4] sm:$0xf]
        %v363 = vld [vmem:[%s285 + $0x8] sm:$0xf]
        %v364 = vld [vmem:[%s285 + $0xc] sm:$0xf]
        %v365 = vld [vmem:[%s285 + $0x10] sm:$0xf]
        %v366 = vld [vmem:[%s285 + $0x14] sm:$0xf]
        %v367 = vld [vmem:[%s285 + $0x18] sm:$0xf]
        %v368 = vld [vmem:[%s285 + $0x1c] sm:$0xf]
        %v369 = vld [vmem:[%s294] sm:$0xf]
        %v370 = vld [vmem:[%s294 + $0x4] sm:$0xf]
        %v371 = vld [vmem:[%s294 + $0x8] sm:$0xf]
        %v372 = vld [vmem:[%s294 + $0xc] sm:$0xf]
        %v373 = vld [vmem:[%s294 + $0x10] sm:$0xf]
        %v374 = vld [vmem:[%s294 + $0x14] sm:$0xf]
        %v375 = vld [vmem:[%s294 + $0x18] sm:$0xf]
        %v376 = vld [vmem:[%s294 + $0x1c] sm:$0xf]
        %v377 = vld [vmem:[%s294 + $0x20] sm:$0xf]
        %v378 = vld [vmem:[%s294 + $0x24] sm:$0xf]
        %v379 = vld [vmem:[%s294 + $0x28] sm:$0xf]
        %v380 = vld [vmem:[%s294 + $0x2c] sm:$0xf]
        %v381 = vld [vmem:[%s294 + $0x30] sm:$0xf]
        %v382 = vld [vmem:[%s294 + $0x34] sm:$0xf]
        %v383 = vld [vmem:[%s294 + $0x38] sm:$0xf]
        %v384 = vld [vmem:[%s294 + $0x3c] sm:$0xf]
        %v393 = vunpack.c.l.b16 %v361
        %v394 = vunpack.c.l.b16 %v362
        %v395 = vunpack.c.l.b16 %v363
        %v396 = vunpack.c.l.b16 %v364
        %v397 = vunpack.c.l.b16 %v365
        %v398 = vunpack.c.l.b16 %v366
        %v399 = vunpack.c.l.b16 %v367
        %v400 = vunpack.c.l.b16 %v368
        %v401 = vpack.c.b16 %v394, %v393
        %v402 = vpack.c.b16 %v396, %v395
        %v403 = vpack.c.b16 %v398, %v397
        %v404 = vpack.c.b16 %v400, %v399
        %v425 = vunpack.c.l.b16 %v369
        %v426 = vunpack.c.l.b16 %v370
        %v427 = vunpack.c.l.b16 %v371
        %v428 = vunpack.c.l.b16 %v372
        %v429 = vunpack.c.l.b16 %v373
        %v430 = vunpack.c.l.b16 %v374
        %v431 = vunpack.c.l.b16 %v375
        %v432 = vunpack.c.l.b16 %v376
        %v433 = vunpack.c.l.b16 %v377
        %v434 = vunpack.c.l.b16 %v378
        %v435 = vunpack.c.l.b16 %v379
        %v436 = vunpack.c.l.b16 %v380
        %v437 = vunpack.c.l.b16 %v381
        %v438 = vunpack.c.l.b16 %v382
        %v439 = vunpack.c.l.b16 %v383
        %v440 = vunpack.c.l.b16 %v384
        %v441 = vpack.c.b16 %v426, %v425
        %v442 = vpack.c.b16 %v428, %v427
        %v443 = vpack.c.b16 %v430, %v429
        %v444 = vpack.c.b16 %v432, %v431
        %v445 = vpack.c.b16 %v434, %v433
        %v446 = vpack.c.b16 %v436, %v435
        %v447 = vpack.c.b16 %v438, %v437
        %v448 = vpack.c.b16 %v440, %v439
        %457 = vmatprep.subr.bf16.mxu0 0
        %458 = vmatpush1.bf16.msra.mxu0 %v441
        %459 = vmatprep.subr.bf16.mxu0 0
        %460 = vmatpush1.bf16.msra.mxu0 %v442
        %461 = vmatprep.subr.bf16.mxu0 0
        %462 = vmatpush1.bf16.msra.mxu0 %v443
        %463 = vmatprep.subr.bf16.mxu0 0
        %464 = vmatpush1.bf16.msra.mxu0 %v444
        %465 = vmatprep.subr.bf16.mxu0 0
        %466 = vmatpush1.bf16.msra.mxu0 %v445
        %467 = vmatprep.subr.bf16.mxu0 0
        %468 = vmatpush1.bf16.msra.mxu0 %v446
        %469 = vmatprep.subr.bf16.mxu0 0
        %470 = vmatpush1.bf16.msra.mxu0 %v447
        %471 = vmatprep.subr.bf16.mxu0 0
        %472 = vmatpush1.bf16.msra.mxu0 %v448
        %473 = vmatprep.subr.bf16.mxu0 0
        %474 = vmatpush1.bf16.msra.mxu0 0
        %475 = vmatprep.subr.bf16.mxu0 0
        %476 = vmatpush1.bf16.msra.mxu0 0
        %477 = vmatprep.subr.bf16.mxu0 0
        %478 = vmatpush1.bf16.msra.mxu0 0
        %479 = vmatprep.subr.bf16.mxu0 0
        %480 = vmatpush1.bf16.msra.mxu0 0
        %481 = vmatprep.subr.bf16.mxu0 0
        %482 = vmatpush1.bf16.msra.mxu0 0
        %483 = vmatprep.subr.bf16.mxu0 0
        %484 = vmatpush1.bf16.msra.mxu0 0
        %485 = vmatprep.subr.bf16.mxu0 0
        %486 = vmatpush1.bf16.msra.mxu0 0
        %487 = vmatprep.subr.bf16.mxu0 0
        %488 = vmatpush1.bf16.msra.mxu0 0
        %489 = vmatprep.mubr.bf16.mxu0 0
        %490 = vmatmul.mubr.bf16.gmra.mrb[0].mxu0 %v401
        %v491 = vpop.f32.mrb[0].mxu0
        %v492 = vadd.f32 0.0, %v491
        %v493 = vpop.f32.mrb[0].mxu0
        %v494 = vpop.f32.mrb[0].mxu0
        %v495 = vadd.f32 0.0, %v494
        %v496 = vpop.f32.mrb[0].mxu0
        %497 = vmatprep.mubr.bf16.mxu0 0
        %498 = vmatmul.mubr.bf16.gmra.mrb[0].mxu0 %v402
        %v499 = vpop.f32.mrb[0].mxu0
        %v500 = vadd.f32 0.0, %v499
        %v501 = vpop.f32.mrb[0].mxu0
        %v502 = vpop.f32.mrb[0].mxu0
        %v503 = vadd.f32 0.0, %v502
        %v504 = vpop.f32.mrb[0].mxu0
        %505 = vmatprep.mubr.bf16.mxu0 0
        %506 = vmatmul.mubr.bf16.gmra.mrb[0].mxu0 %v403
        %v507 = vpop.f32.mrb[0].mxu0
        %v508 = vadd.f32 0.0, %v507
        %v509 = vpop.f32.mrb[0].mxu0
        %v510 = vpop.f32.mrb[0].mxu0
        %v511 = vadd.f32 0.0, %v510
        %v512 = vpop.f32.mrb[0].mxu0
        %513 = vmatprep.mubr.bf16.mxu0 0
        %514 = vmatmul.mubr.bf16.gmra.mrb[0].mxu0 %v404
        %v515 = vpop.f32.mrb[0].mxu0
        %v516 = vadd.f32 0.0, %v515
        %v517 = vpop.f32.mrb[0].mxu0
        %v518 = vpop.f32.mrb[0].mxu0
        %v519 = vadd.f32 0.0, %v518
        %v520 = vpop.f32.mrb[0].mxu0
        %521 = vdwg.mxu0
        %v522 = vadd.f32 %v353, %v492
        %v523 = vadd.f32 %v354, %v495
        %v524 = vadd.f32 %v355, %v500
        %v525 = vadd.f32 %v356, %v503
        %v526 = vadd.f32 %v357, %v508
        %v527 = vadd.f32 %v358, %v511
        %v528 = vadd.f32 %v359, %v516
        %v529 = vadd.f32 %v360, %v519
        %530 = vst [vmem:[#allocation2] sm:$0xff] %v522
        %531 = vst [vmem:[#allocation2 + $0x8] sm:$0xff] %v523
        %532 = vst [vmem:[#allocation2 + $0x10] sm:$0xff] %v524
        %533 = vst [vmem:[#allocation2 + $0x18] sm:$0xff] %v525
        %534 = vst [vmem:[#allocation2 + $0x20] sm:$0xff] %v526
        %535 = vst [vmem:[#allocation2 + $0x28] sm:$0xff] %v527
        %536 = vst [vmem:[#allocation2 + $0x30] sm:$0xff] %v528
        %537 = vst [vmem:[#allocation2 + $0x38] sm:$0xff] %v529
        %p538 = scmp.eq.s32.totalorder %s31, 2
        // Predicated region
        $region65: #{gnn_node_forward.9} parent=39 // pred_check
          %p539 = pneg %p538
        $region66: #{gnn_node_forward.9} parent=39 // pred_check_branch
          %541 = sbr.rel (%p539) target = $region68
        $region67: #{gnn_node_forward.9} parent=39 // pred_region
          %v542 = vld [vmem:[#allocation2] sm:$0xff]
          %v543 = vld [vmem:[#allocation2 + $0x8] sm:$0xff]
          %v544 = vld [vmem:[#allocation2 + $0x10] sm:$0xff]
          %v545 = vld [vmem:[#allocation2 + $0x18] sm:$0xff]
          %v546 = vld [vmem:[#allocation2 + $0x20] sm:$0xff]
          %v547 = vld [vmem:[#allocation2 + $0x28] sm:$0xff]
          %v548 = vld [vmem:[#allocation2 + $0x30] sm:$0xff]
          %v549 = vld [vmem:[#allocation2 + $0x38] sm:$0xff]
          %v550 = vld [vmem:[#allocation8] sm:$0x1]
          %v552 = vlaneseq
          %v553 = vshrl.u32 %v552, 7
          %v554 = vsub.s32 0, %v553
          %v555 = vrot.slane %v550, %v554
          %v557 = vadd.f32 %v542, %v555
          %v558 = vadd.f32 %v543, %v555
          %v559 = vadd.f32 %v544, %v555
          %v560 = vadd.f32 %v545, %v555
          %v561 = vadd.f32 %v546, %v555
          %v562 = vadd.f32 %v547, %v555
          %v563 = vadd.f32 %v548, %v555
          %v564 = vadd.f32 %v549, %v555
          %vm565 = vcmp.gt.f32.partialorder %v557, 0.0
          %vm566 = vcmp.gt.f32.partialorder %v558, 0.0
          %vm567 = vcmp.gt.f32.partialorder %v559, 0.0
          %vm568 = vcmp.gt.f32.partialorder %v560, 0.0
          %vm569 = vcmp.gt.f32.partialorder %v561, 0.0
          %vm570 = vcmp.gt.f32.partialorder %v562, 0.0
          %vm571 = vcmp.gt.f32.partialorder %v563, 0.0
          %vm572 = vcmp.gt.f32.partialorder %v564, 0.0
          %v573 = vmul.f32 %v557, 0.1
          %v574 = vmul.f32 %v558, 0.1
          %v575 = vmul.f32 %v559, 0.1
          %v576 = vmul.f32 %v560, 0.1
          %v577 = vmul.f32 %v561, 0.1
          %v578 = vmul.f32 %v562, 0.1
          %v579 = vmul.f32 %v563, 0.1
          %v580 = vmul.f32 %v564, 0.1
          %v581 = vsel %vm565, %v557, %v573
          %v582 = vsel %vm566, %v558, %v574
          %v583 = vsel %vm567, %v559, %v575
          %v584 = vsel %vm568, %v560, %v576
          %v585 = vsel %vm569, %v561, %v577
          %v586 = vsel %vm570, %v562, %v578
          %v587 = vsel %vm571, %v563, %v579
          %v588 = vsel %vm572, %v564, %v580
          %v589 = vld [vmem:[#allocation9] sm:$0xf]
          %v590 = vld [vmem:[#allocation9 + $0x4] sm:$0xf]
          %v591 = vld [vmem:[#allocation9 + $0x8] sm:$0xf]
          %v592 = vld [vmem:[#allocation9 + $0xc] sm:$0xf]
          %v593 = vld [vmem:[#allocation9 + $0x10] sm:$0xf]
          %v594 = vld [vmem:[#allocation9 + $0x14] sm:$0xf]
          %v595 = vld [vmem:[#allocation9 + $0x18] sm:$0xf]
          %v596 = vld [vmem:[#allocation9 + $0x1c] sm:$0xf]
          %v597 = vld [vmem:[#allocation9 + $0x20] sm:$0xf]
          %v598 = vld [vmem:[#allocation9 + $0x24] sm:$0xf]
          %v599 = vld [vmem:[#allocation9 + $0x28] sm:$0xf]
          %v600 = vld [vmem:[#allocation9 + $0x2c] sm:$0xf]
          %v601 = vld [vmem:[#allocation9 + $0x30] sm:$0xf]
          %v602 = vld [vmem:[#allocation9 + $0x34] sm:$0xf]
          %v603 = vld [vmem:[#allocation9 + $0x38] sm:$0xf]
          %v604 = vld [vmem:[#allocation9 + $0x3c] sm:$0xf]
          %v605 = vld [vmem:[#allocation11] sm:$0x1]
          %v606 = vpack.c.bf16 %v582, %v581
          %v607 = vpack.c.bf16 %v584, %v583
          %v608 = vpack.c.bf16 %v586, %v585
          %v609 = vpack.c.bf16 %v588, %v587
          %v611 = vlaneseq
          %v612 = vshrl.u32 %v611, 7
          %v613 = vsub.s32 0, %v612
          %v614 = vrot.slane %v605, %v613
          %v632 = vunpack.c.l.b16 %v589
          %v633 = vunpack.c.l.b16 %v590
          %v634 = vunpack.c.l.b16 %v591
          %v635 = vunpack.c.l.b16 %v592
          %v636 = vunpack.c.l.b16 %v593
          %v637 = vunpack.c.l.b16 %v594
          %v638 = vunpack.c.l.b16 %v595
          %v639 = vunpack.c.l.b16 %v596
          %v640 = vunpack.c.l.b16 %v597
          %v641 = vunpack.c.l.b16 %v598
          %v642 = vunpack.c.l.b16 %v599
          %v643 = vunpack.c.l.b16 %v600
          %v644 = vunpack.c.l.b16 %v601
          %v645 = vunpack.c.l.b16 %v602
          %v646 = vunpack.c.l.b16 %v603
          %v647 = vunpack.c.l.b16 %v604
          %v648 = vpack.c.b16 %v633, %v632
          %v649 = vpack.c.b16 %v635, %v634
          %v650 = vpack.c.b16 %v637, %v636
          %v651 = vpack.c.b16 %v639, %v638
          %v652 = vpack.c.b16 %v641, %v640
          %v653 = vpack.c.b16 %v643, %v642
          %v654 = vpack.c.b16 %v645, %v644
          %v655 = vpack.c.b16 %v647, %v646
          %664 = vmatprep.subr.bf16.mxu0 0
          %665 = vmatpush1.bf16.msra.mxu0 %v648
          %666 = vmatprep.subr.bf16.mxu0 0
          %667 = vmatpush1.bf16.msra.mxu0 %v649
          %668 = vmatprep.subr.bf16.mxu0 0
          %669 = vmatpush1.bf16.msra.mxu0 %v650
          %670 = vmatprep.subr.bf16.mxu0 0
          %671 = vmatpush1.bf16.msra.mxu0 %v651
          %672 = vmatprep.subr.bf16.mxu0 0
          %673 = vmatpush1.bf16.msra.mxu0 %v652
          %674 = vmatprep.subr.bf16.mxu0 0
          %675 = vmatpush1.bf16.msra.mxu0 %v653
          %676 = vmatprep.subr.bf16.mxu0 0
          %677 = vmatpush1.bf16.msra.mxu0 %v654
          %678 = vmatprep.subr.bf16.mxu0 0
          %679 = vmatpush1.bf16.msra.mxu0 %v655
          %680 = vmatprep.subr.bf16.mxu0 0
          %681 = vmatpush1.bf16.msra.mxu0 0
          %682 = vmatprep.subr.bf16.mxu0 0
          %683 = vmatpush1.bf16.msra.mxu0 0
          %684 = vmatprep.subr.bf16.mxu0 0
          %685 = vmatpush1.bf16.msra.mxu0 0
          %686 = vmatprep.subr.bf16.mxu0 0
          %687 = vmatpush1.bf16.msra.mxu0 0
          %688 = vmatprep.subr.bf16.mxu0 0
          %689 = vmatpush1.bf16.msra.mxu0 0
          %690 = vmatprep.subr.bf16.mxu0 0
          %691 = vmatpush1.bf16.msra.mxu0 0
          %692 = vmatprep.subr.bf16.mxu0 0
          %693 = vmatpush1.bf16.msra.mxu0 0
          %694 = vmatprep.subr.bf16.mxu0 0
          %695 = vmatpush1.bf16.msra.mxu0 0
          %696 = vmatprep.mubr.bf16.mxu0 0
          %697 = vmatmul.mubr.bf16.gmra.mrb[0].mxu0 %v606
          %v698 = vpop.f32.mrb[0].mxu0
          %v699 = vadd.f32 %v614, %v698
          %v700 = vpop.f32.mrb[0].mxu0
          %v701 = vpop.f32.mrb[0].mxu0
          %v702 = vadd.f32 %v614, %v701
          %v703 = vpop.f32.mrb[0].mxu0
          %704 = vmatprep.mubr.bf16.mxu0 0
          %705 = vmatmul.mubr.bf16.gmra.mrb[0].mxu0 %v607
          %v706 = vpop.f32.mrb[0].mxu0
          %v707 = vadd.f32 %v614, %v706
          %v708 = vpop.f32.mrb[0].mxu0
          %v709 = vpop.f32.mrb[0].mxu0
          %v710 = vadd.f32 %v614, %v709
          %v711 = vpop.f32.mrb[0].mxu0
          %712 = vmatprep.mubr.bf16.mxu0 0
          %713 = vmatmul.mubr.bf16.gmra.mrb[0].mxu0 %v608
          %v714 = vpop.f32.mrb[0].mxu0
          %v715 = vadd.f32 %v614, %v714
          %v716 = vpop.f32.mrb[0].mxu0
          %v717 = vpop.f32.mrb[0].mxu0
          %v718 = vadd.f32 %v614, %v717
          %v719 = vpop.f32.mrb[0].mxu0
          %720 = vmatprep.mubr.bf16.mxu0 0
          %721 = vmatmul.mubr.bf16.gmra.mrb[0].mxu0 %v609
          %v722 = vpop.f32.mrb[0].mxu0
          %v723 = vadd.f32 %v614, %v722
          %v724 = vpop.f32.mrb[0].mxu0
          %v725 = vpop.f32.mrb[0].mxu0
          %v726 = vadd.f32 %v614, %v725
          %v727 = vpop.f32.mrb[0].mxu0
          %728 = vdwg.mxu0
          %vm729 = vcmp.gt.f32.partialorder %v699, 0.0
          %vm730 = vcmp.gt.f32.partialorder %v702, 0.0
          %vm731 = vcmp.gt.f32.partialorder %v707, 0.0
          %vm732 = vcmp.gt.f32.partialorder %v710, 0.0
          %vm733 = vcmp.gt.f32.partialorder %v715, 0.0
          %vm734 = vcmp.gt.f32.partialorder %v718, 0.0
          %vm735 = vcmp.gt.f32.partialorder %v723, 0.0
          %vm736 = vcmp.gt.f32.partialorder %v726, 0.0
          %v737 = vmul.f32 %v699, 0.1
          %v738 = vmul.f32 %v702, 0.1
          %v739 = vmul.f32 %v707, 0.1
          %v740 = vmul.f32 %v710, 0.1
          %v741 = vmul.f32 %v715, 0.1
          %v742 = vmul.f32 %v718, 0.1
          %v743 = vmul.f32 %v723, 0.1
          %v744 = vmul.f32 %v726, 0.1
          %v745 = vsel %vm729, %v699, %v737
          %v746 = vsel %vm730, %v702, %v738
          %v747 = vsel %vm731, %v707, %v739
          %v748 = vsel %vm732, %v710, %v740
          %v749 = vsel %vm733, %v715, %v741
          %v750 = vsel %vm734, %v718, %v742
          %v751 = vsel %vm735, %v723, %v743
          %v752 = vsel %vm736, %v726, %v744
          %v753 = vand.u32 2147483647, %v745
          %v754 = vand.u32 2147483647, %v746
          %v755 = vand.u32 2147483647, %v747
          %v756 = vand.u32 2147483647, %v748
          %v757 = vand.u32 2147483647, %v749
          %v758 = vand.u32 2147483647, %v750
          %v759 = vand.u32 2147483647, %v751
          %v760 = vand.u32 2147483647, %v752
          %761 = vst [vmem:[%s337] sm:$0xff] %v753
          %762 = vst [vmem:[%s337 + $0x8] sm:$0xff] %v754
          %763 = vst [vmem:[%s337 + $0x10] sm:$0xff] %v755
          %764 = vst [vmem:[%s337 + $0x18] sm:$0xff] %v756
          %765 = vst [vmem:[%s337 + $0x20] sm:$0xff] %v757
          %766 = vst [vmem:[%s337 + $0x28] sm:$0xff] %v758
          %767 = vst [vmem:[%s337 + $0x30] sm:$0xff] %v759
          %768 = vst [vmem:[%s337 + $0x38] sm:$0xff] %v760
        $region68: #{gnn_node_forward.9} parent=39 // pred_fallthru
          _
        %s769 = sand.u32 %s163, 1
        %s770 = scalar_lea.sflag [#allocation5], %s769
        %s771 = sand.u32 %s163, 1
        %s772 = smul.addr %s771, 64
        %s773 = scalar_lea.vmem [#allocation12], %s772
        // Predicated region
        $region69: #{gnn_node_forward.9} parent=39 // pred_check
          %p774 = pneg %p173
        $region70: #{gnn_node_forward.9} parent=39 // pred_check_branch
          %776 = sbr.rel (%p774) target = $region72
        $region71: #{gnn_node_forward.9} parent=39 // pred_region
          %s777 = smul.u32 8, %s30
          %s779 = ssub.s32 1024, 1024
          %780 = vsyncadd %s770, %s779
          %s781 = smul.addr %s777, 128
          %s782 = scalar_lea.hbm %s5, %s781
          %s783 = sshll.u32 %s773, 4
          %s784 = int_to_ptr.vmem [resolvable:$true] %s783
          %789 = dma.vmem_to_hbm [thread:$0]  %s784, 1024, %s782, %s770, 128, 128, 8
        $region72: #{gnn_node_forward.9} parent=39 // pred_fallthru
          _
      $region40: #{gnn_node_forward.9} parent=5 // pred_fallthru
        _
      %p790 = scmp.le.s32.totalorder 2, %s21
      // Predicated region
      $region73: #{gnn_node_forward.9} parent=5 // pred_check
        %p791 = pneg %p790
      $region74: #{gnn_node_forward.9} parent=5 // pred_check_branch
        %793 = sbr.rel (%p791) target = $region76
      $region75: #{gnn_node_forward.9} parent=5 // pred_region
        %s794 = ssub.s32 %s21, 2
        // Predicated region
        $region77: #{gnn_node_forward.9} parent=75 // pred_check
          %p795 = pneg %p179
        $region78: #{gnn_node_forward.9} parent=75 // pred_check_branch
          %797 = sbr.rel (%p795) target = $region80
        $region79: #{gnn_node_forward.9} parent=75 // pred_region
          %s798 = sand.u32 %s164, 1
          %s799 = scalar_lea.sflag [#allocation5], %s798
          %s800 = sand.u32 %s164, 1
          %s801 = smul.addr %s800, 64
          %s802 = scalar_lea.vmem [#allocation12], %s801
          %803 = dma.done %s799, 1024
        $region80: #{gnn_node_forward.9} parent=75 // pred_fallthru
          _
      $region76: #{gnn_node_forward.9} parent=5 // pred_fallthru
        _
    $region6: #{gnn_node_forward.9} parent=1 // loop_footer
      %s25 = sadd.s32 1, %s21
    $region7: #{gnn_node_forward.9} parent=1 // loop_footer_branch
      %20 = sbr.rel target = $region3
    $region8: #{gnn_node_forward.9} parent=1 // loop_exit
      _
    %804 = vsyncpa [#allocation4], 1
    %s805 = scalar_lea.sflag [#allocation4], 1
    %806 = vsyncpa %s805, 1
    %807 = vsyncpa [#allocation7], 1
    %s808 = scalar_lea.sflag [#allocation7], 1
    %809 = vsyncpa %s808, 1
    %810 = vsyncpa [#allocation10], 1
    %811 = vsyncpa [#allocation5], 1
    %s812 = scalar_lea.sflag [#allocation5], 1
    %813 = vsyncpa %s812, 1

// kernel: gnn_node_forward.8
$region0: #{gnn_node_forward.8}
  #allocation0 [shape = 'u32[]', space=smem, size = 0x4, offset = 0x4, fixed_abs, tag = 'smem constant byte address 0x4 - core index']
  #allocation1 [shape = 'u32[144,128]{1,0:T(1,128)}', space=vmem, size = 0x12000, scoped, tag = 'internal scratch']
  #allocation2 [shape = 'f32[64,256]{1,0:T(8,128)}', space=vmem, size = 0x10000, scoped, tag = 'scratch operand']
  %s0 = inlined_call_operand.hbm [shape: bf16[3,128,128], index: 0, kind: input, shape index: {}]
  %s1 = inlined_call_operand.hbm [shape: bf16[3,128,256], index: 1, kind: input, shape index: {}]
  %s2 = inlined_call_operand.hbm [shape: f32[1,256], index: 2, kind: input, shape index: {}]
  %s3 = inlined_call_operand.hbm [shape: bf16[256,128], index: 3, kind: input, shape index: {}]
  %s4 = inlined_call_operand.hbm [shape: f32[1,128], index: 4, kind: input, shape index: {}]
  %s5 = inlined_call_operand.hbm [shape: bf16[128,128], index: 5, kind: input, shape index: {}]
  %s6 = inlined_call_operand.hbm [shape: f32[1,128], index: 6, kind: input, shape index: {}]
  %s7 = inlined_call_operand.hbm [shape: f32[128,128], index: 7, kind: output, shape index: {}]
  %s8 = sld [smem:[#allocation0]]
  $region97: #{gnn_node_forward.8} parent=0
    _
  %s10 = ssub.s32 1, %s8
  %s11 = scalar_select 0, %s10, %s8
  $region1: #{gnn_node_forward.8} parent=0
    #allocation3 [shape = 'u8[32768]{0}', space=vmem, size = 0x8000, scoped, tag = 'input window, operand 0']
    #allocation4 [shape = 's32[2]{0}', space=sflag, size = 0x8, scoped, tag = 'scoped memory for gnn_node_forward.8']
    #allocation5 [shape = 's32[2]{0}', space=sflag, size = 0x8, scoped, tag = 'scoped memory for gnn_node_forward.8']
    #allocation6 [shape = 'u8[131072]{0}', space=vmem, size = 0x20000, scoped, tag = 'input window, operand 1']
    #allocation7 [shape = 's32[2]{0}', space=sflag, size = 0x8, scoped, tag = 'scoped memory for gnn_node_forward.8']
    #allocation8 [shape = 'u8[1024]{0}', space=vmem, size = 0x400, scoped, tag = 'input window, operand 2, single buffered']
    #allocation9 [shape = 'u8[65536]{0}', space=vmem, size = 0x10000, scoped, tag = 'input window, operand 3, single buffered']
    #allocation10 [shape = 's32[1]{0}', space=sflag, size = 0x4, scoped, tag = 'scoped memory for gnn_node_forward.8']
    #allocation11 [shape = 'u8[512]{0}', space=vmem, size = 0x400, scoped, tag = 'input window, operand 4, single buffered']
    #allocation12 [shape = 'u8[32768]{0}', space=vmem, size = 0x8000, scoped, tag = 'input window, operand 5, single buffered']
    #allocation13 [shape = 's32[1]{0}', space=sflag, size = 0x4, scoped, tag = 'scoped memory for gnn_node_forward.8']
    #allocation14 [shape = 'u8[512]{0}', space=vmem, size = 0x400, scoped, tag = 'input window, operand 6, single buffered']
    #allocation15 [shape = 'u8[65536]{0}', space=vmem, size = 0x10000, scoped, tag = 'output window, operand 0']
    %12 = vsyncpa [#allocation4], 0
    %s13 = scalar_lea.sflag [#allocation4], 1
    %14 = vsyncpa %s13, 0
    %15 = vsyncpa [#allocation7], 0
    %s16 = scalar_lea.sflag [#allocation7], 1
    %17 = vsyncpa %s16, 0
    %18 = vsyncpa [#allocation10], 0
    %19 = vsyncpa [#allocation13], 0
    %20 = vsyncpa [#allocation5], 0
    %s21 = scalar_lea.sflag [#allocation5], 1
    %22 = vsyncpa %s21, 0
    loop: start=0, step=1, limit=8
    $region2: #{gnn_node_forward.8} parent=1 // loop_pre_header
      _
    $region3: #{gnn_node_forward.8} parent=1 // loop_header
      %s24 = sphi 0, %s28
      %p25 = scmp.ge.s32.totalorder %s24, 8
      %s31 = sphi 0, %s43
      %s32 = sphi 0, %s39
      %s33 = sphi 0, %s31
      %s34 = sphi 0, %s32
      %s35 = sphi 0, %s33
      %s36 = sphi 0, %s34
      %s48 = sphi 0, %s50
      %s51 = sphi 0, %s48
      %s52 = sphi 0, %s51
      %s68 = sphi 0, %s52
      %s74 = sphi 0, %s76
      %s77 = sphi 0, %s74
      %s78 = sphi 0, %s77
      %s94 = sphi 0, %s78
      %s98 = sphi 0, %s98
      %s100 = sphi 0, %s98
      %s101 = sphi 0, %s100
      %s115 = sphi 0, %s101
      %s119 = sphi 0, %s119
      %s121 = sphi 0, %s119
      %s122 = sphi 0, %s121
      %s136 = sphi 0, %s122
      %s140 = sphi 0, %s140
      %s142 = sphi 0, %s140
      %s143 = sphi 0, %s142
      %s157 = sphi 0, %s143
      %s161 = sphi 0, %s161
      %s163 = sphi 0, %s161
      %s164 = sphi 0, %s163
      %s178 = sphi 0, %s164
      %s182 = sphi 0, %s182
      %s184 = sphi 0, %s182
      %s185 = sphi 0, %s184
      %s199 = sphi 0, %s185
      %s205 = sphi 0, %s207
      %s208 = sphi 0, %s205
      %s209 = sphi 0, %s208
      %s225 = sphi 0, %s209
    $region4: #{gnn_node_forward.8} parent=1 // loop_header_branch
      %27 = sbr.rel (%p25) target = $region8
    $region5: #{gnn_node_forward.8} parent=1 // loop_body
      %s29 = ssub.s32 %s24, 1
      %s30 = ssub.s32 %s24, 2
      %s37 = sadd.s32 1, %s32
      %p38 = scmp.ge.s32.totalorder %s37, 3
      %s39 = scalar_select %p38, 0, %s37
      %s40 = sadd.s32 1, %s31
      %s41 = scalar_select %p38, %s40, %s31
      %p42 = scmp.ge.s32.totalorder %s41, 2
      %s43 = scalar_select %p42, 0, %s41
      %s44 = ssub.s32 %s32, %s39
      %s45 = ssub.s32 %s31, %s43
      %s46 = sor.u32 %s44, %s45
      %p47 = scmp.eq.s32.totalorder %s46, 0
      %s49 = sadd.s32 %s48, 1
      %s50 = scalar_select %p47, %s48, %s49
      %p53 = pneg %p47
      %p54 = scmp.eq.s32.totalorder %s24, 5
      %p55 = por %p53, %p54
      %p56 = scmp.ne.s32.totalorder %s48, %s51
      %p57 = scmp.eq.s32.totalorder %s24, 0
      %p58 = por %p56, %p57
      %p59 = scmp.ne.s32.totalorder %s48, %s51
      %p60 = scmp.eq.s32.totalorder %s29, 5
      %p61 = por %p59, %p60
      %p62 = scmp.ne.s32.totalorder %s51, %s52
      %p63 = scmp.eq.s32.totalorder %s29, 0
      %p64 = por %p62, %p63
      %p65 = scmp.ne.s32.totalorder %s51, %s52
      %p66 = scmp.eq.s32.totalorder %s30, 5
      %p67 = por %p65, %p66
      %p69 = scmp.ne.s32.totalorder %s52, %s68
      %p70 = scmp.eq.s32.totalorder %s30, 0
      %p71 = por %p69, %p70
      %s72 = ssub.s32 %s32, %s39
      %p73 = scmp.eq.s32.totalorder %s72, 0
      %s75 = sadd.s32 %s74, 1
      %s76 = scalar_select %p73, %s74, %s75
      %p79 = pneg %p73
      %p80 = scmp.eq.s32.totalorder %s24, 5
      %p81 = por %p79, %p80
      %p82 = scmp.ne.s32.totalorder %s74, %s77
      %p83 = scmp.eq.s32.totalorder %s24, 0
      %p84 = por %p82, %p83
      %p85 = scmp.ne.s32.totalorder %s74, %s77
      %p86 = scmp.eq.s32.totalorder %s29, 5
      %p87 = por %p85, %p86
      %p88 = scmp.ne.s32.totalorder %s77, %s78
      %p89 = scmp.eq.s32.totalorder %s29, 0
      %p90 = por %p88, %p89
      %p91 = scmp.ne.s32.totalorder %s77, %s78
      %p92 = scmp.eq.s32.totalorder %s30, 5
      %p93 = por %p91, %p92
      %p95 = scmp.ne.s32.totalorder %s78, %s94
      %p96 = scmp.eq.s32.totalorder %s30, 0
      %p97 = por %p95, %p96
      %s99 = sadd.s32 %s98, 1
      %p102 = scmp.eq.s32.totalorder %s24, 5
      %p103 = scmp.ne.s32.totalorder %s98, %s100
      %p104 = scmp.eq.s32.totalorder %s24, 0
      %p105 = por %p103, %p104
      %p106 = scmp.ne.s32.totalorder %s98, %s100
      %p107 = scmp.eq.s32.totalorder %s29, 5
      %p108 = por %p106, %p107
      %p109 = scmp.ne.s32.totalorder %s100, %s101
      %p110 = scmp.eq.s32.totalorder %s29, 0
      %p111 = por %p109, %p110
      %p112 = scmp.ne.s32.totalorder %s100, %s101
      %p113 = scmp.eq.s32.totalorder %s30, 5
      %p114 = por %p112, %p113
      %p116 = scmp.ne.s32.totalorder %s101, %s115
      %p117 = scmp.eq.s32.totalorder %s30, 0
      %p118 = por %p116, %p117
      %s120 = sadd.s32 %s119, 1
      %p123 = scmp.eq.s32.totalorder %s24, 5
      %p124 = scmp.ne.s32.totalorder %s119, %s121
      %p125 = scmp.eq.s32.totalorder %s24, 0
      %p126 = por %p124, %p125
      %p127 = scmp.ne.s32.totalorder %s119, %s121
      %p128 = scmp.eq.s32.totalorder %s29, 5
      %p129 = por %p127, %p128
      %p130 = scmp.ne.s32.totalorder %s121, %s122
      %p131 = scmp.eq.s32.totalorder %s29, 0
      %p132 = por %p130, %p131
      %p133 = scmp.ne.s32.totalorder %s121, %s122
      %p134 = scmp.eq.s32.totalorder %s30, 5
      %p135 = por %p133, %p134
      %p137 = scmp.ne.s32.totalorder %s122, %s136
      %p138 = scmp.eq.s32.totalorder %s30, 0
      %p139 = por %p137, %p138
      %s141 = sadd.s32 %s140, 1
      %p144 = scmp.eq.s32.totalorder %s24, 5
      %p145 = scmp.ne.s32.totalorder %s140, %s142
      %p146 = scmp.eq.s32.totalorder %s24, 0
      %p147 = por %p145, %p146
      %p148 = scmp.ne.s32.totalorder %s140, %s142
      %p149 = scmp.eq.s32.totalorder %s29, 5
      %p150 = por %p148, %p149
      %p151 = scmp.ne.s32.totalorder %s142, %s143
      %p152 = scmp.eq.s32.totalorder %s29, 0
      %p153 = por %p151, %p152
      %p154 = scmp.ne.s32.totalorder %s142, %s143
      %p155 = scmp.eq.s32.totalorder %s30, 5
      %p156 = por %p154, %p155
      %p158 = scmp.ne.s32.totalorder %s143, %s157
      %p159 = scmp.eq.s32.totalorder %s30, 0
      %p160 = por %p158, %p159
      %s162 = sadd.s32 %s161, 1
      %p165 = scmp.eq.s32.totalorder %s24, 5
      %p166 = scmp.ne.s32.totalorder %s161, %s163
      %p167 = scmp.eq.s32.totalorder %s24, 0
      %p168 = por %p166, %p167
      %p169 = scmp.ne.s32.totalorder %s161, %s163
      %p170 = scmp.eq.s32.totalorder %s29, 5
      %p171 = por %p169, %p170
      %p172 = scmp.ne.s32.totalorder %s163, %s164
      %p173 = scmp.eq.s32.totalorder %s29, 0
      %p174 = por %p172, %p173
      %p175 = scmp.ne.s32.totalorder %s163, %s164
      %p176 = scmp.eq.s32.totalorder %s30, 5
      %p177 = por %p175, %p176
      %p179 = scmp.ne.s32.totalorder %s164, %s178
      %p180 = scmp.eq.s32.totalorder %s30, 0
      %p181 = por %p179, %p180
      %s183 = sadd.s32 %s182, 1
      %p186 = scmp.eq.s32.totalorder %s24, 5
      %p187 = scmp.ne.s32.totalorder %s182, %s184
      %p188 = scmp.eq.s32.totalorder %s24, 0
      %p189 = por %p187, %p188
      %p190 = scmp.ne.s32.totalorder %s182, %s184
      %p191 = scmp.eq.s32.totalorder %s29, 5
      %p192 = por %p190, %p191
      %p193 = scmp.ne.s32.totalorder %s184, %s185
      %p194 = scmp.eq.s32.totalorder %s29, 0
      %p195 = por %p193, %p194
      %p196 = scmp.ne.s32.totalorder %s184, %s185
      %p197 = scmp.eq.s32.totalorder %s30, 5
      %p198 = por %p196, %p197
      %p200 = scmp.ne.s32.totalorder %s185, %s199
      %p201 = scmp.eq.s32.totalorder %s30, 0
      %p202 = por %p200, %p201
      %s203 = ssub.s32 %s31, %s43
      %p204 = scmp.eq.s32.totalorder %s203, 0
      %s206 = sadd.s32 %s205, 1
      %s207 = scalar_select %p204, %s205, %s206
      %p210 = pneg %p204
      %p211 = scmp.eq.s32.totalorder %s24, 5
      %p212 = por %p210, %p211
      %p213 = scmp.ne.s32.totalorder %s205, %s208
      %p214 = scmp.eq.s32.totalorder %s24, 0
      %p215 = por %p213, %p214
      %p216 = scmp.ne.s32.totalorder %s205, %s208
      %p217 = scmp.eq.s32.totalorder %s29, 5
      %p218 = por %p216, %p217
      %p219 = scmp.ne.s32.totalorder %s208, %s209
      %p220 = scmp.eq.s32.totalorder %s29, 0
      %p221 = por %p219, %p220
      %p222 = scmp.ne.s32.totalorder %s208, %s209
      %p223 = scmp.eq.s32.totalorder %s30, 5
      %p224 = por %p222, %p223
      %p226 = scmp.ne.s32.totalorder %s209, %s225
      %p227 = scmp.eq.s32.totalorder %s30, 0
      %p228 = por %p226, %p227
      %p229 = scmp.le.s32.totalorder 1, %s24
      %p230 = scmp.lt.s32.totalorder %s24, 7
      %p231 = pnand %p229, %p230
      %p232 = pneg %p231
      // Predicated region
      $region9: #{gnn_node_forward.8} parent=5 // pred_check
        _
      $region10: #{gnn_node_forward.8} parent=5 // pred_check_branch
        %234 = sbr.rel (%p231) target = $region12
      $region11: #{gnn_node_forward.8} parent=5 // pred_region
        %s235 = ssub.s32 %s24, 1
        // Predicated region
        $region13: #{gnn_node_forward.8} parent=11 // pred_check
          %p236 = pneg %p111
        $region14: #{gnn_node_forward.8} parent=11 // pred_check_branch
          %238 = sbr.rel (%p236) target = $region16
        $region15: #{gnn_node_forward.8} parent=11 // pred_region
          %s240 = ssub.s32 32, 32
          %241 = vsyncadd [#allocation7], %s240
          %s243 = sshll.u32 [#allocation8], 4
          %s244 = int_to_ptr.vmem [resolvable:$true] %s243
          %246 = dma.hbm_to_vmem [thread:$0]  %s2, 32, %s244, [#allocation7]
        $region16: #{gnn_node_forward.8} parent=11 // pred_fallthru
          _
        // Predicated region
        $region17: #{gnn_node_forward.8} parent=11 // pred_check
          %p247 = pneg %p132
        $region18: #{gnn_node_forward.8} parent=11 // pred_check_branch
          %249 = sbr.rel (%p247) target = $region20
        $region19: #{gnn_node_forward.8} parent=11 // pred_region
          %s251 = ssub.s32 2048, 2048
          %252 = vsyncadd [#allocation10], %s251
          %s253 = sshll.u32 [#allocation9], 4
          %s254 = int_to_ptr.vmem [resolvable:$true] %s253
          %259 = dma.hbm_to_vmem [thread:$0]  %s3, 2048, %s254, [#allocation10], 64, 64, 4
        $region20: #{gnn_node_forward.8} parent=11 // pred_fallthru
          _
        // Predicated region
        $region21: #{gnn_node_forward.8} parent=11 // pred_check
          %p260 = pneg %p153
        $region22: #{gnn_node_forward.8} parent=11 // pred_check_branch
          %262 = sbr.rel (%p260) target = $region24
        $region23: #{gnn_node_forward.8} parent=11 // pred_region
          %s264 = ssub.s32 16, 16
          %265 = vsyncadd [#allocation10], %s264
          %s267 = sshll.u32 [#allocation11], 4
          %s268 = int_to_ptr.vmem [resolvable:$true] %s267
          %270 = dma.hbm_to_vmem [thread:$0]  %s4, 16, %s268, [#allocation10]
        $region24: #{gnn_node_forward.8} parent=11 // pred_fallthru
          _
        // Predicated region
        $region25: #{gnn_node_forward.8} parent=11 // pred_check
          %p271 = pneg %p174
        $region26: #{gnn_node_forward.8} parent=11 // pred_check_branch
          %273 = sbr.rel (%p271) target = $region28
        $region27: #{gnn_node_forward.8} parent=11 // pred_region
          %s275 = ssub.s32 1024, 1024
          %276 = vsyncadd [#allocation13], %s275
          %s277 = sshll.u32 [#allocation12], 4
          %s278 = int_to_ptr.vmem [resolvable:$true] %s277
          %283 = dma.hbm_to_vmem [thread:$0]  %s5, 1024, %s278, [#allocation13], 64, 64, 4
        $region28: #{gnn_node_forward.8} parent=11 // pred_fallthru
          _
        // Predicated region
        $region29: #{gnn_node_forward.8} parent=11 // pred_check
          %p284 = pneg %p195
        $region30: #{gnn_node_forward.8} parent=11 // pred_check_branch
          %286 = sbr.rel (%p284) target = $region32
        $region31: #{gnn_node_forward.8} parent=11 // pred_region
          %s288 = ssub.s32 16, 16
          %289 = vsyncadd [#allocation13], %s288
          %s291 = sshll.u32 [#allocation14], 4
          %s292 = int_to_ptr.vmem [resolvable:$true] %s291
          %294 = dma.hbm_to_vmem [thread:$0]  %s6, 16, %s292, [#allocation13]
        $region32: #{gnn_node_forward.8} parent=11 // pred_fallthru
          _
      $region12: #{gnn_node_forward.8} parent=5 // pred_fallthru
        _
      %p295 = scmp.lt.s32.totalorder %s24, 6
      // Predicated region
      $region33: #{gnn_node_forward.8} parent=5 // pred_check
        %p296 = pneg %p295
      $region34: #{gnn_node_forward.8} parent=5 // pred_check_branch
        %298 = sbr.rel (%p296) target = $region36
      $region35: #{gnn_node_forward.8} parent=5 // pred_region
        // Predicated region
        $region37: #{gnn_node_forward.8} parent=35 // pred_check
          %p299 = pneg %p58
        $region38: #{gnn_node_forward.8} parent=35 // pred_check_branch
          %301 = sbr.rel (%p299) target = $region40
        $region39: #{gnn_node_forward.8} parent=35 // pred_region
          %s302 = sand.u32 %s48, 1
          %s303 = scalar_lea.sflag [#allocation4], %s302
          %s304 = sand.u32 %s48, 1
          %s305 = smul.addr %s304, 32
          %s306 = scalar_lea.vmem [#allocation3], %s305
          %s307 = smul.u32 8, %s31
          %s309 = ssub.s32 512, 512
          %310 = vsyncadd %s303, %s309
          %s311 = smul.addr %s32, 16
          %s312 = sadd.s32 %s307, %s311
          %s313 = smul.addr %s312, 64
          %s314 = scalar_lea.hbm %s0, %s313
          %s315 = sshll.u32 %s306, 4
          %s316 = int_to_ptr.vmem [resolvable:$true] %s315
          %321 = dma.hbm_to_vmem [thread:$0]  %s314, 512, %s316, %s303, 64, 64, 4
        $region40: #{gnn_node_forward.8} parent=35 // pred_fallthru
          _
        // Predicated region
        $region41: #{gnn_node_forward.8} parent=35 // pred_check
          %p322 = pneg %p84
        $region42: #{gnn_node_forward.8} parent=35 // pred_check_branch
          %324 = sbr.rel (%p322) target = $region44
        $region43: #{gnn_node_forward.8} parent=35 // pred_region
          %s325 = sand.u32 %s24, 1
          %s326 = scalar_lea.sflag [#allocation7], %s325
          %s327 = sand.u32 %s74, 1
          %s328 = smul.addr %s327, 128
          %s329 = scalar_lea.vmem [#allocation6], %s328
          %s331 = ssub.s32 2048, 2048
          %332 = vsyncadd %s326, %s331
          %s333 = smul.addr %s32, 32
          %s334 = smul.addr %s333, 64
          %s335 = scalar_lea.hbm %s1, %s334
          %s336 = sshll.u32 %s329, 4
          %s337 = int_to_ptr.vmem [resolvable:$true] %s336
          %342 = dma.hbm_to_vmem [thread:$0]  %s335, 2048, %s337, %s326, 128, 128, 8
        $region44: #{gnn_node_forward.8} parent=35 // pred_fallthru
          _
      $region36: #{gnn_node_forward.8} parent=5 // pred_fallthru
        _
      %p343 = scmp.le.s32.totalorder 1, %s24
      %p344 = scmp.lt.s32.totalorder %s24, 7
      %p345 = pnand %p343, %p344
      %p346 = pneg %p345
      // Predicated region
      $region45: #{gnn_node_forward.8} parent=5 // pred_check
        _
      $region46: #{gnn_node_forward.8} parent=5 // pred_check_branch
        %348 = sbr.rel (%p345) target = $region48
      $region47: #{gnn_node_forward.8} parent=5 // pred_region
        %s349 = ssub.s32 %s24, 1
        %s350 = sand.u32 %s51, 1
        %s351 = scalar_lea.sflag [#allocation4], %s350
        %s352 = sand.u32 %s51, 1
        %s353 = smul.addr %s352, 32
        %s354 = scalar_lea.vmem [#allocation3], %s353
        // Predicated region
        $region49: #{gnn_node_forward.8} parent=47 // pred_check
          %p355 = pneg %p64
        $region50: #{gnn_node_forward.8} parent=47 // pred_check_branch
          %357 = sbr.rel (%p355) target = $region52
        $region51: #{gnn_node_forward.8} parent=47 // pred_region
          %358 = dma.done %s351, 512
        $region52: #{gnn_node_forward.8} parent=47 // pred_fallthru
          _
        %s359 = sand.u32 %s29, 1
        %s360 = scalar_lea.sflag [#allocation7], %s359
        %s361 = sand.u32 %s77, 1
        %s362 = smul.addr %s361, 128
        %s363 = scalar_lea.vmem [#allocation6], %s362
        // Predicated region
        $region53: #{gnn_node_forward.8} parent=47 // pred_check
          %p364 = pneg %p90
        $region54: #{gnn_node_forward.8} parent=47 // pred_check_branch
          %366 = sbr.rel (%p364) target = $region56
        $region55: #{gnn_node_forward.8} parent=47 // pred_region
          %367 = dma.done %s360, 2048
        $region56: #{gnn_node_forward.8} parent=47 // pred_fallthru
          _
        // Predicated region
        $region57: #{gnn_node_forward.8} parent=47 // pred_check
          %p368 = pneg %p111
        $region58: #{gnn_node_forward.8} parent=47 // pred_check_branch
          %370 = sbr.rel (%p368) target = $region60
        $region59: #{gnn_node_forward.8} parent=47 // pred_region
          %371 = dma.done [#allocation7], 32
        $region60: #{gnn_node_forward.8} parent=47 // pred_fallthru
          _
        // Predicated region
        $region61: #{gnn_node_forward.8} parent=47 // pred_check
          %p372 = pneg %p132
        $region62: #{gnn_node_forward.8} parent=47 // pred_check_branch
          %374 = sbr.rel (%p372) target = $region64
        $region63: #{gnn_node_forward.8} parent=47 // pred_region
          %375 = dma.done [#allocation10], 2048
        $region64: #{gnn_node_forward.8} parent=47 // pred_fallthru
          _
        // Predicated region
        $region65: #{gnn_node_forward.8} parent=47 // pred_check
          %p376 = pneg %p153
        $region66: #{gnn_node_forward.8} parent=47 // pred_check_branch
          %378 = sbr.rel (%p376) target = $region68
        $region67: #{gnn_node_forward.8} parent=47 // pred_region
          %379 = dma.done [#allocation10], 16
        $region68: #{gnn_node_forward.8} parent=47 // pred_fallthru
          _
        // Predicated region
        $region69: #{gnn_node_forward.8} parent=47 // pred_check
          %p380 = pneg %p174
        $region70: #{gnn_node_forward.8} parent=47 // pred_check_branch
          %382 = sbr.rel (%p380) target = $region72
        $region71: #{gnn_node_forward.8} parent=47 // pred_region
          %383 = dma.done [#allocation13], 1024
        $region72: #{gnn_node_forward.8} parent=47 // pred_fallthru
          _
        // Predicated region
        $region73: #{gnn_node_forward.8} parent=47 // pred_check
          %p384 = pneg %p195
        $region74: #{gnn_node_forward.8} parent=47 // pred_check_branch
          %386 = sbr.rel (%p384) target = $region76
        $region75: #{gnn_node_forward.8} parent=47 // pred_region
          %387 = dma.done [#allocation13], 16
        $region76: #{gnn_node_forward.8} parent=47 // pred_fallthru
          _
        %s388 = sand.u32 %s51, 1
        %s389 = scalar_lea.sflag [#allocation4], %s388
        %s390 = sand.u32 %s51, 1
        %s391 = smul.addr %s390, 32
        %s392 = scalar_lea.vmem [#allocation3], %s391
        %p393 = pneg %p64
        %p394 = pneg %p61
        %s395 = sand.u32 %s29, 1
        %s396 = scalar_lea.sflag [#allocation7], %s395
        %s397 = sand.u32 %s77, 1
        %s398 = smul.addr %s397, 128
        %s399 = scalar_lea.vmem [#allocation6], %s398
        %p400 = pneg %p90
        %p401 = pneg %p87
        %p402 = pneg %p111
        %p403 = pneg %p108
        %p404 = pneg %p132
        %p405 = pneg %p129
        %p406 = pneg %p153
        %p407 = pneg %p150
        %p408 = pneg %p174
        %p409 = pneg %p171
        %p410 = pneg %p195
        %p411 = pneg %p192
        %p412 = pneg %p221
        %p413 = pneg %p218
        %s414 = sand.u32 %s208, 1
        %s415 = scalar_lea.sflag [#allocation5], %s414
        %s416 = sand.u32 %s208, 1
        %s417 = smul.addr %s416, 64
        %s418 = scalar_lea.vmem [#allocation15], %s417
        %s419 = smul.u32 8, %s33
        %s420 = smul.u32 8, %s33
        %p422 = scmp.eq.s32.totalorder %s34, 0
        // Predicated region
        $region77: #{gnn_node_forward.8} parent=47 // pred_check
          %p423 = pneg %p422
        $region78: #{gnn_node_forward.8} parent=47 // pred_check_branch
          %425 = sbr.rel (%p423) target = $region80
        $region79: #{gnn_node_forward.8} parent=47 // pred_region
          %426 = vst [vmem:[#allocation2] sm:$0xff] 0.0
          %427 = vst [vmem:[#allocation2 + $0x8] sm:$0xff] 0.0
          %428 = vst [vmem:[#allocation2 + $0x10] sm:$0xff] 0.0
          %429 = vst [vmem:[#allocation2 + $0x18] sm:$0xff] 0.0
          %430 = vst [vmem:[#allocation2 + $0x20] sm:$0xff] 0.0
          %431 = vst [vmem:[#allocation2 + $0x28] sm:$0xff] 0.0
          %432 = vst [vmem:[#allocation2 + $0x30] sm:$0xff] 0.0
          %433 = vst [vmem:[#allocation2 + $0x38] sm:$0xff] 0.0
          %434 = vst [vmem:[#allocation2 + $0x40] sm:$0xff] 0.0
          %435 = vst [vmem:[#allocation2 + $0x48] sm:$0xff] 0.0
          %436 = vst [vmem:[#allocation2 + $0x50] sm:$0xff] 0.0
          %437 = vst [vmem:[#allocation2 + $0x58] sm:$0xff] 0.0
          %438 = vst [vmem:[#allocation2 + $0x60] sm:$0xff] 0.0
          %439 = vst [vmem:[#allocation2 + $0x68] sm:$0xff] 0.0
          %440 = vst [vmem:[#allocation2 + $0x70] sm:$0xff] 0.0
          %441 = vst [vmem:[#allocation2 + $0x78] sm:$0xff] 0.0
        $region80: #{gnn_node_forward.8} parent=47 // pred_fallthru
          _
        %v442 = vld [vmem:[#allocation2] sm:$0xff]
        %v443 = vld [vmem:[#allocation2 + $0x8] sm:$0xff]
        %v444 = vld [vmem:[#allocation2 + $0x10] sm:$0xff]
        %v445 = vld [vmem:[#allocation2 + $0x18] sm:$0xff]
        %v446 = vld [vmem:[#allocation2 + $0x20] sm:$0xff]
        %v447 = vld [vmem:[#allocation2 + $0x28] sm:$0xff]
        %v448 = vld [vmem:[#allocation2 + $0x30] sm:$0xff]
        %v449 = vld [vmem:[#allocation2 + $0x38] sm:$0xff]
        %v450 = vld [vmem:[#allocation2 + $0x40] sm:$0xff]
        %v451 = vld [vmem:[#allocation2 + $0x48] sm:$0xff]
        %v452 = vld [vmem:[#allocation2 + $0x50] sm:$0xff]
        %v453 = vld [vmem:[#allocation2 + $0x58] sm:$0xff]
        %v454 = vld [vmem:[#allocation2 + $0x60] sm:$0xff]
        %v455 = vld [vmem:[#allocation2 + $0x68] sm:$0xff]
        %v456 = vld [vmem:[#allocation2 + $0x70] sm:$0xff]
        %v457 = vld [vmem:[#allocation2 + $0x78] sm:$0xff]
        %v458 = vld [vmem:[%s354] sm:$0xf]
        %v459 = vld [vmem:[%s354 + $0x4] sm:$0xf]
        %v460 = vld [vmem:[%s354 + $0x8] sm:$0xf]
        %v461 = vld [vmem:[%s354 + $0xc] sm:$0xf]
        %v462 = vld [vmem:[%s354 + $0x10] sm:$0xf]
        %v463 = vld [vmem:[%s354 + $0x14] sm:$0xf]
        %v464 = vld [vmem:[%s354 + $0x18] sm:$0xf]
        %v465 = vld [vmem:[%s354 + $0x1c] sm:$0xf]
        %v466 = vld [vmem:[%s363] sm:$0xff]
        %v467 = vld [vmem:[%s363 + $0x8] sm:$0xff]
        %v468 = vld [vmem:[%s363 + $0x10] sm:$0xff]
        %v469 = vld [vmem:[%s363 + $0x18] sm:$0xff]
        %v470 = vld [vmem:[%s363 + $0x20] sm:$0xff]
        %v471 = vld [vmem:[%s363 + $0x28] sm:$0xff]
        %v472 = vld [vmem:[%s363 + $0x30] sm:$0xff]
        %v473 = vld [vmem:[%s363 + $0x38] sm:$0xff]
        %v474 = vld [vmem:[%s363 + $0x40] sm:$0xff]
        %v475 = vld [vmem:[%s363 + $0x48] sm:$0xff]
        %v476 = vld [vmem:[%s363 + $0x50] sm:$0xff]
        %v477 = vld [vmem:[%s363 + $0x58] sm:$0xff]
        %v478 = vld [vmem:[%s363 + $0x60] sm:$0xff]
        %v479 = vld [vmem:[%s363 + $0x68] sm:$0xff]
        %v480 = vld [vmem:[%s363 + $0x70] sm:$0xff]
        %v481 = vld [vmem:[%s363 + $0x78] sm:$0xff]
        %v490 = vunpack.c.l.b16 %v458
        %v491 = vunpack.c.l.b16 %v459
        %v492 = vunpack.c.l.b16 %v460
        %v493 = vunpack.c.l.b16 %v461
        %v494 = vunpack.c.l.b16 %v462
        %v495 = vunpack.c.l.b16 %v463
        %v496 = vunpack.c.l.b16 %v464
        %v497 = vunpack.c.l.b16 %v465
        %v498 = vpack.c.b16 %v491, %v490
        %v499 = vpack.c.b16 %v493, %v492
        %v500 = vpack.c.b16 %v495, %v494
        %v501 = vpack.c.b16 %v497, %v496
        %v522 = vunpack.c.l.b16 %v466
        %v523 = vunpack.c.h.b16 %v466
        %v524 = vunpack.c.l.b16 %v467
        %v525 = vunpack.c.h.b16 %v467
        %v526 = vunpack.c.l.b16 %v468
        %v527 = vunpack.c.h.b16 %v468
        %v528 = vunpack.c.l.b16 %v469
        %v529 = vunpack.c.h.b16 %v469
        %v530 = vunpack.c.l.b16 %v470
        %v531 = vunpack.c.h.b16 %v470
        %v532 = vunpack.c.l.b16 %v471
        %v533 = vunpack.c.h.b16 %v471
        %v534 = vunpack.c.l.b16 %v472
        %v535 = vunpack.c.h.b16 %v472
        %v536 = vunpack.c.l.b16 %v473
        %v537 = vunpack.c.h.b16 %v473
        %v538 = vunpack.c.l.b16 %v474
        %v539 = vunpack.c.h.b16 %v474
        %v540 = vunpack.c.l.b16 %v475
        %v541 = vunpack.c.h.b16 %v475
        %v542 = vunpack.c.l.b16 %v476
        %v543 = vunpack.c.h.b16 %v476
        %v544 = vunpack.c.l.b16 %v477
        %v545 = vunpack.c.h.b16 %v477
        %v546 = vunpack.c.l.b16 %v478
        %v547 = vunpack.c.h.b16 %v478
        %v548 = vunpack.c.l.b16 %v479
        %v549 = vunpack.c.h.b16 %v479
        %v550 = vunpack.c.l.b16 %v480
        %v551 = vunpack.c.h.b16 %v480
        %v552 = vunpack.c.l.b16 %v481
        %v553 = vunpack.c.h.b16 %v481
        %v554 = vpack.c.b16 %v524, %v522
        %v555 = vpack.c.b16 %v525, %v523
        %v556 = vpack.c.b16 %v528, %v526
        %v557 = vpack.c.b16 %v529, %v527
        %v558 = vpack.c.b16 %v532, %v530
        %v559 = vpack.c.b16 %v533, %v531
        %v560 = vpack.c.b16 %v536, %v534
        %v561 = vpack.c.b16 %v537, %v535
        %v562 = vpack.c.b16 %v540, %v538
        %v563 = vpack.c.b16 %v541, %v539
        %v564 = vpack.c.b16 %v544, %v542
        %v565 = vpack.c.b16 %v545, %v543
        %v566 = vpack.c.b16 %v548, %v546
        %v567 = vpack.c.b16 %v549, %v547
        %v568 = vpack.c.b16 %v552, %v550
        %v569 = vpack.c.b16 %v553, %v551
        %586 = vmatprep.subr.bf16.mxu0 %v555
        %587 = vmatpush1.bf16.msra.mxu0 %v554
        %588 = vmatprep.subr.bf16.mxu0 %v557
        %589 = vmatpush1.bf16.msra.mxu0 %v556
        %590 = vmatprep.subr.bf16.mxu0 %v559
        %591 = vmatpush1.bf16.msra.mxu0 %v558
        %592 = vmatprep.subr.bf16.mxu0 %v561
        %593 = vmatpush1.bf16.msra.mxu0 %v560
        %594 = vmatprep.subr.bf16.mxu0 %v563
        %595 = vmatpush1.bf16.msra.mxu0 %v562
        %596 = vmatprep.subr.bf16.mxu0 %v565
        %597 = vmatpush1.bf16.msra.mxu0 %v564
        %598 = vmatprep.subr.bf16.mxu0 %v567
        %599 = vmatpush1.bf16.msra.mxu0 %v566
        %600 = vmatprep.subr.bf16.mxu0 %v569
        %601 = vmatpush1.bf16.msra.mxu0 %v568
        %602 = vmatprep.subr.bf16.mxu0 0
        %603 = vmatpush1.bf16.msra.mxu0 0
        %604 = vmatprep.subr.bf16.mxu0 0
        %605 = vmatpush1.bf16.msra.mxu0 0
        %606 = vmatprep.subr.bf16.mxu0 0
        %607 = vmatpush1.bf16.msra.mxu0 0
        %608 = vmatprep.subr.bf16.mxu0 0
        %609 = vmatpush1.bf16.msra.mxu0 0
        %610 = vmatprep.subr.bf16.mxu0 0
        %611 = vmatpush1.bf16.msra.mxu0 0
        %612 = vmatprep.subr.bf16.mxu0 0
        %613 = vmatpush1.bf16.msra.mxu0 0
        %614 = vmatprep.subr.bf16.mxu0 0
        %615 = vmatpush1.bf16.msra.mxu0 0
        %616 = vmatprep.subr.bf16.mxu0 0
        %617 = vmatpush1.bf16.msra.mxu0 0
        %618 = vmatprep.mubr.bf16.mxu0 0
        %619 = vmatmul.mubr.bf16.gmra.mrb[0].mxu0 %v498
        %v620 = vpop.f32.mrb[0].mxu0
        %v621 = vadd.f32 0.0, %v620
        %v622 = vpop.f32.mrb[0].mxu0
        %v623 = vadd.f32 0.0, %v622
        %v624 = vpop.f32.mrb[0].mxu0
        %v625 = vadd.f32 0.0, %v624
        %v626 = vpop.f32.mrb[0].mxu0
        %v627 = vadd.f32 0.0, %v626
        %628 = vmatprep.mubr.bf16.mxu0 0
        %629 = vmatmul.mubr.bf16.gmra.mrb[0].mxu0 %v499
        %v630 = vpop.f32.mrb[0].mxu0
        %v631 = vadd.f32 0.0, %v630
        %v632 = vpop.f32.mrb[0].mxu0
        %v633 = vadd.f32 0.0, %v632
        %v634 = vpop.f32.mrb[0].mxu0
        %v635 = vadd.f32 0.0, %v634
        %v636 = vpop.f32.mrb[0].mxu0
        %v637 = vadd.f32 0.0, %v636
        %638 = vmatprep.mubr.bf16.mxu0 0
        %639 = vmatmul.mubr.bf16.gmra.mrb[0].mxu0 %v500
        %v640 = vpop.f32.mrb[0].mxu0
        %v641 = vadd.f32 0.0, %v640
        %v642 = vpop.f32.mrb[0].mxu0
        %v643 = vadd.f32 0.0, %v642
        %v644 = vpop.f32.mrb[0].mxu0
        %v645 = vadd.f32 0.0, %v644
        %v646 = vpop.f32.mrb[0].mxu0
        %v647 = vadd.f32 0.0, %v646
        %648 = vmatprep.mubr.bf16.mxu0 0
        %649 = vmatmul.mubr.bf16.gmra.mrb[0].mxu0 %v501
        %v650 = vpop.f32.mrb[0].mxu0
        %v651 = vadd.f32 0.0, %v650
        %v652 = vpop.f32.mrb[0].mxu0
        %v653 = vadd.f32 0.0, %v652
        %v654 = vpop.f32.mrb[0].mxu0
        %v655 = vadd.f32 0.0, %v654
        %v656 = vpop.f32.mrb[0].mxu0
        %v657 = vadd.f32 0.0, %v656
        %658 = vdwg.mxu0
        %v659 = vadd.f32 %v442, %v621
        %v660 = vadd.f32 %v443, %v623
        %v661 = vadd.f32 %v444, %v625
        %v662 = vadd.f32 %v445, %v627
        %v663 = vadd.f32 %v446, %v631
        %v664 = vadd.f32 %v447, %v633
        %v665 = vadd.f32 %v448, %v635
        %v666 = vadd.f32 %v449, %v637
        %v667 = vadd.f32 %v450, %v641
        %v668 = vadd.f32 %v451, %v643
        %v669 = vadd.f32 %v452, %v645
        %v670 = vadd.f32 %v453, %v647
        %v671 = vadd.f32 %v454, %v651
        %v672 = vadd.f32 %v455, %v653
        %v673 = vadd.f32 %v456, %v655
        %v674 = vadd.f32 %v457, %v657
        %675 = vst [vmem:[#allocation2] sm:$0xff] %v659
        %676 = vst [vmem:[#allocation2 + $0x8] sm:$0xff] %v660
        %677 = vst [vmem:[#allocation2 + $0x10] sm:$0xff] %v661
        %678 = vst [vmem:[#allocation2 + $0x18] sm:$0xff] %v662
        %679 = vst [vmem:[#allocation2 + $0x20] sm:$0xff] %v663
        %680 = vst [vmem:[#allocation2 + $0x28] sm:$0xff] %v664
        %681 = vst [vmem:[#allocation2 + $0x30] sm:$0xff] %v665
        %682 = vst [vmem:[#allocation2 + $0x38] sm:$0xff] %v666
        %683 = vst [vmem:[#allocation2 + $0x40] sm:$0xff] %v667
        %684 = vst [vmem:[#allocation2 + $0x48] sm:$0xff] %v668
        %685 = vst [vmem:[#allocation2 + $0x50] sm:$0xff] %v669
        %686 = vst [vmem:[#allocation2 + $0x58] sm:$0xff] %v670
        %687 = vst [vmem:[#allocation2 + $0x60] sm:$0xff] %v671
        %688 = vst [vmem:[#allocation2 + $0x68] sm:$0xff] %v672
        %689 = vst [vmem:[#allocation2 + $0x70] sm:$0xff] %v673
        %690 = vst [vmem:[#allocation2 + $0x78] sm:$0xff] %v674
        %p691 = scmp.eq.s32.totalorder %s34, 2
        // Predicated region
        $region81: #{gnn_node_forward.8} parent=47 // pred_check
          %p692 = pneg %p691
        $region82: #{gnn_node_forward.8} parent=47 // pred_check_branch
          %694 = sbr.rel (%p692) target = $region84
        $region83: #{gnn_node_forward.8} parent=47 // pred_region
          %v695 = vld [vmem:[#allocation2] sm:$0xff]
          %v696 = vld [vmem:[#allocation2 + $0x8] sm:$0xff]
          %v697 = vld [vmem:[#allocation2 + $0x10] sm:$0xff]
          %v698 = vld [vmem:[#allocation2 + $0x18] sm:$0xff]
          %v699 = vld [vmem:[#allocation2 + $0x20] sm:$0xff]
          %v700 = vld [vmem:[#allocation2 + $0x28] sm:$0xff]
          %v701 = vld [vmem:[#allocation2 + $0x30] sm:$0xff]
          %v702 = vld [vmem:[#allocation2 + $0x38] sm:$0xff]
          %v703 = vld [vmem:[#allocation2 + $0x40] sm:$0xff]
          %v704 = vld [vmem:[#allocation2 + $0x48] sm:$0xff]
          %v705 = vld [vmem:[#allocation2 + $0x50] sm:$0xff]
          %v706 = vld [vmem:[#allocation2 + $0x58] sm:$0xff]
          %v707 = vld [vmem:[#allocation2 + $0x60] sm:$0xff]
          %v708 = vld [vmem:[#allocation2 + $0x68] sm:$0xff]
          %v709 = vld [vmem:[#allocation2 + $0x70] sm:$0xff]
          %v710 = vld [vmem:[#allocation2 + $0x78] sm:$0xff]
          %v711 = vld [vmem:[#allocation8] sm:$0x3]
          %v713 = vlaneseq
          %v714 = vshrl.u32 %v713, 7
          %v715 = vsub.s32 0, %v714
          %v716 = vrot.slane %v711, %v715
          %v717 = vlaneseq
          %v718 = vshrl.u32 %v717, 7
          %v719 = vsub.s32 1, %v718
          %v720 = vrot.slane %v711, %v719
          %v723 = vadd.f32 %v695, %v716
          %v724 = vadd.f32 %v696, %v720
          %v725 = vadd.f32 %v697, %v716
          %v726 = vadd.f32 %v698, %v720
          %v727 = vadd.f32 %v699, %v716
          %v728 = vadd.f32 %v700, %v720
          %v729 = vadd.f32 %v701, %v716
          %v730 = vadd.f32 %v702, %v720
          %v731 = vadd.f32 %v703, %v716
          %v732 = vadd.f32 %v704, %v720
          %v733 = vadd.f32 %v705, %v716
          %v734 = vadd.f32 %v706, %v720
          %v735 = vadd.f32 %v707, %v716
          %v736 = vadd.f32 %v708, %v720
          %v737 = vadd.f32 %v709, %v716
          %v738 = vadd.f32 %v710, %v720
          %vm739 = vcmp.gt.f32.partialorder %v723, 0.0
          %vm740 = vcmp.gt.f32.partialorder %v724, 0.0
          %vm741 = vcmp.gt.f32.partialorder %v725, 0.0
          %vm742 = vcmp.gt.f32.partialorder %v726, 0.0
          %vm743 = vcmp.gt.f32.partialorder %v727, 0.0
          %vm744 = vcmp.gt.f32.partialorder %v728, 0.0
          %vm745 = vcmp.gt.f32.partialorder %v729, 0.0
          %vm746 = vcmp.gt.f32.partialorder %v730, 0.0
          %vm747 = vcmp.gt.f32.partialorder %v731, 0.0
          %vm748 = vcmp.gt.f32.partialorder %v732, 0.0
          %vm749 = vcmp.gt.f32.partialorder %v733, 0.0
          %vm750 = vcmp.gt.f32.partialorder %v734, 0.0
          %vm751 = vcmp.gt.f32.partialorder %v735, 0.0
          %vm752 = vcmp.gt.f32.partialorder %v736, 0.0
          %vm753 = vcmp.gt.f32.partialorder %v737, 0.0
          %vm754 = vcmp.gt.f32.partialorder %v738, 0.0
          %v755 = vmul.f32 %v723, 0.1
          %v756 = vmul.f32 %v724, 0.1
          %v757 = vmul.f32 %v725, 0.1
          %v758 = vmul.f32 %v726, 0.1
          %v759 = vmul.f32 %v727, 0.1
          %v760 = vmul.f32 %v728, 0.1
          %v761 = vmul.f32 %v729, 0.1
          %v762 = vmul.f32 %v730, 0.1
          %v763 = vmul.f32 %v731, 0.1
          %v764 = vmul.f32 %v732, 0.1
          %v765 = vmul.f32 %v733, 0.1
          %v766 = vmul.f32 %v734, 0.1
          %v767 = vmul.f32 %v735, 0.1
          %v768 = vmul.f32 %v736, 0.1
          %v769 = vmul.f32 %v737, 0.1
          %v770 = vmul.f32 %v738, 0.1
          %v771 = vsel %vm739, %v723, %v755
          %v772 = vsel %vm740, %v724, %v756
          %v773 = vsel %vm741, %v725, %v757
          %v774 = vsel %vm742, %v726, %v758
          %v775 = vsel %vm743, %v727, %v759
          %v776 = vsel %vm744, %v728, %v760
          %v777 = vsel %vm745, %v729, %v761
          %v778 = vsel %vm746, %v730, %v762
          %v779 = vsel %vm747, %v731, %v763
          %v780 = vsel %vm748, %v732, %v764
          %v781 = vsel %vm749, %v733, %v765
          %v782 = vsel %vm750, %v734, %v766
          %v783 = vsel %vm751, %v735, %v767
          %v784 = vsel %vm752, %v736, %v768
          %v785 = vsel %vm753, %v737, %v769
          %v786 = vsel %vm754, %v738, %v770
          %v787 = vld [vmem:[#allocation9] sm:$0xf]
          %v788 = vld [vmem:[#allocation9 + $0x4] sm:$0xf]
          %v789 = vld [vmem:[#allocation9 + $0x8] sm:$0xf]
          %v790 = vld [vmem:[#allocation9 + $0xc] sm:$0xf]
          %v791 = vld [vmem:[#allocation9 + $0x10] sm:$0xf]
          %v792 = vld [vmem:[#allocation9 + $0x14] sm:$0xf]
          %v793 = vld [vmem:[#allocation9 + $0x18] sm:$0xf]
          %v794 = vld [vmem:[#allocation9 + $0x1c] sm:$0xf]
          %v795 = vld [vmem:[#allocation9 + $0x20] sm:$0xf]
          %v796 = vld [vmem:[#allocation9 + $0x24] sm:$0xf]
          %v797 = vld [vmem:[#allocation9 + $0x28] sm:$0xf]
          %v798 = vld [vmem:[#allocation9 + $0x2c] sm:$0xf]
          %v799 = vld [vmem:[#allocation9 + $0x30] sm:$0xf]
          %v800 = vld [vmem:[#allocation9 + $0x34] sm:$0xf]
          %v801 = vld [vmem:[#allocation9 + $0x38] sm:$0xf]
          %v802 = vld [vmem:[#allocation9 + $0x3c] sm:$0xf]
          %v803 = vld [vmem:[#allocation9 + $0x40] sm:$0xf]
          %v804 = vld [vmem:[#allocation9 + $0x44] sm:$0xf]
          %v805 = vld [vmem:[#allocation9 + $0x48] sm:$0xf]
          %v806 = vld [vmem:[#allocation9 + $0x4c] sm:$0xf]
          %v807 = vld [vmem:[#allocation9 + $0x50] sm:$0xf]
          %v808 = vld [vmem:[#allocation9 + $0x54] sm:$0xf]
          %v809 = vld [vmem:[#allocation9 + $0x58] sm:$0xf]
          %v810 = vld [vmem:[#allocation9 + $0x5c] sm:$0xf]
          %v811 = vld [vmem:[#allocation9 + $0x60] sm:$0xf]
          %v812 = vld [vmem:[#allocation9 + $0x64] sm:$0xf]
          %v813 = vld [vmem:[#allocation9 + $0x68] sm:$0xf]
          %v814 = vld [vmem:[#allocation9 + $0x6c] sm:$0xf]
          %v815 = vld [vmem:[#allocation9 + $0x70] sm:$0xf]
          %v816 = vld [vmem:[#allocation9 + $0x74] sm:$0xf]
          %v817 = vld [vmem:[#allocation9 + $0x78] sm:$0xf]
          %v818 = vld [vmem:[#allocation9 + $0x7c] sm:$0xf]
          %v819 = vld [vmem:[#allocation11] sm:$0x1]
          %v820 = vpack.c.bf16 %v773, %v771
          %v821 = vpack.c.bf16 %v774, %v772
          %v822 = vpack.c.bf16 %v777, %v775
          %v823 = vpack.c.bf16 %v778, %v776
          %v824 = vpack.c.bf16 %v781, %v779
          %v825 = vpack.c.bf16 %v782, %v780
          %v826 = vpack.c.bf16 %v785, %v783
          %v827 = vpack.c.bf16 %v786, %v784
          %v829 = vlaneseq
          %v830 = vshrl.u32 %v829, 7
          %v831 = vsub.s32 0, %v830
          %v832 = vrot.slane %v819, %v831
          %v866 = vunpack.c.l.b16 %v787
          %v867 = vunpack.c.l.b16 %v788
          %v868 = vunpack.c.l.b16 %v789
          %v869 = vunpack.c.l.b16 %v790
          %v870 = vunpack.c.l.b16 %v791
          %v871 = vunpack.c.l.b16 %v792
          %v872 = vunpack.c.l.b16 %v793
          %v873 = vunpack.c.l.b16 %v794
          %v874 = vunpack.c.l.b16 %v795
          %v875 = vunpack.c.l.b16 %v796
          %v876 = vunpack.c.l.b16 %v797
          %v877 = vunpack.c.l.b16 %v798
          %v878 = vunpack.c.l.b16 %v799
          %v879 = vunpack.c.l.b16 %v800
          %v880 = vunpack.c.l.b16 %v801
          %v881 = vunpack.c.l.b16 %v802
          %v882 = vunpack.c.l.b16 %v803
          %v883 = vunpack.c.l.b16 %v804
          %v884 = vunpack.c.l.b16 %v805
          %v885 = vunpack.c.l.b16 %v806
          %v886 = vunpack.c.l.b16 %v807
          %v887 = vunpack.c.l.b16 %v808
          %v888 = vunpack.c.l.b16 %v809
          %v889 = vunpack.c.l.b16 %v810
          %v890 = vunpack.c.l.b16 %v811
          %v891 = vunpack.c.l.b16 %v812
          %v892 = vunpack.c.l.b16 %v813
          %v893 = vunpack.c.l.b16 %v814
          %v894 = vunpack.c.l.b16 %v815
          %v895 = vunpack.c.l.b16 %v816
          %v896 = vunpack.c.l.b16 %v817
          %v897 = vunpack.c.l.b16 %v818
          %v898 = vpack.c.b16 %v867, %v866
          %v899 = vpack.c.b16 %v869, %v868
          %v900 = vpack.c.b16 %v871, %v870
          %v901 = vpack.c.b16 %v873, %v872
          %v902 = vpack.c.b16 %v875, %v874
          %v903 = vpack.c.b16 %v877, %v876
          %v904 = vpack.c.b16 %v879, %v878
          %v905 = vpack.c.b16 %v881, %v880
          %v906 = vpack.c.b16 %v883, %v882
          %v907 = vpack.c.b16 %v885, %v884
          %v908 = vpack.c.b16 %v887, %v886
          %v909 = vpack.c.b16 %v889, %v888
          %v910 = vpack.c.b16 %v891, %v890
          %v911 = vpack.c.b16 %v893, %v892
          %v912 = vpack.c.b16 %v895, %v894
          %v913 = vpack.c.b16 %v897, %v896
          %930 = vmatprep.subr.bf16.mxu0 0
          %931 = vmatpush1.bf16.msra.mxu0 %v898
          %932 = vmatprep.subr.bf16.mxu0 0
          %933 = vmatpush1.bf16.msra.mxu0 %v899
          %934 = vmatprep.subr.bf16.mxu0 0
          %935 = vmatpush1.bf16.msra.mxu0 %v900
          %936 = vmatprep.subr.bf16.mxu0 0
          %937 = vmatpush1.bf16.msra.mxu0 %v901
          %938 = vmatprep.subr.bf16.mxu0 0
          %939 = vmatpush1.bf16.msra.mxu0 %v902
          %940 = vmatprep.subr.bf16.mxu0 0
          %941 = vmatpush1.bf16.msra.mxu0 %v903
          %942 = vmatprep.subr.bf16.mxu0 0
          %943 = vmatpush1.bf16.msra.mxu0 %v904
          %944 = vmatprep.subr.bf16.mxu0 0
          %945 = vmatpush1.bf16.msra.mxu0 %v905
          %946 = vmatprep.subr.bf16.mxu0 0
          %947 = vmatpush1.bf16.msra.mxu0 %v906
          %948 = vmatprep.subr.bf16.mxu0 0
          %949 = vmatpush1.bf16.msra.mxu0 %v907
          %950 = vmatprep.subr.bf16.mxu0 0
          %951 = vmatpush1.bf16.msra.mxu0 %v908
          %952 = vmatprep.subr.bf16.mxu0 0
          %953 = vmatpush1.bf16.msra.mxu0 %v909
          %954 = vmatprep.subr.bf16.mxu0 0
          %955 = vmatpush1.bf16.msra.mxu0 %v910
          %956 = vmatprep.subr.bf16.mxu0 0
          %957 = vmatpush1.bf16.msra.mxu0 %v911
          %958 = vmatprep.subr.bf16.mxu0 0
          %959 = vmatpush1.bf16.msra.mxu0 %v912
          %960 = vmatprep.subr.bf16.mxu0 0
          %961 = vmatpush1.bf16.msra.mxu0 %v913
          %962 = vmatprep.mubr.bf16.mxu0 %v821
          %963 = vmatmul.mubr.bf16.gmra.mrb[0].mxu0 %v820
          %v964 = vpop.f32.mrb[0].mxu0
          %v965 = vadd.f32 %v832, %v964
          %v966 = vpop.f32.mrb[0].mxu0
          %v967 = vpop.f32.mrb[0].mxu0
          %v968 = vadd.f32 %v832, %v967
          %v969 = vpop.f32.mrb[0].mxu0
          %970 = vmatprep.mubr.bf16.mxu0 %v823
          %971 = vmatmul.mubr.bf16.gmra.mrb[0].mxu0 %v822
          %v972 = vpop.f32.mrb[0].mxu0
          %v973 = vadd.f32 %v832, %v972
          %v974 = vpop.f32.mrb[0].mxu0
          %v975 = vpop.f32.mrb[0].mxu0
          %v976 = vadd.f32 %v832, %v975
          %v977 = vpop.f32.mrb[0].mxu0
          %978 = vmatprep.mubr.bf16.mxu0 %v825
          %979 = vmatmul.mubr.bf16.gmra.mrb[0].mxu0 %v824
          %v980 = vpop.f32.mrb[0].mxu0
          %v981 = vadd.f32 %v832, %v980
          %v982 = vpop.f32.mrb[0].mxu0
          %v983 = vpop.f32.mrb[0].mxu0
          %v984 = vadd.f32 %v832, %v983
          %v985 = vpop.f32.mrb[0].mxu0
          %986 = vmatprep.mubr.bf16.mxu0 %v827
          %987 = vmatmul.mubr.bf16.gmra.mrb[0].mxu0 %v826
          %v988 = vpop.f32.mrb[0].mxu0
          %v989 = vadd.f32 %v832, %v988
          %v990 = vpop.f32.mrb[0].mxu0
          %v991 = vpop.f32.mrb[0].mxu0
          %v992 = vadd.f32 %v832, %v991
          %v993 = vpop.f32.mrb[0].mxu0
          %994 = vdwg.mxu0
          %vm995 = vcmp.gt.f32.partialorder %v965, 0.0
          %vm996 = vcmp.gt.f32.partialorder %v968, 0.0
          %vm997 = vcmp.gt.f32.partialorder %v973, 0.0
          %vm998 = vcmp.gt.f32.partialorder %v976, 0.0
          %vm999 = vcmp.gt.f32.partialorder %v981, 0.0
          %vm1000 = vcmp.gt.f32.partialorder %v984, 0.0
          %vm1001 = vcmp.gt.f32.partialorder %v989, 0.0
          %vm1002 = vcmp.gt.f32.partialorder %v992, 0.0
          %v1003 = vmul.f32 %v965, 0.1
          %v1004 = vmul.f32 %v968, 0.1
          %v1005 = vmul.f32 %v973, 0.1
          %v1006 = vmul.f32 %v976, 0.1
          %v1007 = vmul.f32 %v981, 0.1
          %v1008 = vmul.f32 %v984, 0.1
          %v1009 = vmul.f32 %v989, 0.1
          %v1010 = vmul.f32 %v992, 0.1
          %v1011 = vsel %vm995, %v965, %v1003
          %v1012 = vsel %vm996, %v968, %v1004
          %v1013 = vsel %vm997, %v973, %v1005
          %v1014 = vsel %vm998, %v976, %v1006
          %v1015 = vsel %vm999, %v981, %v1007
          %v1016 = vsel %vm1000, %v984, %v1008
          %v1017 = vsel %vm1001, %v989, %v1009
          %v1018 = vsel %vm1002, %v992, %v1010
          %v1019 = vld [vmem:[#allocation12] sm:$0xf]
          %v1020 = vld [vmem:[#allocation12 + $0x4] sm:$0xf]
          %v1021 = vld [vmem:[#allocation12 + $0x8] sm:$0xf]
          %v1022 = vld [vmem:[#allocation12 + $0xc] sm:$0xf]
          %v1023 = vld [vmem:[#allocation12 + $0x10] sm:$0xf]
          %v1024 = vld [vmem:[#allocation12 + $0x14] sm:$0xf]
          %v1025 = vld [vmem:[#allocation12 + $0x18] sm:$0xf]
          %v1026 = vld [vmem:[#allocation12 + $0x1c] sm:$0xf]
          %v1027 = vld [vmem:[#allocation12 + $0x20] sm:$0xf]
          %v1028 = vld [vmem:[#allocation12 + $0x24] sm:$0xf]
          %v1029 = vld [vmem:[#allocation12 + $0x28] sm:$0xf]
          %v1030 = vld [vmem:[#allocation12 + $0x2c] sm:$0xf]
          %v1031 = vld [vmem:[#allocation12 + $0x30] sm:$0xf]
          %v1032 = vld [vmem:[#allocation12 + $0x34] sm:$0xf]
          %v1033 = vld [vmem:[#allocation12 + $0x38] sm:$0xf]
          %v1034 = vld [vmem:[#allocation12 + $0x3c] sm:$0xf]
          %v1035 = vld [vmem:[#allocation14] sm:$0x1]
          %v1036 = vpack.c.bf16 %v1012, %v1011
          %v1037 = vpack.c.bf16 %v1014, %v1013
          %v1038 = vpack.c.bf16 %v1016, %v1015
          %v1039 = vpack.c.bf16 %v1018, %v1017
          %v1041 = vlaneseq
          %v1042 = vshrl.u32 %v1041, 7
          %v1043 = vsub.s32 0, %v1042
          %v1044 = vrot.slane %v1035, %v1043
          %v1062 = vunpack.c.l.b16 %v1019
          %v1063 = vunpack.c.l.b16 %v1020
          %v1064 = vunpack.c.l.b16 %v1021
          %v1065 = vunpack.c.l.b16 %v1022
          %v1066 = vunpack.c.l.b16 %v1023
          %v1067 = vunpack.c.l.b16 %v1024
          %v1068 = vunpack.c.l.b16 %v1025
          %v1069 = vunpack.c.l.b16 %v1026
          %v1070 = vunpack.c.l.b16 %v1027
          %v1071 = vunpack.c.l.b16 %v1028
          %v1072 = vunpack.c.l.b16 %v1029
          %v1073 = vunpack.c.l.b16 %v1030
          %v1074 = vunpack.c.l.b16 %v1031
          %v1075 = vunpack.c.l.b16 %v1032
          %v1076 = vunpack.c.l.b16 %v1033
          %v1077 = vunpack.c.l.b16 %v1034
          %v1078 = vpack.c.b16 %v1063, %v1062
          %v1079 = vpack.c.b16 %v1065, %v1064
          %v1080 = vpack.c.b16 %v1067, %v1066
          %v1081 = vpack.c.b16 %v1069, %v1068
          %v1082 = vpack.c.b16 %v1071, %v1070
          %v1083 = vpack.c.b16 %v1073, %v1072
          %v1084 = vpack.c.b16 %v1075, %v1074
          %v1085 = vpack.c.b16 %v1077, %v1076
          %1094 = vmatprep.subr.bf16.mxu0 0
          %1095 = vmatpush1.bf16.msra.mxu0 %v1078
          %1096 = vmatprep.subr.bf16.mxu0 0
          %1097 = vmatpush1.bf16.msra.mxu0 %v1079
          %1098 = vmatprep.subr.bf16.mxu0 0
          %1099 = vmatpush1.bf16.msra.mxu0 %v1080
          %1100 = vmatprep.subr.bf16.mxu0 0
          %1101 = vmatpush1.bf16.msra.mxu0 %v1081
          %1102 = vmatprep.subr.bf16.mxu0 0
          %1103 = vmatpush1.bf16.msra.mxu0 %v1082
          %1104 = vmatprep.subr.bf16.mxu0 0
          %1105 = vmatpush1.bf16.msra.mxu0 %v1083
          %1106 = vmatprep.subr.bf16.mxu0 0
          %1107 = vmatpush1.bf16.msra.mxu0 %v1084
          %1108 = vmatprep.subr.bf16.mxu0 0
          %1109 = vmatpush1.bf16.msra.mxu0 %v1085
          %1110 = vmatprep.subr.bf16.mxu0 0
          %1111 = vmatpush1.bf16.msra.mxu0 0
          %1112 = vmatprep.subr.bf16.mxu0 0
          %1113 = vmatpush1.bf16.msra.mxu0 0
          %1114 = vmatprep.subr.bf16.mxu0 0
          %1115 = vmatpush1.bf16.msra.mxu0 0
          %1116 = vmatprep.subr.bf16.mxu0 0
          %1117 = vmatpush1.bf16.msra.mxu0 0
          %1118 = vmatprep.subr.bf16.mxu0 0
          %1119 = vmatpush1.bf16.msra.mxu0 0
          %1120 = vmatprep.subr.bf16.mxu0 0
          %1121 = vmatpush1.bf16.msra.mxu0 0
          %1122 = vmatprep.subr.bf16.mxu0 0
          %1123 = vmatpush1.bf16.msra.mxu0 0
          %1124 = vmatprep.subr.bf16.mxu0 0
          %1125 = vmatpush1.bf16.msra.mxu0 0
          %1126 = vmatprep.mubr.bf16.mxu0 0
          %1127 = vmatmul.mubr.bf16.gmra.mrb[0].mxu0 %v1036
          %v1128 = vpop.f32.mrb[0].mxu0
          %v1129 = vadd.f32 %v1044, %v1128
          %v1130 = vpop.f32.mrb[0].mxu0
          %v1131 = vpop.f32.mrb[0].mxu0
          %v1132 = vadd.f32 %v1044, %v1131
          %v1133 = vpop.f32.mrb[0].mxu0
          %1134 = vmatprep.mubr.bf16.mxu0 0
          %1135 = vmatmul.mubr.bf16.gmra.mrb[0].mxu0 %v1037
          %v1136 = vpop.f32.mrb[0].mxu0
          %v1137 = vadd.f32 %v1044, %v1136
          %v1138 = vpop.f32.mrb[0].mxu0
          %v1139 = vpop.f32.mrb[0].mxu0
          %v1140 = vadd.f32 %v1044, %v1139
          %v1141 = vpop.f32.mrb[0].mxu0
          %1142 = vmatprep.mubr.bf16.mxu0 0
          %1143 = vmatmul.mubr.bf16.gmra.mrb[0].mxu0 %v1038
          %v1144 = vpop.f32.mrb[0].mxu0
          %v1145 = vadd.f32 %v1044, %v1144
          %v1146 = vpop.f32.mrb[0].mxu0
          %v1147 = vpop.f32.mrb[0].mxu0
          %v1148 = vadd.f32 %v1044, %v1147
          %v1149 = vpop.f32.mrb[0].mxu0
          %1150 = vmatprep.mubr.bf16.mxu0 0
          %1151 = vmatmul.mubr.bf16.gmra.mrb[0].mxu0 %v1039
          %v1152 = vpop.f32.mrb[0].mxu0
          %v1153 = vadd.f32 %v1044, %v1152
          %v1154 = vpop.f32.mrb[0].mxu0
          %v1155 = vpop.f32.mrb[0].mxu0
          %v1156 = vadd.f32 %v1044, %v1155
          %v1157 = vpop.f32.mrb[0].mxu0
          %1158 = vdwg.mxu0
          %1159 = vst [vmem:[%s418] sm:$0xff] %v1129
          %1160 = vst [vmem:[%s418 + $0x8] sm:$0xff] %v1132
          %1161 = vst [vmem:[%s418 + $0x10] sm:$0xff] %v1137
          %1162 = vst [vmem:[%s418 + $0x18] sm:$0xff] %v1140
          %1163 = vst [vmem:[%s418 + $0x20] sm:$0xff] %v1145
          %1164 = vst [vmem:[%s418 + $0x28] sm:$0xff] %v1148
          %1165 = vst [vmem:[%s418 + $0x30] sm:$0xff] %v1153
          %1166 = vst [vmem:[%s418 + $0x38] sm:$0xff] %v1156
        $region84: #{gnn_node_forward.8} parent=47 // pred_fallthru
          _
        %s1167 = sand.u32 %s208, 1
        %s1168 = scalar_lea.sflag [#allocation5], %s1167
        %s1169 = sand.u32 %s208, 1
        %s1170 = smul.addr %s1169, 64
        %s1171 = scalar_lea.vmem [#allocation15], %s1170
        // Predicated region
        $region85: #{gnn_node_forward.8} parent=47 // pred_check
          %p1172 = pneg %p218
        $region86: #{gnn_node_forward.8} parent=47 // pred_check_branch
          %1174 = sbr.rel (%p1172) target = $region88
        $region87: #{gnn_node_forward.8} parent=47 // pred_region
          %s1175 = smul.u32 8, %s33
          %s1177 = ssub.s32 1024, 1024
          %1178 = vsyncadd %s1168, %s1177
          %s1179 = smul.addr %s1175, 128
          %s1180 = scalar_lea.hbm %s7, %s1179
          %s1181 = sshll.u32 %s1171, 4
          %s1182 = int_to_ptr.vmem [resolvable:$true] %s1181
          %1187 = dma.vmem_to_hbm [thread:$0]  %s1182, 1024, %s1180, %s1168, 128, 128, 8
        $region88: #{gnn_node_forward.8} parent=47 // pred_fallthru
          _
      $region48: #{gnn_node_forward.8} parent=5 // pred_fallthru
        _
      %p1188 = scmp.le.s32.totalorder 2, %s24
      // Predicated region
      $region89: #{gnn_node_forward.8} parent=5 // pred_check
        %p1189 = pneg %p1188
      $region90: #{gnn_node_forward.8} parent=5 // pred_check_branch
        %1191 = sbr.rel (%p1189) target = $region92
      $region91: #{gnn_node_forward.8} parent=5 // pred_region
        %s1192 = ssub.s32 %s24, 2
        // Predicated region
        $region93: #{gnn_node_forward.8} parent=91 // pred_check
          %p1193 = pneg %p224
        $region94: #{gnn_node_forward.8} parent=91 // pred_check_branch
          %1195 = sbr.rel (%p1193) target = $region96
        $region95: #{gnn_node_forward.8} parent=91 // pred_region
          %s1196 = sand.u32 %s209, 1
          %s1197 = scalar_lea.sflag [#allocation5], %s1196
          %s1198 = sand.u32 %s209, 1
          %s1199 = smul.addr %s1198, 64
          %s1200 = scalar_lea.vmem [#allocation15], %s1199
          %1201 = dma.done %s1197, 1024
        $region96: #{gnn_node_forward.8} parent=91 // pred_fallthru
          _
      $region92: #{gnn_node_forward.8} parent=5 // pred_fallthru
        _
    $region6: #{gnn_node_forward.8} parent=1 // loop_footer
      %s28 = sadd.s32 1, %s24
    $region7: #{gnn_node_forward.8} parent=1 // loop_footer_branch
      %23 = sbr.rel target = $region3
    $region8: #{gnn_node_forward.8} parent=1 // loop_exit
      _
    %1202 = vsyncpa [#allocation4], 1
    %s1203 = scalar_lea.sflag [#allocation4], 1
    %1204 = vsyncpa %s1203, 1
    %1205 = vsyncpa [#allocation7], 1
    %s1206 = scalar_lea.sflag [#allocation7], 1
    %1207 = vsyncpa %s1206, 1
    %1208 = vsyncpa [#allocation10], 1
    %1209 = vsyncpa [#allocation13], 1
    %1210 = vsyncpa [#allocation5], 1
    %s1211 = scalar_lea.sflag [#allocation5], 1
    %1212 = vsyncpa %s1211, 1

// kernel: gnn_node_forward.7
$region0: #{gnn_node_forward.7}
  #allocation0 [shape = 'u32[]', space=smem, size = 0x4, offset = 0x4, fixed_abs, tag = 'smem constant byte address 0x4 - core index']
  #allocation1 [shape = 'u32[144,128]{1,0:T(1,128)}', space=vmem, size = 0x12000, scoped, tag = 'internal scratch']
  #allocation2 [shape = 'f32[128,128]{1,0:T(8,128)}', space=vmem, size = 0x10000, scoped, tag = 'scratch operand']
  #allocation3 [shape = 'f32[128,128]{1,0:T(8,128)}', space=vmem, size = 0x10000, scoped, tag = 'scratch operand']
  %s0 = inlined_call_operand.hbm [shape: bf16[128,128], index: 0, kind: input, shape index: {}]
  %s1 = inlined_call_operand.hbm [shape: bf16[128,128], index: 1, kind: input, shape index: {}]
  %s2 = inlined_call_operand.hbm [shape: bf16[128,128], index: 2, kind: input, shape index: {}]
  %s3 = inlined_call_operand.hbm [shape: bf16[128,128], index: 3, kind: input, shape index: {}]
  %s4 = inlined_call_operand.hbm [shape: bf16[3,128,128], index: 4, kind: input, shape index: {}]
  %s5 = inlined_call_operand.hbm [shape: f32[3,1,128], index: 5, kind: input, shape index: {}]
  %s6 = inlined_call_operand.hbm [shape: bf16[3,128,128], index: 6, kind: input, shape index: {}]
  %s7 = inlined_call_operand.hbm [shape: f32[3,1,128], index: 7, kind: input, shape index: {}]
  %s8 = inlined_call_operand.hbm [shape: bf16[3,128,128], index: 8, kind: output, shape index: {0}]
  %s9 = inlined_call_operand.hbm [shape: bf16[3,128,128], index: 9, kind: output, shape index: {1}]
  %10 = xla_tuple %s8, %s9
  %s11 = sld [smem:[#allocation0]]
  $region113: #{gnn_node_forward.7} parent=0
    _
  %s13 = ssub.s32 1, %s11
  %s14 = scalar_select 0, %s13, %s11
  $region1: #{gnn_node_forward.7} parent=0
    #allocation4 [shape = 'u8[32768]{0}', space=vmem, size = 0x8000, scoped, tag = 'input window, operand 0, single buffered']
    #allocation5 [shape = 's32[2]{0}', space=sflag, size = 0x8, scoped, tag = 'scoped memory for gnn_node_forward.7']
    #allocation6 [shape = 's32[2]{0}', space=sflag, size = 0x8, scoped, tag = 'scoped memory for gnn_node_forward.7']
    #allocation7 [shape = 'u8[32768]{0}', space=vmem, size = 0x8000, scoped, tag = 'input window, operand 1, single buffered']
    #allocation8 [shape = 's32[1]{0}', space=sflag, size = 0x4, scoped, tag = 'scoped memory for gnn_node_forward.7']
    #allocation9 [shape = 'u8[32768]{0}', space=vmem, size = 0x8000, scoped, tag = 'input window, operand 2, single buffered']
    #allocation10 [shape = 'u8[32768]{0}', space=vmem, size = 0x8000, scoped, tag = 'input window, operand 3, single buffered']
    #allocation11 [shape = 's32[1]{0}', space=sflag, size = 0x4, scoped, tag = 'scoped memory for gnn_node_forward.7']
    #allocation12 [shape = 'u8[65536]{0}', space=vmem, size = 0x10000, scoped, tag = 'input window, operand 4']
    #allocation13 [shape = 'u8[1024]{0}', space=vmem, size = 0x400, scoped, tag = 'input window, operand 5']
    #allocation14 [shape = 'u8[65536]{0}', space=vmem, size = 0x10000, scoped, tag = 'input window, operand 6']
    #allocation15 [shape = 'u8[1024]{0}', space=vmem, size = 0x400, scoped, tag = 'input window, operand 7']
    #allocation16 [shape = 'u8[65536]{0}', space=vmem, size = 0x10000, scoped, tag = 'output window, operand 0']
    #allocation17 [shape = 'u8[65536]{0}', space=vmem, size = 0x10000, scoped, tag = 'output window, operand 1']
    #allocation18 [shape = 's32[2]{0}', space=sflag, size = 0x8, scoped, tag = 'scoped memory for gnn_node_forward.7']
    %15 = vsyncpa [#allocation5], 0
    %16 = vsyncpa [#allocation8], 0
    %17 = vsyncpa [#allocation11], 0
    %18 = vsyncpa [#allocation6], 0
    %s19 = scalar_lea.sflag [#allocation6], 1
    %20 = vsyncpa %s19, 0
    %21 = vsyncpa [#allocation18], 0
    %s22 = scalar_lea.sflag [#allocation18], 1
    %23 = vsyncpa %s22, 0
    loop: start=0, step=1, limit=5
    $region2: #{gnn_node_forward.7} parent=1 // loop_pre_header
      _
    $region3: #{gnn_node_forward.7} parent=1 // loop_header
      %s25 = sphi 0, %s29
      %p26 = scmp.ge.s32.totalorder %s25, 5
      %s33 = sphi 0, %s33
      %s35 = sphi 0, %s33
      %s36 = sphi 0, %s35
      %s50 = sphi 0, %s36
      %s54 = sphi 0, %s54
      %s56 = sphi 0, %s54
      %s57 = sphi 0, %s56
      %s71 = sphi 0, %s57
      %s75 = sphi 0, %s75
      %s77 = sphi 0, %s75
      %s78 = sphi 0, %s77
      %s92 = sphi 0, %s78
      %s96 = sphi 0, %s96
      %s98 = sphi 0, %s96
      %s99 = sphi 0, %s98
      %s113 = sphi 0, %s99
      %s119 = sphi 0, %s121
      %s122 = sphi 0, %s119
      %s123 = sphi 0, %s122
      %s139 = sphi 0, %s123
      %s145 = sphi 0, %s147
      %s148 = sphi 0, %s145
      %s149 = sphi 0, %s148
      %s165 = sphi 0, %s149
      %s171 = sphi 0, %s173
      %s174 = sphi 0, %s171
      %s175 = sphi 0, %s174
      %s191 = sphi 0, %s175
      %s197 = sphi 0, %s199
      %s200 = sphi 0, %s197
      %s201 = sphi 0, %s200
      %s217 = sphi 0, %s201
      %s223 = sphi 0, %s225
      %s226 = sphi 0, %s223
      %s227 = sphi 0, %s226
      %s243 = sphi 0, %s227
      %s249 = sphi 0, %s251
      %s252 = sphi 0, %s249
      %s253 = sphi 0, %s252
      %s269 = sphi 0, %s253
    $region4: #{gnn_node_forward.7} parent=1 // loop_header_branch
      %28 = sbr.rel (%p26) target = $region8
    $region5: #{gnn_node_forward.7} parent=1 // loop_body
      %s30 = ssub.s32 %s25, 1
      %s31 = ssub.s32 %s25, 2
      %s32 = sadd.s32 %s25, 1
      %s34 = sadd.s32 %s33, 1
      %p37 = scmp.eq.s32.totalorder %s25, 2
      %p38 = scmp.ne.s32.totalorder %s33, %s35
      %p39 = scmp.eq.s32.totalorder %s25, 0
      %p40 = por %p38, %p39
      %p41 = scmp.ne.s32.totalorder %s33, %s35
      %p42 = scmp.eq.s32.totalorder %s30, 2
      %p43 = por %p41, %p42
      %p44 = scmp.ne.s32.totalorder %s35, %s36
      %p45 = scmp.eq.s32.totalorder %s30, 0
      %p46 = por %p44, %p45
      %p47 = scmp.ne.s32.totalorder %s35, %s36
      %p48 = scmp.eq.s32.totalorder %s31, 2
      %p49 = por %p47, %p48
      %p51 = scmp.ne.s32.totalorder %s36, %s50
      %p52 = scmp.eq.s32.totalorder %s31, 0
      %p53 = por %p51, %p52
      %s55 = sadd.s32 %s54, 1
      %p58 = scmp.eq.s32.totalorder %s25, 2
      %p59 = scmp.ne.s32.totalorder %s54, %s56
      %p60 = scmp.eq.s32.totalorder %s25, 0
      %p61 = por %p59, %p60
      %p62 = scmp.ne.s32.totalorder %s54, %s56
      %p63 = scmp.eq.s32.totalorder %s30, 2
      %p64 = por %p62, %p63
      %p65 = scmp.ne.s32.totalorder %s56, %s57
      %p66 = scmp.eq.s32.totalorder %s30, 0
      %p67 = por %p65, %p66
      %p68 = scmp.ne.s32.totalorder %s56, %s57
      %p69 = scmp.eq.s32.totalorder %s31, 2
      %p70 = por %p68, %p69
      %p72 = scmp.ne.s32.totalorder %s57, %s71
      %p73 = scmp.eq.s32.totalorder %s31, 0
      %p74 = por %p72, %p73
      %s76 = sadd.s32 %s75, 1
      %p79 = scmp.eq.s32.totalorder %s25, 2
      %p80 = scmp.ne.s32.totalorder %s75, %s77
      %p81 = scmp.eq.s32.totalorder %s25, 0
      %p82 = por %p80, %p81
      %p83 = scmp.ne.s32.totalorder %s75, %s77
      %p84 = scmp.eq.s32.totalorder %s30, 2
      %p85 = por %p83, %p84
      %p86 = scmp.ne.s32.totalorder %s77, %s78
      %p87 = scmp.eq.s32.totalorder %s30, 0
      %p88 = por %p86, %p87
      %p89 = scmp.ne.s32.totalorder %s77, %s78
      %p90 = scmp.eq.s32.totalorder %s31, 2
      %p91 = por %p89, %p90
      %p93 = scmp.ne.s32.totalorder %s78, %s92
      %p94 = scmp.eq.s32.totalorder %s31, 0
      %p95 = por %p93, %p94
      %s97 = sadd.s32 %s96, 1
      %p100 = scmp.eq.s32.totalorder %s25, 2
      %p101 = scmp.ne.s32.totalorder %s96, %s98
      %p102 = scmp.eq.s32.totalorder %s25, 0
      %p103 = por %p101, %p102
      %p104 = scmp.ne.s32.totalorder %s96, %s98
      %p105 = scmp.eq.s32.totalorder %s30, 2
      %p106 = por %p104, %p105
      %p107 = scmp.ne.s32.totalorder %s98, %s99
      %p108 = scmp.eq.s32.totalorder %s30, 0
      %p109 = por %p107, %p108
      %p110 = scmp.ne.s32.totalorder %s98, %s99
      %p111 = scmp.eq.s32.totalorder %s31, 2
      %p112 = por %p110, %p111
      %p114 = scmp.ne.s32.totalorder %s99, %s113
      %p115 = scmp.eq.s32.totalorder %s31, 0
      %p116 = por %p114, %p115
      %s117 = ssub.s32 %s25, %s32
      %p118 = scmp.eq.s32.totalorder %s117, 0
      %s120 = sadd.s32 %s119, 1
      %s121 = scalar_select %p118, %s119, %s120
      %p124 = pneg %p118
      %p125 = scmp.eq.s32.totalorder %s25, 2
      %p126 = por %p124, %p125
      %p127 = scmp.ne.s32.totalorder %s119, %s122
      %p128 = scmp.eq.s32.totalorder %s25, 0
      %p129 = por %p127, %p128
      %p130 = scmp.ne.s32.totalorder %s119, %s122
      %p131 = scmp.eq.s32.totalorder %s30, 2
      %p132 = por %p130, %p131
      %p133 = scmp.ne.s32.totalorder %s122, %s123
      %p134 = scmp.eq.s32.totalorder %s30, 0
      %p135 = por %p133, %p134
      %p136 = scmp.ne.s32.totalorder %s122, %s123
      %p137 = scmp.eq.s32.totalorder %s31, 2
      %p138 = por %p136, %p137
      %p140 = scmp.ne.s32.totalorder %s123, %s139
      %p141 = scmp.eq.s32.totalorder %s31, 0
      %p142 = por %p140, %p141
      %s143 = ssub.s32 %s25, %s32
      %p144 = scmp.eq.s32.totalorder %s143, 0
      %s146 = sadd.s32 %s145, 1
      %s147 = scalar_select %p144, %s145, %s146
      %p150 = pneg %p144
      %p151 = scmp.eq.s32.totalorder %s25, 2
      %p152 = por %p150, %p151
      %p153 = scmp.ne.s32.totalorder %s145, %s148
      %p154 = scmp.eq.s32.totalorder %s25, 0
      %p155 = por %p153, %p154
      %p156 = scmp.ne.s32.totalorder %s145, %s148
      %p157 = scmp.eq.s32.totalorder %s30, 2
      %p158 = por %p156, %p157
      %p159 = scmp.ne.s32.totalorder %s148, %s149
      %p160 = scmp.eq.s32.totalorder %s30, 0
      %p161 = por %p159, %p160
      %p162 = scmp.ne.s32.totalorder %s148, %s149
      %p163 = scmp.eq.s32.totalorder %s31, 2
      %p164 = por %p162, %p163
      %p166 = scmp.ne.s32.totalorder %s149, %s165
      %p167 = scmp.eq.s32.totalorder %s31, 0
      %p168 = por %p166, %p167
      %s169 = ssub.s32 %s25, %s32
      %p170 = scmp.eq.s32.totalorder %s169, 0
      %s172 = sadd.s32 %s171, 1
      %s173 = scalar_select %p170, %s171, %s172
      %p176 = pneg %p170
      %p177 = scmp.eq.s32.totalorder %s25, 2
      %p178 = por %p176, %p177
      %p179 = scmp.ne.s32.totalorder %s171, %s174
      %p180 = scmp.eq.s32.totalorder %s25, 0
      %p181 = por %p179, %p180
      %p182 = scmp.ne.s32.totalorder %s171, %s174
      %p183 = scmp.eq.s32.totalorder %s30, 2
      %p184 = por %p182, %p183
      %p185 = scmp.ne.s32.totalorder %s174, %s175
      %p186 = scmp.eq.s32.totalorder %s30, 0
      %p187 = por %p185, %p186
      %p188 = scmp.ne.s32.totalorder %s174, %s175
      %p189 = scmp.eq.s32.totalorder %s31, 2
      %p190 = por %p188, %p189
      %p192 = scmp.ne.s32.totalorder %s175, %s191
      %p193 = scmp.eq.s32.totalorder %s31, 0
      %p194 = por %p192, %p193
      %s195 = ssub.s32 %s25, %s32
      %p196 = scmp.eq.s32.totalorder %s195, 0
      %s198 = sadd.s32 %s197, 1
      %s199 = scalar_select %p196, %s197, %s198
      %p202 = pneg %p196
      %p203 = scmp.eq.s32.totalorder %s25, 2
      %p204 = por %p202, %p203
      %p205 = scmp.ne.s32.totalorder %s197, %s200
      %p206 = scmp.eq.s32.totalorder %s25, 0
      %p207 = por %p205, %p206
      %p208 = scmp.ne.s32.totalorder %s197, %s200
      %p209 = scmp.eq.s32.totalorder %s30, 2
      %p210 = por %p208, %p209
      %p211 = scmp.ne.s32.totalorder %s200, %s201
      %p212 = scmp.eq.s32.totalorder %s30, 0
      %p213 = por %p211, %p212
      %p214 = scmp.ne.s32.totalorder %s200, %s201
      %p215 = scmp.eq.s32.totalorder %s31, 2
      %p216 = por %p214, %p215
      %p218 = scmp.ne.s32.totalorder %s201, %s217
      %p219 = scmp.eq.s32.totalorder %s31, 0
      %p220 = por %p218, %p219
      %s221 = ssub.s32 %s25, %s32
      %p222 = scmp.eq.s32.totalorder %s221, 0
      %s224 = sadd.s32 %s223, 1
      %s225 = scalar_select %p222, %s223, %s224
      %p228 = pneg %p222
      %p229 = scmp.eq.s32.totalorder %s25, 2
      %p230 = por %p228, %p229
      %p231 = scmp.ne.s32.totalorder %s223, %s226
      %p232 = scmp.eq.s32.totalorder %s25, 0
      %p233 = por %p231, %p232
      %p234 = scmp.ne.s32.totalorder %s223, %s226
      %p235 = scmp.eq.s32.totalorder %s30, 2
      %p236 = por %p234, %p235
      %p237 = scmp.ne.s32.totalorder %s226, %s227
      %p238 = scmp.eq.s32.totalorder %s30, 0
      %p239 = por %p237, %p238
      %p240 = scmp.ne.s32.totalorder %s226, %s227
      %p241 = scmp.eq.s32.totalorder %s31, 2
      %p242 = por %p240, %p241
      %p244 = scmp.ne.s32.totalorder %s227, %s243
      %p245 = scmp.eq.s32.totalorder %s31, 0
      %p246 = por %p244, %p245
      %s247 = ssub.s32 %s25, %s32
      %p248 = scmp.eq.s32.totalorder %s247, 0
      %s250 = sadd.s32 %s249, 1
      %s251 = scalar_select %p248, %s249, %s250
      %p254 = pneg %p248
      %p255 = scmp.eq.s32.totalorder %s25, 2
      %p256 = por %p254, %p255
      %p257 = scmp.ne.s32.totalorder %s249, %s252
      %p258 = scmp.eq.s32.totalorder %s25, 0
      %p259 = por %p257, %p258
      %p260 = scmp.ne.s32.totalorder %s249, %s252
      %p261 = scmp.eq.s32.totalorder %s30, 2
      %p262 = por %p260, %p261
      %p263 = scmp.ne.s32.totalorder %s252, %s253
      %p264 = scmp.eq.s32.totalorder %s30, 0
      %p265 = por %p263, %p264
      %p266 = scmp.ne.s32.totalorder %s252, %s253
      %p267 = scmp.eq.s32.totalorder %s31, 2
      %p268 = por %p266, %p267
      %p270 = scmp.ne.s32.totalorder %s253, %s269
      %p271 = scmp.eq.s32.totalorder %s31, 0
      %p272 = por %p270, %p271
      %p273 = scmp.le.s32.totalorder 1, %s25
      %p274 = scmp.lt.s32.totalorder %s25, 4
      %p275 = pnand %p273, %p274
      %p276 = pneg %p275
      // Predicated region
      $region9: #{gnn_node_forward.7} parent=5 // pred_check
        _
      $region10: #{gnn_node_forward.7} parent=5 // pred_check_branch
        %278 = sbr.rel (%p275) target = $region12
      $region11: #{gnn_node_forward.7} parent=5 // pred_region
        %s279 = ssub.s32 %s25, 1
        // Predicated region
        $region13: #{gnn_node_forward.7} parent=11 // pred_check
          %p280 = pneg %p46
        $region14: #{gnn_node_forward.7} parent=11 // pred_check_branch
          %282 = sbr.rel (%p280) target = $region16
        $region15: #{gnn_node_forward.7} parent=11 // pred_region
          %s284 = ssub.s32 1024, 1024
          %285 = vsyncadd [#allocation5], %s284
          %s286 = sshll.u32 [#allocation4], 4
          %s287 = int_to_ptr.vmem [resolvable:$true] %s286
          %292 = dma.hbm_to_vmem [thread:$0]  %s0, 1024, %s287, [#allocation5], 64, 64, 4
        $region16: #{gnn_node_forward.7} parent=11 // pred_fallthru
          _
        // Predicated region
        $region17: #{gnn_node_forward.7} parent=11 // pred_check
          %p293 = pneg %p67
        $region18: #{gnn_node_forward.7} parent=11 // pred_check_branch
          %295 = sbr.rel (%p293) target = $region20
        $region19: #{gnn_node_forward.7} parent=11 // pred_region
          %s297 = ssub.s32 1024, 1024
          %298 = vsyncadd [#allocation8], %s297
          %s299 = sshll.u32 [#allocation7], 4
          %s300 = int_to_ptr.vmem [resolvable:$true] %s299
          %305 = dma.hbm_to_vmem [thread:$0]  %s1, 1024, %s300, [#allocation8], 64, 64, 4
        $region20: #{gnn_node_forward.7} parent=11 // pred_fallthru
          _
        // Predicated region
        $region21: #{gnn_node_forward.7} parent=11 // pred_check
          %p306 = pneg %p88
        $region22: #{gnn_node_forward.7} parent=11 // pred_check_branch
          %308 = sbr.rel (%p306) target = $region24
        $region23: #{gnn_node_forward.7} parent=11 // pred_region
          %s310 = ssub.s32 1024, 1024
          %311 = vsyncadd [#allocation8], %s310
          %s312 = sshll.u32 [#allocation9], 4
          %s313 = int_to_ptr.vmem [resolvable:$true] %s312
          %318 = dma.hbm_to_vmem [thread:$0]  %s2, 1024, %s313, [#allocation8], 64, 64, 4
        $region24: #{gnn_node_forward.7} parent=11 // pred_fallthru
          _
        // Predicated region
        $region25: #{gnn_node_forward.7} parent=11 // pred_check
          %p319 = pneg %p109
        $region26: #{gnn_node_forward.7} parent=11 // pred_check_branch
          %321 = sbr.rel (%p319) target = $region28
        $region27: #{gnn_node_forward.7} parent=11 // pred_region
          %s323 = ssub.s32 1024, 1024
          %324 = vsyncadd [#allocation11], %s323
          %s325 = sshll.u32 [#allocation10], 4
          %s326 = int_to_ptr.vmem [resolvable:$true] %s325
          %331 = dma.hbm_to_vmem [thread:$0]  %s3, 1024, %s326, [#allocation11], 64, 64, 4
        $region28: #{gnn_node_forward.7} parent=11 // pred_fallthru
          _
      $region12: #{gnn_node_forward.7} parent=5 // pred_fallthru
        _
      %p332 = scmp.lt.s32.totalorder %s25, 3
      // Predicated region
      $region29: #{gnn_node_forward.7} parent=5 // pred_check
        %p333 = pneg %p332
      $region30: #{gnn_node_forward.7} parent=5 // pred_check_branch
        %335 = sbr.rel (%p333) target = $region32
      $region31: #{gnn_node_forward.7} parent=5 // pred_region
        // Predicated region
        $region33: #{gnn_node_forward.7} parent=31 // pred_check
          %p336 = pneg %p129
        $region34: #{gnn_node_forward.7} parent=31 // pred_check_branch
          %338 = sbr.rel (%p336) target = $region36
        $region35: #{gnn_node_forward.7} parent=31 // pred_region
          %s339 = sand.u32 %s25, 1
          %s340 = scalar_lea.sflag [#allocation5], %s339
          %s341 = sand.u32 %s119, 1
          %s342 = smul.addr %s341, 64
          %s343 = scalar_lea.vmem [#allocation12], %s342
          %s345 = ssub.s32 1024, 1024
          %346 = vsyncadd %s340, %s345
          %s347 = smul.addr %s25, 16
          %s348 = smul.addr %s347, 64
          %s349 = scalar_lea.hbm %s4, %s348
          %s350 = sshll.u32 %s343, 4
          %s351 = int_to_ptr.vmem [resolvable:$true] %s350
          %356 = dma.hbm_to_vmem [thread:$0]  %s349, 1024, %s351, %s340, 64, 64, 4
        $region36: #{gnn_node_forward.7} parent=31 // pred_fallthru
          _
        // Predicated region
        $region37: #{gnn_node_forward.7} parent=31 // pred_check
          %p357 = pneg %p155
        $region38: #{gnn_node_forward.7} parent=31 // pred_check_branch
          %359 = sbr.rel (%p357) target = $region40
        $region39: #{gnn_node_forward.7} parent=31 // pred_region
          %s360 = sand.u32 %s25, 1
          %s361 = scalar_lea.sflag [#allocation5], %s360
          %s362 = sand.u32 %s145, 1
          %s363 = scalar_lea.vmem [#allocation13], %s362
          %s365 = ssub.s32 16, 16
          %366 = vsyncadd %s361, %s365
          %s367 = smul.addr %s25, 16
          %s368 = scalar_lea.hbm %s5, %s367
          %s370 = sshll.u32 %s363, 4
          %s371 = int_to_ptr.vmem [resolvable:$true] %s370
          %373 = dma.hbm_to_vmem [thread:$0]  %s368, 16, %s371, %s361
        $region40: #{gnn_node_forward.7} parent=31 // pred_fallthru
          _
        // Predicated region
        $region41: #{gnn_node_forward.7} parent=31 // pred_check
          %p374 = pneg %p181
        $region42: #{gnn_node_forward.7} parent=31 // pred_check_branch
          %376 = sbr.rel (%p374) target = $region44
        $region43: #{gnn_node_forward.7} parent=31 // pred_region
          %s377 = sand.u32 %s25, 1
          %s378 = scalar_lea.sflag [#allocation5], %s377
          %s379 = sand.u32 %s171, 1
          %s380 = smul.addr %s379, 64
          %s381 = scalar_lea.vmem [#allocation14], %s380
          %s383 = ssub.s32 1024, 1024
          %384 = vsyncadd %s378, %s383
          %s385 = smul.addr %s25, 16
          %s386 = smul.addr %s385, 64
          %s387 = scalar_lea.hbm %s6, %s386
          %s388 = sshll.u32 %s381, 4
          %s389 = int_to_ptr.vmem [resolvable:$true] %s388
          %394 = dma.hbm_to_vmem [thread:$0]  %s387, 1024, %s389, %s378, 64, 64, 4
        $region44: #{gnn_node_forward.7} parent=31 // pred_fallthru
          _
        // Predicated region
        $region45: #{gnn_node_forward.7} parent=31 // pred_check
          %p395 = pneg %p207
        $region46: #{gnn_node_forward.7} parent=31 // pred_check_branch
          %397 = sbr.rel (%p395) target = $region48
        $region47: #{gnn_node_forward.7} parent=31 // pred_region
          %s398 = sand.u32 %s25, 1
          %s399 = scalar_lea.sflag [#allocation5], %s398
          %s400 = sand.u32 %s197, 1
          %s401 = scalar_lea.vmem [#allocation15], %s400
          %s403 = ssub.s32 16, 16
          %404 = vsyncadd %s399, %s403
          %s405 = smul.addr %s25, 16
          %s406 = scalar_lea.hbm %s7, %s405
          %s408 = sshll.u32 %s401, 4
          %s409 = int_to_ptr.vmem [resolvable:$true] %s408
          %411 = dma.hbm_to_vmem [thread:$0]  %s406, 16, %s409, %s399
        $region48: #{gnn_node_forward.7} parent=31 // pred_fallthru
          _
      $region32: #{gnn_node_forward.7} parent=5 // pred_fallthru
        _
      %p412 = scmp.le.s32.totalorder 1, %s25
      %p413 = scmp.lt.s32.totalorder %s25, 4
      %p414 = pnand %p412, %p413
      %p415 = pneg %p414
      // Predicated region
      $region49: #{gnn_node_forward.7} parent=5 // pred_check
        _
      $region50: #{gnn_node_forward.7} parent=5 // pred_check_branch
        %417 = sbr.rel (%p414) target = $region52
      $region51: #{gnn_node_forward.7} parent=5 // pred_region
        %s418 = ssub.s32 %s25, 1
        // Predicated region
        $region53: #{gnn_node_forward.7} parent=51 // pred_check
          %p419 = pneg %p46
        $region54: #{gnn_node_forward.7} parent=51 // pred_check_branch
          %421 = sbr.rel (%p419) target = $region56
        $region55: #{gnn_node_forward.7} parent=51 // pred_region
          %422 = dma.done [#allocation5], 1024
        $region56: #{gnn_node_forward.7} parent=51 // pred_fallthru
          _
        // Predicated region
        $region57: #{gnn_node_forward.7} parent=51 // pred_check
          %p423 = pneg %p67
        $region58: #{gnn_node_forward.7} parent=51 // pred_check_branch
          %425 = sbr.rel (%p423) target = $region60
        $region59: #{gnn_node_forward.7} parent=51 // pred_region
          %426 = dma.done [#allocation8], 1024
        $region60: #{gnn_node_forward.7} parent=51 // pred_fallthru
          _
        // Predicated region
        $region61: #{gnn_node_forward.7} parent=51 // pred_check
          %p427 = pneg %p88
        $region62: #{gnn_node_forward.7} parent=51 // pred_check_branch
          %429 = sbr.rel (%p427) target = $region64
        $region63: #{gnn_node_forward.7} parent=51 // pred_region
          %430 = dma.done [#allocation8], 1024
        $region64: #{gnn_node_forward.7} parent=51 // pred_fallthru
          _
        // Predicated region
        $region65: #{gnn_node_forward.7} parent=51 // pred_check
          %p431 = pneg %p109
        $region66: #{gnn_node_forward.7} parent=51 // pred_check_branch
          %433 = sbr.rel (%p431) target = $region68
        $region67: #{gnn_node_forward.7} parent=51 // pred_region
          %434 = dma.done [#allocation11], 1024
        $region68: #{gnn_node_forward.7} parent=51 // pred_fallthru
          _
        %s435 = sand.u32 %s30, 1
        %s436 = scalar_lea.sflag [#allocation5], %s435
        %s437 = sand.u32 %s122, 1
        %s438 = smul.addr %s437, 64
        %s439 = scalar_lea.vmem [#allocation12], %s438
        // Predicated region
        $region69: #{gnn_node_forward.7} parent=51 // pred_check
          %p440 = pneg %p135
        $region70: #{gnn_node_forward.7} parent=51 // pred_check_branch
          %442 = sbr.rel (%p440) target = $region72
        $region71: #{gnn_node_forward.7} parent=51 // pred_region
          %443 = dma.done %s436, 1024
        $region72: #{gnn_node_forward.7} parent=51 // pred_fallthru
          _
        %s444 = sand.u32 %s30, 1
        %s445 = scalar_lea.sflag [#allocation5], %s444
        %s446 = sand.u32 %s148, 1
        %s447 = scalar_lea.vmem [#allocation13], %s446
        // Predicated region
        $region73: #{gnn_node_forward.7} parent=51 // pred_check
          %p448 = pneg %p161
        $region74: #{gnn_node_forward.7} parent=51 // pred_check_branch
          %450 = sbr.rel (%p448) target = $region76
        $region75: #{gnn_node_forward.7} parent=51 // pred_region
          %451 = dma.done %s445, 16
        $region76: #{gnn_node_forward.7} parent=51 // pred_fallthru
          _
        %s452 = sand.u32 %s30, 1
        %s453 = scalar_lea.sflag [#allocation5], %s452
        %s454 = sand.u32 %s174, 1
        %s455 = smul.addr %s454, 64
        %s456 = scalar_lea.vmem [#allocation14], %s455
        // Predicated region
        $region77: #{gnn_node_forward.7} parent=51 // pred_check
          %p457 = pneg %p187
        $region78: #{gnn_node_forward.7} parent=51 // pred_check_branch
          %459 = sbr.rel (%p457) target = $region80
        $region79: #{gnn_node_forward.7} parent=51 // pred_region
          %460 = dma.done %s453, 1024
        $region80: #{gnn_node_forward.7} parent=51 // pred_fallthru
          _
        %s461 = sand.u32 %s30, 1
        %s462 = scalar_lea.sflag [#allocation5], %s461
        %s463 = sand.u32 %s200, 1
        %s464 = scalar_lea.vmem [#allocation15], %s463
        // Predicated region
        $region81: #{gnn_node_forward.7} parent=51 // pred_check
          %p465 = pneg %p213
        $region82: #{gnn_node_forward.7} parent=51 // pred_check_branch
          %467 = sbr.rel (%p465) target = $region84
        $region83: #{gnn_node_forward.7} parent=51 // pred_region
          %468 = dma.done %s462, 16
        $region84: #{gnn_node_forward.7} parent=51 // pred_fallthru
          _
        %p469 = pneg %p46
        %p470 = pneg %p43
        %p471 = pneg %p67
        %p472 = pneg %p64
        %p473 = pneg %p88
        %p474 = pneg %p85
        %p475 = pneg %p109
        %p476 = pneg %p106
        %s477 = sand.u32 %s30, 1
        %s478 = scalar_lea.sflag [#allocation5], %s477
        %s479 = sand.u32 %s122, 1
        %s480 = smul.addr %s479, 64
        %s481 = scalar_lea.vmem [#allocation12], %s480
        %p482 = pneg %p135
        %p483 = pneg %p132
        %s484 = sand.u32 %s30, 1
        %s485 = scalar_lea.sflag [#allocation5], %s484
        %s486 = sand.u32 %s148, 1
        %s487 = scalar_lea.vmem [#allocation13], %s486
        %p488 = pneg %p161
        %p489 = pneg %p158
        %s490 = sand.u32 %s30, 1
        %s491 = scalar_lea.sflag [#allocation5], %s490
        %s492 = sand.u32 %s174, 1
        %s493 = smul.addr %s492, 64
        %s494 = scalar_lea.vmem [#allocation14], %s493
        %p495 = pneg %p187
        %p496 = pneg %p184
        %s497 = sand.u32 %s30, 1
        %s498 = scalar_lea.sflag [#allocation5], %s497
        %s499 = sand.u32 %s200, 1
        %s500 = scalar_lea.vmem [#allocation15], %s499
        %p501 = pneg %p213
        %p502 = pneg %p210
        %p503 = pneg %p239
        %p504 = pneg %p236
        %s505 = sand.u32 %s226, 1
        %s506 = scalar_lea.sflag [#allocation6], %s505
        %s507 = sand.u32 %s226, 1
        %s508 = smul.addr %s507, 64
        %s509 = scalar_lea.vmem [#allocation16], %s508
        %p510 = pneg %p265
        %p511 = pneg %p262
        %s512 = sand.u32 %s252, 1
        %s513 = scalar_lea.sflag [#allocation18], %s512
        %s514 = sand.u32 %s252, 1
        %s515 = smul.addr %s514, 64
        %s516 = scalar_lea.vmem [#allocation17], %s515
        %p518 = scmp.eq.s32.totalorder %s30, 0
        // Predicated region
        $region85: #{gnn_node_forward.7} parent=51 // pred_check
          %p519 = pneg %p518
        $region86: #{gnn_node_forward.7} parent=51 // pred_check_branch
          %521 = sbr.rel (%p519) target = $region88
        $region87: #{gnn_node_forward.7} parent=51 // pred_region
          %v522 = vld [vmem:[#allocation9] sm:$0xf]
          %v523 = vld [vmem:[#allocation9 + $0x4] sm:$0xf]
          %v524 = vld [vmem:[#allocation9 + $0x8] sm:$0xf]
          %v525 = vld [vmem:[#allocation9 + $0xc] sm:$0xf]
          %v526 = vld [vmem:[#allocation9 + $0x10] sm:$0xf]
          %v527 = vld [vmem:[#allocation9 + $0x14] sm:$0xf]
          %v528 = vld [vmem:[#allocation9 + $0x18] sm:$0xf]
          %v529 = vld [vmem:[#allocation9 + $0x1c] sm:$0xf]
          %v530 = vld [vmem:[#allocation9 + $0x20] sm:$0xf]
          %v531 = vld [vmem:[#allocation9 + $0x24] sm:$0xf]
          %v532 = vld [vmem:[#allocation9 + $0x28] sm:$0xf]
          %v533 = vld [vmem:[#allocation9 + $0x2c] sm:$0xf]
          %v534 = vld [vmem:[#allocation9 + $0x30] sm:$0xf]
          %v535 = vld [vmem:[#allocation9 + $0x34] sm:$0xf]
          %v536 = vld [vmem:[#allocation9 + $0x38] sm:$0xf]
          %v537 = vld [vmem:[#allocation9 + $0x3c] sm:$0xf]
          %v538 = vunpack.c.l.bf16 %v522
          %v539 = vunpack.c.l.bf16 %v523
          %v540 = vunpack.c.l.bf16 %v524
          %v541 = vunpack.c.l.bf16 %v525
          %v542 = vunpack.c.l.bf16 %v526
          %v543 = vunpack.c.l.bf16 %v527
          %v544 = vunpack.c.l.bf16 %v528
          %v545 = vunpack.c.l.bf16 %v529
          %v546 = vunpack.c.l.bf16 %v530
          %v547 = vunpack.c.l.bf16 %v531
          %v548 = vunpack.c.l.bf16 %v532
          %v549 = vunpack.c.l.bf16 %v533
          %v550 = vunpack.c.l.bf16 %v534
          %v551 = vunpack.c.l.bf16 %v535
          %v552 = vunpack.c.l.bf16 %v536
          %v553 = vunpack.c.l.bf16 %v537
          %554 = vst [vmem:[#allocation2] sm:$0xff] %v538
          %555 = vst [vmem:[#allocation2 + $0x8] sm:$0xff] %v539
          %556 = vst [vmem:[#allocation2 + $0x10] sm:$0xff] %v540
          %557 = vst [vmem:[#allocation2 + $0x18] sm:$0xff] %v541
          %558 = vst [vmem:[#allocation2 + $0x20] sm:$0xff] %v542
          %559 = vst [vmem:[#allocation2 + $0x28] sm:$0xff] %v543
          %560 = vst [vmem:[#allocation2 + $0x30] sm:$0xff] %v544
          %561 = vst [vmem:[#allocation2 + $0x38] sm:$0xff] %v545
          %562 = vst [vmem:[#allocation2 + $0x40] sm:$0xff] %v546
          %563 = vst [vmem:[#allocation2 + $0x48] sm:$0xff] %v547
          %564 = vst [vmem:[#allocation2 + $0x50] sm:$0xff] %v548
          %565 = vst [vmem:[#allocation2 + $0x58] sm:$0xff] %v549
          %566 = vst [vmem:[#allocation2 + $0x60] sm:$0xff] %v550
          %567 = vst [vmem:[#allocation2 + $0x68] sm:$0xff] %v551
          %568 = vst [vmem:[#allocation2 + $0x70] sm:$0xff] %v552
          %569 = vst [vmem:[#allocation2 + $0x78] sm:$0xff] %v553
          %v570 = vld [vmem:[#allocation10] sm:$0xf]
          %v571 = vld [vmem:[#allocation10 + $0x4] sm:$0xf]
          %v572 = vld [vmem:[#allocation10 + $0x8] sm:$0xf]
          %v573 = vld [vmem:[#allocation10 + $0xc] sm:$0xf]
          %v574 = vld [vmem:[#allocation10 + $0x10] sm:$0xf]
          %v575 = vld [vmem:[#allocation10 + $0x14] sm:$0xf]
          %v576 = vld [vmem:[#allocation10 + $0x18] sm:$0xf]
          %v577 = vld [vmem:[#allocation10 + $0x1c] sm:$0xf]
          %v578 = vld [vmem:[#allocation10 + $0x20] sm:$0xf]
          %v579 = vld [vmem:[#allocation10 + $0x24] sm:$0xf]
          %v580 = vld [vmem:[#allocation10 + $0x28] sm:$0xf]
          %v581 = vld [vmem:[#allocation10 + $0x2c] sm:$0xf]
          %v582 = vld [vmem:[#allocation10 + $0x30] sm:$0xf]
          %v583 = vld [vmem:[#allocation10 + $0x34] sm:$0xf]
          %v584 = vld [vmem:[#allocation10 + $0x38] sm:$0xf]
          %v585 = vld [vmem:[#allocation10 + $0x3c] sm:$0xf]
          %v586 = vunpack.c.l.bf16 %v570
          %v587 = vunpack.c.l.bf16 %v571
          %v588 = vunpack.c.l.bf16 %v572
          %v589 = vunpack.c.l.bf16 %v573
          %v590 = vunpack.c.l.bf16 %v574
          %v591 = vunpack.c.l.bf16 %v575
          %v592 = vunpack.c.l.bf16 %v576
          %v593 = vunpack.c.l.bf16 %v577
          %v594 = vunpack.c.l.bf16 %v578
          %v595 = vunpack.c.l.bf16 %v579
          %v596 = vunpack.c.l.bf16 %v580
          %v597 = vunpack.c.l.bf16 %v581
          %v598 = vunpack.c.l.bf16 %v582
          %v599 = vunpack.c.l.bf16 %v583
          %v600 = vunpack.c.l.bf16 %v584
          %v601 = vunpack.c.l.bf16 %v585
          %602 = vst [vmem:[#allocation3] sm:$0xff] %v586
          %603 = vst [vmem:[#allocation3 + $0x8] sm:$0xff] %v587
          %604 = vst [vmem:[#allocation3 + $0x10] sm:$0xff] %v588
          %605 = vst [vmem:[#allocation3 + $0x18] sm:$0xff] %v589
          %606 = vst [vmem:[#allocation3 + $0x20] sm:$0xff] %v590
          %607 = vst [vmem:[#allocation3 + $0x28] sm:$0xff] %v591
          %608 = vst [vmem:[#allocation3 + $0x30] sm:$0xff] %v592
          %609 = vst [vmem:[#allocation3 + $0x38] sm:$0xff] %v593
          %610 = vst [vmem:[#allocation3 + $0x40] sm:$0xff] %v594
          %611 = vst [vmem:[#allocation3 + $0x48] sm:$0xff] %v595
          %612 = vst [vmem:[#allocation3 + $0x50] sm:$0xff] %v596
          %613 = vst [vmem:[#allocation3 + $0x58] sm:$0xff] %v597
          %614 = vst [vmem:[#allocation3 + $0x60] sm:$0xff] %v598
          %615 = vst [vmem:[#allocation3 + $0x68] sm:$0xff] %v599
          %616 = vst [vmem:[#allocation3 + $0x70] sm:$0xff] %v600
          %617 = vst [vmem:[#allocation3 + $0x78] sm:$0xff] %v601
        $region88: #{gnn_node_forward.7} parent=51 // pred_fallthru
          _
        %p618 = scmp.gt.s32.totalorder %s30, 0
        // Predicated region
        $region89: #{gnn_node_forward.7} parent=51 // pred_check
          %p619 = pneg %p618
        $region90: #{gnn_node_forward.7} parent=51 // pred_check_branch
          %621 = sbr.rel (%p619) target = $region92
        $region91: #{gnn_node_forward.7} parent=51 // pred_region
          %v622 = vld [vmem:[#allocation2] sm:$0xff]
          %v623 = vld [vmem:[#allocation2 + $0x8] sm:$0xff]
          %v624 = vld [vmem:[#allocation2 + $0x10] sm:$0xff]
          %v625 = vld [vmem:[#allocation2 + $0x18] sm:$0xff]
          %v626 = vld [vmem:[#allocation2 + $0x20] sm:$0xff]
          %v627 = vld [vmem:[#allocation2 + $0x28] sm:$0xff]
          %v628 = vld [vmem:[#allocation2 + $0x30] sm:$0xff]
          %v629 = vld [vmem:[#allocation2 + $0x38] sm:$0xff]
          %v630 = vld [vmem:[#allocation2 + $0x40] sm:$0xff]
          %v631 = vld [vmem:[#allocation2 + $0x48] sm:$0xff]
          %v632 = vld [vmem:[#allocation2 + $0x50] sm:$0xff]
          %v633 = vld [vmem:[#allocation2 + $0x58] sm:$0xff]
          %v634 = vld [vmem:[#allocation2 + $0x60] sm:$0xff]
          %v635 = vld [vmem:[#allocation2 + $0x68] sm:$0xff]
          %v636 = vld [vmem:[#allocation2 + $0x70] sm:$0xff]
          %v637 = vld [vmem:[#allocation2 + $0x78] sm:$0xff]
          %v638 = vpack.c.bf16 %v623, %v622
          %v639 = vpack.c.bf16 %v625, %v624
          %v640 = vpack.c.bf16 %v627, %v626
          %v641 = vpack.c.bf16 %v629, %v628
          %v642 = vpack.c.bf16 %v631, %v630
          %v643 = vpack.c.bf16 %v633, %v632
          %v644 = vpack.c.bf16 %v635, %v634
          %v645 = vpack.c.bf16 %v637, %v636
          %v646 = vld [vmem:[#allocation4] sm:$0xf]
          %v647 = vld [vmem:[#allocation4 + $0x4] sm:$0xf]
          %v648 = vld [vmem:[#allocation4 + $0x8] sm:$0xf]
          %v649 = vld [vmem:[#allocation4 + $0xc] sm:$0xf]
          %v650 = vld [vmem:[#allocation4 + $0x10] sm:$0xf]
          %v651 = vld [vmem:[#allocation4 + $0x14] sm:$0xf]
          %v652 = vld [vmem:[#allocation4 + $0x18] sm:$0xf]
          %v653 = vld [vmem:[#allocation4 + $0x1c] sm:$0xf]
          %v654 = vld [vmem:[#allocation4 + $0x20] sm:$0xf]
          %v655 = vld [vmem:[#allocation4 + $0x24] sm:$0xf]
          %v656 = vld [vmem:[#allocation4 + $0x28] sm:$0xf]
          %v657 = vld [vmem:[#allocation4 + $0x2c] sm:$0xf]
          %v658 = vld [vmem:[#allocation4 + $0x30] sm:$0xf]
          %v659 = vld [vmem:[#allocation4 + $0x34] sm:$0xf]
          %v660 = vld [vmem:[#allocation4 + $0x38] sm:$0xf]
          %v661 = vld [vmem:[#allocation4 + $0x3c] sm:$0xf]
          %v678 = vunpack.c.l.b16 %v646
          %v679 = vunpack.c.l.b16 %v647
          %v680 = vunpack.c.l.b16 %v648
          %v681 = vunpack.c.l.b16 %v649
          %v682 = vunpack.c.l.b16 %v650
          %v683 = vunpack.c.l.b16 %v651
          %v684 = vunpack.c.l.b16 %v652
          %v685 = vunpack.c.l.b16 %v653
          %v686 = vunpack.c.l.b16 %v654
          %v687 = vunpack.c.l.b16 %v655
          %v688 = vunpack.c.l.b16 %v656
          %v689 = vunpack.c.l.b16 %v657
          %v690 = vunpack.c.l.b16 %v658
          %v691 = vunpack.c.l.b16 %v659
          %v692 = vunpack.c.l.b16 %v660
          %v693 = vunpack.c.l.b16 %v661
          %v694 = vpack.c.b16 %v679, %v678
          %v695 = vpack.c.b16 %v681, %v680
          %v696 = vpack.c.b16 %v683, %v682
          %v697 = vpack.c.b16 %v685, %v684
          %v698 = vpack.c.b16 %v687, %v686
          %v699 = vpack.c.b16 %v689, %v688
          %v700 = vpack.c.b16 %v691, %v690
          %v701 = vpack.c.b16 %v693, %v692
          %710 = vmatprep.subr.bf16.mxu0 0
          %711 = vmatpush1.bf16.msra.mxu0 %v638
          %712 = vmatprep.subr.bf16.mxu0 0
          %713 = vmatpush1.bf16.msra.mxu0 %v639
          %714 = vmatprep.subr.bf16.mxu0 0
          %715 = vmatpush1.bf16.msra.mxu0 %v640
          %716 = vmatprep.subr.bf16.mxu0 0
          %717 = vmatpush1.bf16.msra.mxu0 %v641
          %718 = vmatprep.subr.bf16.mxu0 0
          %719 = vmatpush1.bf16.msra.mxu0 %v642
          %720 = vmatprep.subr.bf16.mxu0 0
          %721 = vmatpush1.bf16.msra.mxu0 %v643
          %722 = vmatprep.subr.bf16.mxu0 0
          %723 = vmatpush1.bf16.msra.mxu0 %v644
          %724 = vmatprep.subr.bf16.mxu0 0
          %725 = vmatpush1.bf16.msra.mxu0 %v645
          %726 = vmatprep.subr.bf16.mxu0 0
          %727 = vmatpush1.bf16.msra.mxu0 0
          %728 = vmatprep.subr.bf16.mxu0 0
          %729 = vmatpush1.bf16.msra.mxu0 0
          %730 = vmatprep.subr.bf16.mxu0 0
          %731 = vmatpush1.bf16.msra.mxu0 0
          %732 = vmatprep.subr.bf16.mxu0 0
          %733 = vmatpush1.bf16.msra.mxu0 0
          %734 = vmatprep.subr.bf16.mxu0 0
          %735 = vmatpush1.bf16.msra.mxu0 0
          %736 = vmatprep.subr.bf16.mxu0 0
          %737 = vmatpush1.bf16.msra.mxu0 0
          %738 = vmatprep.subr.bf16.mxu0 0
          %739 = vmatpush1.bf16.msra.mxu0 0
          %740 = vmatprep.subr.bf16.mxu0 0
          %741 = vmatpush1.bf16.msra.mxu0 0
          %742 = vmatprep.mubr.bf16.mxu0 0
          %743 = vmatmul.mubr.bf16.gmra.mrb[0].mxu0 %v694
          %v744 = vpop.f32.mrb[0].mxu0
          %v745 = vadd.f32 0.0, %v744
          %v746 = vpop.f32.mrb[0].mxu0
          %v747 = vpop.f32.mrb[0].mxu0
          %v748 = vadd.f32 0.0, %v747
          %v749 = vpop.f32.mrb[0].mxu0
          %750 = vmatprep.mubr.bf16.mxu0 0
          %751 = vmatmul.mubr.bf16.gmra.mrb[0].mxu0 %v695
          %v752 = vpop.f32.mrb[0].mxu0
          %v753 = vadd.f32 0.0, %v752
          %v754 = vpop.f32.mrb[0].mxu0
          %v755 = vpop.f32.mrb[0].mxu0
          %v756 = vadd.f32 0.0, %v755
          %v757 = vpop.f32.mrb[0].mxu0
          %758 = vmatprep.mubr.bf16.mxu0 0
          %759 = vmatmul.mubr.bf16.gmra.mrb[0].mxu0 %v696
          %v760 = vpop.f32.mrb[0].mxu0
          %v761 = vadd.f32 0.0, %v760
          %v762 = vpop.f32.mrb[0].mxu0
          %v763 = vpop.f32.mrb[0].mxu0
          %v764 = vadd.f32 0.0, %v763
          %v765 = vpop.f32.mrb[0].mxu0
          %766 = vmatprep.mubr.bf16.mxu0 0
          %767 = vmatmul.mubr.bf16.gmra.mrb[0].mxu0 %v697
          %v768 = vpop.f32.mrb[0].mxu0
          %v769 = vadd.f32 0.0, %v768
          %v770 = vpop.f32.mrb[0].mxu0
          %v771 = vpop.f32.mrb[0].mxu0
          %v772 = vadd.f32 0.0, %v771
          %v773 = vpop.f32.mrb[0].mxu0
          %774 = vmatprep.mubr.bf16.mxu0 0
          %775 = vmatmul.mubr.bf16.gmra.mrb[0].mxu0 %v698
          %v776 = vpop.f32.mrb[0].mxu0
          %v777 = vadd.f32 0.0, %v776
          %v778 = vpop.f32.mrb[0].mxu0
          %v779 = vpop.f32.mrb[0].mxu0
          %v780 = vadd.f32 0.0, %v779
          %v781 = vpop.f32.mrb[0].mxu0
          %782 = vmatprep.mubr.bf16.mxu0 0
          %783 = vmatmul.mubr.bf16.gmra.mrb[0].mxu0 %v699
          %v784 = vpop.f32.mrb[0].mxu0
          %v785 = vadd.f32 0.0, %v784
          %v786 = vpop.f32.mrb[0].mxu0
          %v787 = vpop.f32.mrb[0].mxu0
          %v788 = vadd.f32 0.0, %v787
          %v789 = vpop.f32.mrb[0].mxu0
          %790 = vmatprep.mubr.bf16.mxu0 0
          %791 = vmatmul.mubr.bf16.gmra.mrb[0].mxu0 %v700
          %v792 = vpop.f32.mrb[0].mxu0
          %v793 = vadd.f32 0.0, %v792
          %v794 = vpop.f32.mrb[0].mxu0
          %v795 = vpop.f32.mrb[0].mxu0
          %v796 = vadd.f32 0.0, %v795
          %v797 = vpop.f32.mrb[0].mxu0
          %798 = vmatprep.mubr.bf16.mxu0 0
          %799 = vmatmul.mubr.bf16.gmra.mrb[0].mxu0 %v701
          %v800 = vpop.f32.mrb[0].mxu0
          %v801 = vadd.f32 0.0, %v800
          %v802 = vpop.f32.mrb[0].mxu0
          %v803 = vpop.f32.mrb[0].mxu0
          %v804 = vadd.f32 0.0, %v803
          %v805 = vpop.f32.mrb[0].mxu0
          %806 = vdwg.mxu0
          %v807 = vld [vmem:[#allocation3] sm:$0xff]
          %v808 = vld [vmem:[#allocation3 + $0x8] sm:$0xff]
          %v809 = vld [vmem:[#allocation3 + $0x10] sm:$0xff]
          %v810 = vld [vmem:[#allocation3 + $0x18] sm:$0xff]
          %v811 = vld [vmem:[#allocation3 + $0x20] sm:$0xff]
          %v812 = vld [vmem:[#allocation3 + $0x28] sm:$0xff]
          %v813 = vld [vmem:[#allocation3 + $0x30] sm:$0xff]
          %v814 = vld [vmem:[#allocation3 + $0x38] sm:$0xff]
          %v815 = vld [vmem:[#allocation3 + $0x40] sm:$0xff]
          %v816 = vld [vmem:[#allocation3 + $0x48] sm:$0xff]
          %v817 = vld [vmem:[#allocation3 + $0x50] sm:$0xff]
          %v818 = vld [vmem:[#allocation3 + $0x58] sm:$0xff]
          %v819 = vld [vmem:[#allocation3 + $0x60] sm:$0xff]
          %v820 = vld [vmem:[#allocation3 + $0x68] sm:$0xff]
          %v821 = vld [vmem:[#allocation3 + $0x70] sm:$0xff]
          %v822 = vld [vmem:[#allocation3 + $0x78] sm:$0xff]
          %v823 = vadd.f32 %v807, %v745
          %v824 = vadd.f32 %v808, %v748
          %v825 = vadd.f32 %v809, %v753
          %v826 = vadd.f32 %v810, %v756
          %v827 = vadd.f32 %v811, %v761
          %v828 = vadd.f32 %v812, %v764
          %v829 = vadd.f32 %v813, %v769
          %v830 = vadd.f32 %v814, %v772
          %v831 = vadd.f32 %v815, %v777
          %v832 = vadd.f32 %v816, %v780
          %v833 = vadd.f32 %v817, %v785
          %v834 = vadd.f32 %v818, %v788
          %v835 = vadd.f32 %v819, %v793
          %v836 = vadd.f32 %v820, %v796
          %v837 = vadd.f32 %v821, %v801
          %v838 = vadd.f32 %v822, %v804
          %v839 = vpack.c.bf16 %v824, %v823
          %v840 = vpack.c.bf16 %v826, %v825
          %v841 = vpack.c.bf16 %v828, %v827
          %v842 = vpack.c.bf16 %v830, %v829
          %v843 = vpack.c.bf16 %v832, %v831
          %v844 = vpack.c.bf16 %v834, %v833
          %v845 = vpack.c.bf16 %v836, %v835
          %v846 = vpack.c.bf16 %v838, %v837
          %v847 = vld [vmem:[%s439] sm:$0xf]
          %v848 = vld [vmem:[%s439 + $0x4] sm:$0xf]
          %v849 = vld [vmem:[%s439 + $0x8] sm:$0xf]
          %v850 = vld [vmem:[%s439 + $0xc] sm:$0xf]
          %v851 = vld [vmem:[%s439 + $0x10] sm:$0xf]
          %v852 = vld [vmem:[%s439 + $0x14] sm:$0xf]
          %v853 = vld [vmem:[%s439 + $0x18] sm:$0xf]
          %v854 = vld [vmem:[%s439 + $0x1c] sm:$0xf]
          %v855 = vld [vmem:[%s439 + $0x20] sm:$0xf]
          %v856 = vld [vmem:[%s439 + $0x24] sm:$0xf]
          %v857 = vld [vmem:[%s439 + $0x28] sm:$0xf]
          %v858 = vld [vmem:[%s439 + $0x2c] sm:$0xf]
          %v859 = vld [vmem:[%s439 + $0x30] sm:$0xf]
          %v860 = vld [vmem:[%s439 + $0x34] sm:$0xf]
          %v861 = vld [vmem:[%s439 + $0x38] sm:$0xf]
          %v862 = vld [vmem:[%s439 + $0x3c] sm:$0xf]
          %v863 = vld [vmem:[%s447] sm:$0x1]
          %v865 = vlaneseq
          %v866 = vshrl.u32 %v865, 7
          %v867 = vsub.s32 0, %v866
          %v868 = vrot.slane %v863, %v867
          %v886 = vunpack.c.l.b16 %v847
          %v887 = vunpack.c.l.b16 %v848
          %v888 = vunpack.c.l.b16 %v849
          %v889 = vunpack.c.l.b16 %v850
          %v890 = vunpack.c.l.b16 %v851
          %v891 = vunpack.c.l.b16 %v852
          %v892 = vunpack.c.l.b16 %v853
          %v893 = vunpack.c.l.b16 %v854
          %v894 = vunpack.c.l.b16 %v855
          %v895 = vunpack.c.l.b16 %v856
          %v896 = vunpack.c.l.b16 %v857
          %v897 = vunpack.c.l.b16 %v858
          %v898 = vunpack.c.l.b16 %v859
          %v899 = vunpack.c.l.b16 %v860
          %v900 = vunpack.c.l.b16 %v861
          %v901 = vunpack.c.l.b16 %v862
          %v902 = vpack.c.b16 %v887, %v886
          %v903 = vpack.c.b16 %v889, %v888
          %v904 = vpack.c.b16 %v891, %v890
          %v905 = vpack.c.b16 %v893, %v892
          %v906 = vpack.c.b16 %v895, %v894
          %v907 = vpack.c.b16 %v897, %v896
          %v908 = vpack.c.b16 %v899, %v898
          %v909 = vpack.c.b16 %v901, %v900
          %918 = vmatprep.subr.bf16.mxu0 0
          %919 = vmatpush1.bf16.msra.mxu0 %v902
          %920 = vmatprep.subr.bf16.mxu0 0
          %921 = vmatpush1.bf16.msra.mxu0 %v903
          %922 = vmatprep.subr.bf16.mxu0 0
          %923 = vmatpush1.bf16.msra.mxu0 %v904
          %924 = vmatprep.subr.bf16.mxu0 0
          %925 = vmatpush1.bf16.msra.mxu0 %v905
          %926 = vmatprep.subr.bf16.mxu0 0
          %927 = vmatpush1.bf16.msra.mxu0 %v906
          %928 = vmatprep.subr.bf16.mxu0 0
          %929 = vmatpush1.bf16.msra.mxu0 %v907
          %930 = vmatprep.subr.bf16.mxu0 0
          %931 = vmatpush1.bf16.msra.mxu0 %v908
          %932 = vmatprep.subr.bf16.mxu0 0
          %933 = vmatpush1.bf16.msra.mxu0 %v909
          %934 = vmatprep.subr.bf16.mxu0 0
          %935 = vmatpush1.bf16.msra.mxu0 0
          %936 = vmatprep.subr.bf16.mxu0 0
          %937 = vmatpush1.bf16.msra.mxu0 0
          %938 = vmatprep.subr.bf16.mxu0 0
          %939 = vmatpush1.bf16.msra.mxu0 0
          %940 = vmatprep.subr.bf16.mxu0 0
          %941 = vmatpush1.bf16.msra.mxu0 0
          %942 = vmatprep.subr.bf16.mxu0 0
          %943 = vmatpush1.bf16.msra.mxu0 0
          %944 = vmatprep.subr.bf16.mxu0 0
          %945 = vmatpush1.bf16.msra.mxu0 0
          %946 = vmatprep.subr.bf16.mxu0 0
          %947 = vmatpush1.bf16.msra.mxu0 0
          %948 = vmatprep.subr.bf16.mxu0 0
          %949 = vmatpush1.bf16.msra.mxu0 0
          %950 = vmatprep.mubr.bf16.mxu0 0
          %951 = vmatmul.mubr.bf16.gmra.mrb[0].mxu0 %v839
          %v952 = vpop.f32.mrb[0].mxu0
          %v953 = vadd.f32 %v868, %v952
          %v954 = vpop.f32.mrb[0].mxu0
          %v955 = vpop.f32.mrb[0].mxu0
          %v956 = vadd.f32 %v868, %v955
          %v957 = vpop.f32.mrb[0].mxu0
          %958 = vmatprep.mubr.bf16.mxu0 0
          %959 = vmatmul.mubr.bf16.gmra.mrb[0].mxu0 %v840
          %v960 = vpop.f32.mrb[0].mxu0
          %v961 = vadd.f32 %v868, %v960
          %v962 = vpop.f32.mrb[0].mxu0
          %v963 = vpop.f32.mrb[0].mxu0
          %v964 = vadd.f32 %v868, %v963
          %v965 = vpop.f32.mrb[0].mxu0
          %966 = vmatprep.mubr.bf16.mxu0 0
          %967 = vmatmul.mubr.bf16.gmra.mrb[0].mxu0 %v841
          %v968 = vpop.f32.mrb[0].mxu0
          %v969 = vadd.f32 %v868, %v968
          %v970 = vpop.f32.mrb[0].mxu0
          %v971 = vpop.f32.mrb[0].mxu0
          %v972 = vadd.f32 %v868, %v971
          %v973 = vpop.f32.mrb[0].mxu0
          %974 = vmatprep.mubr.bf16.mxu0 0
          %975 = vmatmul.mubr.bf16.gmra.mrb[0].mxu0 %v842
          %v976 = vpop.f32.mrb[0].mxu0
          %v977 = vadd.f32 %v868, %v976
          %v978 = vpop.f32.mrb[0].mxu0
          %v979 = vpop.f32.mrb[0].mxu0
          %v980 = vadd.f32 %v868, %v979
          %v981 = vpop.f32.mrb[0].mxu0
          %982 = vmatprep.mubr.bf16.mxu0 0
          %983 = vmatmul.mubr.bf16.gmra.mrb[0].mxu0 %v843
          %v984 = vpop.f32.mrb[0].mxu0
          %v985 = vadd.f32 %v868, %v984
          %v986 = vpop.f32.mrb[0].mxu0
          %v987 = vpop.f32.mrb[0].mxu0
          %v988 = vadd.f32 %v868, %v987
          %v989 = vpop.f32.mrb[0].mxu0
          %990 = vmatprep.mubr.bf16.mxu0 0
          %991 = vmatmul.mubr.bf16.gmra.mrb[0].mxu0 %v844
          %v992 = vpop.f32.mrb[0].mxu0
          %v993 = vadd.f32 %v868, %v992
          %v994 = vpop.f32.mrb[0].mxu0
          %v995 = vpop.f32.mrb[0].mxu0
          %v996 = vadd.f32 %v868, %v995
          %v997 = vpop.f32.mrb[0].mxu0
          %998 = vmatprep.mubr.bf16.mxu0 0
          %999 = vmatmul.mubr.bf16.gmra.mrb[0].mxu0 %v845
          %v1000 = vpop.f32.mrb[0].mxu0
          %v1001 = vadd.f32 %v868, %v1000
          %v1002 = vpop.f32.mrb[0].mxu0
          %v1003 = vpop.f32.mrb[0].mxu0
          %v1004 = vadd.f32 %v868, %v1003
          %v1005 = vpop.f32.mrb[0].mxu0
          %1006 = vmatprep.mubr.bf16.mxu0 0
          %1007 = vmatmul.mubr.bf16.gmra.mrb[0].mxu0 %v846
          %v1008 = vpop.f32.mrb[0].mxu0
          %v1009 = vadd.f32 %v868, %v1008
          %v1010 = vpop.f32.mrb[0].mxu0
          %v1011 = vpop.f32.mrb[0].mxu0
          %v1012 = vadd.f32 %v868, %v1011
          %v1013 = vpop.f32.mrb[0].mxu0
          %1014 = vdwg.mxu0
          %vm1015 = vcmp.gt.f32.partialorder %v953, 0.0
          %vm1016 = vcmp.gt.f32.partialorder %v956, 0.0
          %vm1017 = vcmp.gt.f32.partialorder %v961, 0.0
          %vm1018 = vcmp.gt.f32.partialorder %v964, 0.0
          %vm1019 = vcmp.gt.f32.partialorder %v969, 0.0
          %vm1020 = vcmp.gt.f32.partialorder %v972, 0.0
          %vm1021 = vcmp.gt.f32.partialorder %v977, 0.0
          %vm1022 = vcmp.gt.f32.partialorder %v980, 0.0
          %vm1023 = vcmp.gt.f32.partialorder %v985, 0.0
          %vm1024 = vcmp.gt.f32.partialorder %v988, 0.0
          %vm1025 = vcmp.gt.f32.partialorder %v993, 0.0
          %vm1026 = vcmp.gt.f32.partialorder %v996, 0.0
          %vm1027 = vcmp.gt.f32.partialorder %v1001, 0.0
          %vm1028 = vcmp.gt.f32.partialorder %v1004, 0.0
          %vm1029 = vcmp.gt.f32.partialorder %v1009, 0.0
          %vm1030 = vcmp.gt.f32.partialorder %v1012, 0.0
          %v1031 = vmul.f32 %v953, 0.1
          %v1032 = vmul.f32 %v956, 0.1
          %v1033 = vmul.f32 %v961, 0.1
          %v1034 = vmul.f32 %v964, 0.1
          %v1035 = vmul.f32 %v969, 0.1
          %v1036 = vmul.f32 %v972, 0.1
          %v1037 = vmul.f32 %v977, 0.1
          %v1038 = vmul.f32 %v980, 0.1
          %v1039 = vmul.f32 %v985, 0.1
          %v1040 = vmul.f32 %v988, 0.1
          %v1041 = vmul.f32 %v993, 0.1
          %v1042 = vmul.f32 %v996, 0.1
          %v1043 = vmul.f32 %v1001, 0.1
          %v1044 = vmul.f32 %v1004, 0.1
          %v1045 = vmul.f32 %v1009, 0.1
          %v1046 = vmul.f32 %v1012, 0.1
          %v1047 = vsel %vm1015, %v953, %v1031
          %v1048 = vsel %vm1016, %v956, %v1032
          %v1049 = vsel %vm1017, %v961, %v1033
          %v1050 = vsel %vm1018, %v964, %v1034
          %v1051 = vsel %vm1019, %v969, %v1035
          %v1052 = vsel %vm1020, %v972, %v1036
          %v1053 = vsel %vm1021, %v977, %v1037
          %v1054 = vsel %vm1022, %v980, %v1038
          %v1055 = vsel %vm1023, %v985, %v1039
          %v1056 = vsel %vm1024, %v988, %v1040
          %v1057 = vsel %vm1025, %v993, %v1041
          %v1058 = vsel %vm1026, %v996, %v1042
          %v1059 = vsel %vm1027, %v1001, %v1043
          %v1060 = vsel %vm1028, %v1004, %v1044
          %v1061 = vsel %vm1029, %v1009, %v1045
          %v1062 = vsel %vm1030, %v1012, %v1046
          %v1063 = vld [vmem:[#allocation7] sm:$0xf]
          %v1064 = vld [vmem:[#allocation7 + $0x4] sm:$0xf]
          %v1065 = vld [vmem:[#allocation7 + $0x8] sm:$0xf]
          %v1066 = vld [vmem:[#allocation7 + $0xc] sm:$0xf]
          %v1067 = vld [vmem:[#allocation7 + $0x10] sm:$0xf]
          %v1068 = vld [vmem:[#allocation7 + $0x14] sm:$0xf]
          %v1069 = vld [vmem:[#allocation7 + $0x18] sm:$0xf]
          %v1070 = vld [vmem:[#allocation7 + $0x1c] sm:$0xf]
          %v1071 = vld [vmem:[#allocation7 + $0x20] sm:$0xf]
          %v1072 = vld [vmem:[#allocation7 + $0x24] sm:$0xf]
          %v1073 = vld [vmem:[#allocation7 + $0x28] sm:$0xf]
          %v1074 = vld [vmem:[#allocation7 + $0x2c] sm:$0xf]
          %v1075 = vld [vmem:[#allocation7 + $0x30] sm:$0xf]
          %v1076 = vld [vmem:[#allocation7 + $0x34] sm:$0xf]
          %v1077 = vld [vmem:[#allocation7 + $0x38] sm:$0xf]
          %v1078 = vld [vmem:[#allocation7 + $0x3c] sm:$0xf]
          %v1079 = vpack.c.bf16 %v1048, %v1047
          %v1080 = vpack.c.bf16 %v1050, %v1049
          %v1081 = vpack.c.bf16 %v1052, %v1051
          %v1082 = vpack.c.bf16 %v1054, %v1053
          %v1083 = vpack.c.bf16 %v1056, %v1055
          %v1084 = vpack.c.bf16 %v1058, %v1057
          %v1085 = vpack.c.bf16 %v1060, %v1059
          %v1086 = vpack.c.bf16 %v1062, %v1061
          %v1103 = vunpack.c.l.b16 %v1063
          %v1104 = vunpack.c.l.b16 %v1064
          %v1105 = vunpack.c.l.b16 %v1065
          %v1106 = vunpack.c.l.b16 %v1066
          %v1107 = vunpack.c.l.b16 %v1067
          %v1108 = vunpack.c.l.b16 %v1068
          %v1109 = vunpack.c.l.b16 %v1069
          %v1110 = vunpack.c.l.b16 %v1070
          %v1111 = vunpack.c.l.b16 %v1071
          %v1112 = vunpack.c.l.b16 %v1072
          %v1113 = vunpack.c.l.b16 %v1073
          %v1114 = vunpack.c.l.b16 %v1074
          %v1115 = vunpack.c.l.b16 %v1075
          %v1116 = vunpack.c.l.b16 %v1076
          %v1117 = vunpack.c.l.b16 %v1077
          %v1118 = vunpack.c.l.b16 %v1078
          %v1119 = vpack.c.b16 %v1104, %v1103
          %v1120 = vpack.c.b16 %v1106, %v1105
          %v1121 = vpack.c.b16 %v1108, %v1107
          %v1122 = vpack.c.b16 %v1110, %v1109
          %v1123 = vpack.c.b16 %v1112, %v1111
          %v1124 = vpack.c.b16 %v1114, %v1113
          %v1125 = vpack.c.b16 %v1116, %v1115
          %v1126 = vpack.c.b16 %v1118, %v1117
          %1135 = vmatprep.subr.bf16.mxu0 0
          %1136 = vmatpush1.bf16.msra.mxu0 %v1079
          %1137 = vmatprep.subr.bf16.mxu0 0
          %1138 = vmatpush1.bf16.msra.mxu0 %v1080
          %1139 = vmatprep.subr.bf16.mxu0 0
          %1140 = vmatpush1.bf16.msra.mxu0 %v1081
          %1141 = vmatprep.subr.bf16.mxu0 0
          %1142 = vmatpush1.bf16.msra.mxu0 %v1082
          %1143 = vmatprep.subr.bf16.mxu0 0
          %1144 = vmatpush1.bf16.msra.mxu0 %v1083
          %1145 = vmatprep.subr.bf16.mxu0 0
          %1146 = vmatpush1.bf16.msra.mxu0 %v1084
          %1147 = vmatprep.subr.bf16.mxu0 0
          %1148 = vmatpush1.bf16.msra.mxu0 %v1085
          %1149 = vmatprep.subr.bf16.mxu0 0
          %1150 = vmatpush1.bf16.msra.mxu0 %v1086
          %1151 = vmatprep.subr.bf16.mxu0 0
          %1152 = vmatpush1.bf16.msra.mxu0 0
          %1153 = vmatprep.subr.bf16.mxu0 0
          %1154 = vmatpush1.bf16.msra.mxu0 0
          %1155 = vmatprep.subr.bf16.mxu0 0
          %1156 = vmatpush1.bf16.msra.mxu0 0
          %1157 = vmatprep.subr.bf16.mxu0 0
          %1158 = vmatpush1.bf16.msra.mxu0 0
          %1159 = vmatprep.subr.bf16.mxu0 0
          %1160 = vmatpush1.bf16.msra.mxu0 0
          %1161 = vmatprep.subr.bf16.mxu0 0
          %1162 = vmatpush1.bf16.msra.mxu0 0
          %1163 = vmatprep.subr.bf16.mxu0 0
          %1164 = vmatpush1.bf16.msra.mxu0 0
          %1165 = vmatprep.subr.bf16.mxu0 0
          %1166 = vmatpush1.bf16.msra.mxu0 0
          %1167 = vmatprep.mubr.bf16.mxu0 0
          %1168 = vmatmul.mubr.bf16.gmra.mrb[0].mxu0 %v1119
          %v1169 = vpop.f32.mrb[0].mxu0
          %v1170 = vadd.f32 0.0, %v1169
          %v1171 = vpop.f32.mrb[0].mxu0
          %v1172 = vpop.f32.mrb[0].mxu0
          %v1173 = vadd.f32 0.0, %v1172
          %v1174 = vpop.f32.mrb[0].mxu0
          %1175 = vmatprep.mubr.bf16.mxu0 0
          %1176 = vmatmul.mubr.bf16.gmra.mrb[0].mxu0 %v1120
          %v1177 = vpop.f32.mrb[0].mxu0
          %v1178 = vadd.f32 0.0, %v1177
          %v1179 = vpop.f32.mrb[0].mxu0
          %v1180 = vpop.f32.mrb[0].mxu0
          %v1181 = vadd.f32 0.0, %v1180
          %v1182 = vpop.f32.mrb[0].mxu0
          %1183 = vmatprep.mubr.bf16.mxu0 0
          %1184 = vmatmul.mubr.bf16.gmra.mrb[0].mxu0 %v1121
          %v1185 = vpop.f32.mrb[0].mxu0
          %v1186 = vadd.f32 0.0, %v1185
          %v1187 = vpop.f32.mrb[0].mxu0
          %v1188 = vpop.f32.mrb[0].mxu0
          %v1189 = vadd.f32 0.0, %v1188
          %v1190 = vpop.f32.mrb[0].mxu0
          %1191 = vmatprep.mubr.bf16.mxu0 0
          %1192 = vmatmul.mubr.bf16.gmra.mrb[0].mxu0 %v1122
          %v1193 = vpop.f32.mrb[0].mxu0
          %v1194 = vadd.f32 0.0, %v1193
          %v1195 = vpop.f32.mrb[0].mxu0
          %v1196 = vpop.f32.mrb[0].mxu0
          %v1197 = vadd.f32 0.0, %v1196
          %v1198 = vpop.f32.mrb[0].mxu0
          %1199 = vmatprep.mubr.bf16.mxu0 0
          %1200 = vmatmul.mubr.bf16.gmra.mrb[0].mxu0 %v1123
          %v1201 = vpop.f32.mrb[0].mxu0
          %v1202 = vadd.f32 0.0, %v1201
          %v1203 = vpop.f32.mrb[0].mxu0
          %v1204 = vpop.f32.mrb[0].mxu0
          %v1205 = vadd.f32 0.0, %v1204
          %v1206 = vpop.f32.mrb[0].mxu0
          %1207 = vmatprep.mubr.bf16.mxu0 0
          %1208 = vmatmul.mubr.bf16.gmra.mrb[0].mxu0 %v1124
          %v1209 = vpop.f32.mrb[0].mxu0
          %v1210 = vadd.f32 0.0, %v1209
          %v1211 = vpop.f32.mrb[0].mxu0
          %v1212 = vpop.f32.mrb[0].mxu0
          %v1213 = vadd.f32 0.0, %v1212
          %v1214 = vpop.f32.mrb[0].mxu0
          %1215 = vmatprep.mubr.bf16.mxu0 0
          %1216 = vmatmul.mubr.bf16.gmra.mrb[0].mxu0 %v1125
          %v1217 = vpop.f32.mrb[0].mxu0
          %v1218 = vadd.f32 0.0, %v1217
          %v1219 = vpop.f32.mrb[0].mxu0
          %v1220 = vpop.f32.mrb[0].mxu0
          %v1221 = vadd.f32 0.0, %v1220
          %v1222 = vpop.f32.mrb[0].mxu0
          %1223 = vmatprep.mubr.bf16.mxu0 0
          %1224 = vmatmul.mubr.bf16.gmra.mrb[0].mxu0 %v1126
          %v1225 = vpop.f32.mrb[0].mxu0
          %v1226 = vadd.f32 0.0, %v1225
          %v1227 = vpop.f32.mrb[0].mxu0
          %v1228 = vpop.f32.mrb[0].mxu0
          %v1229 = vadd.f32 0.0, %v1228
          %v1230 = vpop.f32.mrb[0].mxu0
          %1231 = vdwg.mxu0
          %v1232 = vadd.f32 %v622, %v1170
          %v1233 = vadd.f32 %v623, %v1173
          %v1234 = vadd.f32 %v624, %v1178
          %v1235 = vadd.f32 %v625, %v1181
          %v1236 = vadd.f32 %v626, %v1186
          %v1237 = vadd.f32 %v627, %v1189
          %v1238 = vadd.f32 %v628, %v1194
          %v1239 = vadd.f32 %v629, %v1197
          %v1240 = vadd.f32 %v630, %v1202
          %v1241 = vadd.f32 %v631, %v1205
          %v1242 = vadd.f32 %v632, %v1210
          %v1243 = vadd.f32 %v633, %v1213
          %v1244 = vadd.f32 %v634, %v1218
          %v1245 = vadd.f32 %v635, %v1221
          %v1246 = vadd.f32 %v636, %v1226
          %v1247 = vadd.f32 %v637, %v1229
          %v1248 = vpack.c.bf16 %v1233, %v1232
          %v1249 = vpack.c.bf16 %v1235, %v1234
          %v1250 = vpack.c.bf16 %v1237, %v1236
          %v1251 = vpack.c.bf16 %v1239, %v1238
          %v1252 = vpack.c.bf16 %v1241, %v1240
          %v1253 = vpack.c.bf16 %v1243, %v1242
          %v1254 = vpack.c.bf16 %v1245, %v1244
          %v1255 = vpack.c.bf16 %v1247, %v1246
          %v1256 = vld [vmem:[%s456] sm:$0xf]
          %v1257 = vld [vmem:[%s456 + $0x4] sm:$0xf]
          %v1258 = vld [vmem:[%s456 + $0x8] sm:$0xf]
          %v1259 = vld [vmem:[%s456 + $0xc] sm:$0xf]
          %v1260 = vld [vmem:[%s456 + $0x10] sm:$0xf]
          %v1261 = vld [vmem:[%s456 + $0x14] sm:$0xf]
          %v1262 = vld [vmem:[%s456 + $0x18] sm:$0xf]
          %v1263 = vld [vmem:[%s456 + $0x1c] sm:$0xf]
          %v1264 = vld [vmem:[%s456 + $0x20] sm:$0xf]
          %v1265 = vld [vmem:[%s456 + $0x24] sm:$0xf]
          %v1266 = vld [vmem:[%s456 + $0x28] sm:$0xf]
          %v1267 = vld [vmem:[%s456 + $0x2c] sm:$0xf]
          %v1268 = vld [vmem:[%s456 + $0x30] sm:$0xf]
          %v1269 = vld [vmem:[%s456 + $0x34] sm:$0xf]
          %v1270 = vld [vmem:[%s456 + $0x38] sm:$0xf]
          %v1271 = vld [vmem:[%s456 + $0x3c] sm:$0xf]
          %v1272 = vld [vmem:[%s464] sm:$0x1]
          %v1274 = vlaneseq
          %v1275 = vshrl.u32 %v1274, 7
          %v1276 = vsub.s32 0, %v1275
          %v1277 = vrot.slane %v1272, %v1276
          %v1295 = vunpack.c.l.b16 %v1256
          %v1296 = vunpack.c.l.b16 %v1257
          %v1297 = vunpack.c.l.b16 %v1258
          %v1298 = vunpack.c.l.b16 %v1259
          %v1299 = vunpack.c.l.b16 %v1260
          %v1300 = vunpack.c.l.b16 %v1261
          %v1301 = vunpack.c.l.b16 %v1262
          %v1302 = vunpack.c.l.b16 %v1263
          %v1303 = vunpack.c.l.b16 %v1264
          %v1304 = vunpack.c.l.b16 %v1265
          %v1305 = vunpack.c.l.b16 %v1266
          %v1306 = vunpack.c.l.b16 %v1267
          %v1307 = vunpack.c.l.b16 %v1268
          %v1308 = vunpack.c.l.b16 %v1269
          %v1309 = vunpack.c.l.b16 %v1270
          %v1310 = vunpack.c.l.b16 %v1271
          %v1311 = vpack.c.b16 %v1296, %v1295
          %v1312 = vpack.c.b16 %v1298, %v1297
          %v1313 = vpack.c.b16 %v1300, %v1299
          %v1314 = vpack.c.b16 %v1302, %v1301
          %v1315 = vpack.c.b16 %v1304, %v1303
          %v1316 = vpack.c.b16 %v1306, %v1305
          %v1317 = vpack.c.b16 %v1308, %v1307
          %v1318 = vpack.c.b16 %v1310, %v1309
          %1327 = vmatprep.subr.bf16.mxu0 0
          %1328 = vmatpush1.bf16.msra.mxu0 %v1311
          %1329 = vmatprep.subr.bf16.mxu0 0
          %1330 = vmatpush1.bf16.msra.mxu0 %v1312
          %1331 = vmatprep.subr.bf16.mxu0 0
          %1332 = vmatpush1.bf16.msra.mxu0 %v1313
          %1333 = vmatprep.subr.bf16.mxu0 0
          %1334 = vmatpush1.bf16.msra.mxu0 %v1314
          %1335 = vmatprep.subr.bf16.mxu0 0
          %1336 = vmatpush1.bf16.msra.mxu0 %v1315
          %1337 = vmatprep.subr.bf16.mxu0 0
          %1338 = vmatpush1.bf16.msra.mxu0 %v1316
          %1339 = vmatprep.subr.bf16.mxu0 0
          %1340 = vmatpush1.bf16.msra.mxu0 %v1317
          %1341 = vmatprep.subr.bf16.mxu0 0
          %1342 = vmatpush1.bf16.msra.mxu0 %v1318
          %1343 = vmatprep.subr.bf16.mxu0 0
          %1344 = vmatpush1.bf16.msra.mxu0 0
          %1345 = vmatprep.subr.bf16.mxu0 0
          %1346 = vmatpush1.bf16.msra.mxu0 0
          %1347 = vmatprep.subr.bf16.mxu0 0
          %1348 = vmatpush1.bf16.msra.mxu0 0
          %1349 = vmatprep.subr.bf16.mxu0 0
          %1350 = vmatpush1.bf16.msra.mxu0 0
          %1351 = vmatprep.subr.bf16.mxu0 0
          %1352 = vmatpush1.bf16.msra.mxu0 0
          %1353 = vmatprep.subr.bf16.mxu0 0
          %1354 = vmatpush1.bf16.msra.mxu0 0
          %1355 = vmatprep.subr.bf16.mxu0 0
          %1356 = vmatpush1.bf16.msra.mxu0 0
          %1357 = vmatprep.subr.bf16.mxu0 0
          %1358 = vmatpush1.bf16.msra.mxu0 0
          %1359 = vmatprep.mubr.bf16.mxu0 0
          %1360 = vmatmul.mubr.bf16.gmra.mrb[0].mxu0 %v1248
          %v1361 = vpop.f32.mrb[0].mxu0
          %v1362 = vadd.f32 %v1277, %v1361
          %v1363 = vpop.f32.mrb[0].mxu0
          %v1364 = vpop.f32.mrb[0].mxu0
          %v1365 = vadd.f32 %v1277, %v1364
          %v1366 = vpop.f32.mrb[0].mxu0
          %1367 = vmatprep.mubr.bf16.mxu0 0
          %1368 = vmatmul.mubr.bf16.gmra.mrb[0].mxu0 %v1249
          %v1369 = vpop.f32.mrb[0].mxu0
          %v1370 = vadd.f32 %v1277, %v1369
          %v1371 = vpop.f32.mrb[0].mxu0
          %v1372 = vpop.f32.mrb[0].mxu0
          %v1373 = vadd.f32 %v1277, %v1372
          %v1374 = vpop.f32.mrb[0].mxu0
          %1375 = vmatprep.mubr.bf16.mxu0 0
          %1376 = vmatmul.mubr.bf16.gmra.mrb[0].mxu0 %v1250
          %v1377 = vpop.f32.mrb[0].mxu0
          %v1378 = vadd.f32 %v1277, %v1377
          %v1379 = vpop.f32.mrb[0].mxu0
          %v1380 = vpop.f32.mrb[0].mxu0
          %v1381 = vadd.f32 %v1277, %v1380
          %v1382 = vpop.f32.mrb[0].mxu0
          %1383 = vmatprep.mubr.bf16.mxu0 0
          %1384 = vmatmul.mubr.bf16.gmra.mrb[0].mxu0 %v1251
          %v1385 = vpop.f32.mrb[0].mxu0
          %v1386 = vadd.f32 %v1277, %v1385
          %v1387 = vpop.f32.mrb[0].mxu0
          %v1388 = vpop.f32.mrb[0].mxu0
          %v1389 = vadd.f32 %v1277, %v1388
          %v1390 = vpop.f32.mrb[0].mxu0
          %1391 = vmatprep.mubr.bf16.mxu0 0
          %1392 = vmatmul.mubr.bf16.gmra.mrb[0].mxu0 %v1252
          %v1393 = vpop.f32.mrb[0].mxu0
          %v1394 = vadd.f32 %v1277, %v1393
          %v1395 = vpop.f32.mrb[0].mxu0
          %v1396 = vpop.f32.mrb[0].mxu0
          %v1397 = vadd.f32 %v1277, %v1396
          %v1398 = vpop.f32.mrb[0].mxu0
          %1399 = vmatprep.mubr.bf16.mxu0 0
          %1400 = vmatmul.mubr.bf16.gmra.mrb[0].mxu0 %v1253
          %v1401 = vpop.f32.mrb[0].mxu0
          %v1402 = vadd.f32 %v1277, %v1401
          %v1403 = vpop.f32.mrb[0].mxu0
          %v1404 = vpop.f32.mrb[0].mxu0
          %v1405 = vadd.f32 %v1277, %v1404
          %v1406 = vpop.f32.mrb[0].mxu0
          %1407 = vmatprep.mubr.bf16.mxu0 0
          %1408 = vmatmul.mubr.bf16.gmra.mrb[0].mxu0 %v1254
          %v1409 = vpop.f32.mrb[0].mxu0
          %v1410 = vadd.f32 %v1277, %v1409
          %v1411 = vpop.f32.mrb[0].mxu0
          %v1412 = vpop.f32.mrb[0].mxu0
          %v1413 = vadd.f32 %v1277, %v1412
          %v1414 = vpop.f32.mrb[0].mxu0
          %1415 = vmatprep.mubr.bf16.mxu0 0
          %1416 = vmatmul.mubr.bf16.gmra.mrb[0].mxu0 %v1255
          %v1417 = vpop.f32.mrb[0].mxu0
          %v1418 = vadd.f32 %v1277, %v1417
          %v1419 = vpop.f32.mrb[0].mxu0
          %v1420 = vpop.f32.mrb[0].mxu0
          %v1421 = vadd.f32 %v1277, %v1420
          %v1422 = vpop.f32.mrb[0].mxu0
          %1423 = vdwg.mxu0
          %vm1424 = vcmp.gt.f32.partialorder %v1362, 0.0
          %vm1425 = vcmp.gt.f32.partialorder %v1365, 0.0
          %vm1426 = vcmp.gt.f32.partialorder %v1370, 0.0
          %vm1427 = vcmp.gt.f32.partialorder %v1373, 0.0
          %vm1428 = vcmp.gt.f32.partialorder %v1378, 0.0
          %vm1429 = vcmp.gt.f32.partialorder %v1381, 0.0
          %vm1430 = vcmp.gt.f32.partialorder %v1386, 0.0
          %vm1431 = vcmp.gt.f32.partialorder %v1389, 0.0
          %vm1432 = vcmp.gt.f32.partialorder %v1394, 0.0
          %vm1433 = vcmp.gt.f32.partialorder %v1397, 0.0
          %vm1434 = vcmp.gt.f32.partialorder %v1402, 0.0
          %vm1435 = vcmp.gt.f32.partialorder %v1405, 0.0
          %vm1436 = vcmp.gt.f32.partialorder %v1410, 0.0
          %vm1437 = vcmp.gt.f32.partialorder %v1413, 0.0
          %vm1438 = vcmp.gt.f32.partialorder %v1418, 0.0
          %vm1439 = vcmp.gt.f32.partialorder %v1421, 0.0
          %v1440 = vmul.f32 %v1362, 0.1
          %v1441 = vmul.f32 %v1365, 0.1
          %v1442 = vmul.f32 %v1370, 0.1
          %v1443 = vmul.f32 %v1373, 0.1
          %v1444 = vmul.f32 %v1378, 0.1
          %v1445 = vmul.f32 %v1381, 0.1
          %v1446 = vmul.f32 %v1386, 0.1
          %v1447 = vmul.f32 %v1389, 0.1
          %v1448 = vmul.f32 %v1394, 0.1
          %v1449 = vmul.f32 %v1397, 0.1
          %v1450 = vmul.f32 %v1402, 0.1
          %v1451 = vmul.f32 %v1405, 0.1
          %v1452 = vmul.f32 %v1410, 0.1
          %v1453 = vmul.f32 %v1413, 0.1
          %v1454 = vmul.f32 %v1418, 0.1
          %v1455 = vmul.f32 %v1421, 0.1
          %v1456 = vsel %vm1424, %v1362, %v1440
          %v1457 = vsel %vm1425, %v1365, %v1441
          %v1458 = vsel %vm1426, %v1370, %v1442
          %v1459 = vsel %vm1427, %v1373, %v1443
          %v1460 = vsel %vm1428, %v1378, %v1444
          %v1461 = vsel %vm1429, %v1381, %v1445
          %v1462 = vsel %vm1430, %v1386, %v1446
          %v1463 = vsel %vm1431, %v1389, %v1447
          %v1464 = vsel %vm1432, %v1394, %v1448
          %v1465 = vsel %vm1433, %v1397, %v1449
          %v1466 = vsel %vm1434, %v1402, %v1450
          %v1467 = vsel %vm1435, %v1405, %v1451
          %v1468 = vsel %vm1436, %v1410, %v1452
          %v1469 = vsel %vm1437, %v1413, %v1453
          %v1470 = vsel %vm1438, %v1418, %v1454
          %v1471 = vsel %vm1439, %v1421, %v1455
          %1472 = vst [vmem:[#allocation3] sm:$0xff] %v1047
          %1473 = vst [vmem:[#allocation3 + $0x8] sm:$0xff] %v1048
          %1474 = vst [vmem:[#allocation3 + $0x10] sm:$0xff] %v1049
          %1475 = vst [vmem:[#allocation3 + $0x18] sm:$0xff] %v1050
          %1476 = vst [vmem:[#allocation3 + $0x20] sm:$0xff] %v1051
          %1477 = vst [vmem:[#allocation3 + $0x28] sm:$0xff] %v1052
          %1478 = vst [vmem:[#allocation3 + $0x30] sm:$0xff] %v1053
          %1479 = vst [vmem:[#allocation3 + $0x38] sm:$0xff] %v1054
          %1480 = vst [vmem:[#allocation3 + $0x40] sm:$0xff] %v1055
          %1481 = vst [vmem:[#allocation3 + $0x48] sm:$0xff] %v1056
          %1482 = vst [vmem:[#allocation3 + $0x50] sm:$0xff] %v1057
          %1483 = vst [vmem:[#allocation3 + $0x58] sm:$0xff] %v1058
          %1484 = vst [vmem:[#allocation3 + $0x60] sm:$0xff] %v1059
          %1485 = vst [vmem:[#allocation3 + $0x68] sm:$0xff] %v1060
          %1486 = vst [vmem:[#allocation3 + $0x70] sm:$0xff] %v1061
          %1487 = vst [vmem:[#allocation3 + $0x78] sm:$0xff] %v1062
          %1488 = vst [vmem:[#allocation2] sm:$0xff] %v1456
          %1489 = vst [vmem:[#allocation2 + $0x8] sm:$0xff] %v1457
          %1490 = vst [vmem:[#allocation2 + $0x10] sm:$0xff] %v1458
          %1491 = vst [vmem:[#allocation2 + $0x18] sm:$0xff] %v1459
          %1492 = vst [vmem:[#allocation2 + $0x20] sm:$0xff] %v1460
          %1493 = vst [vmem:[#allocation2 + $0x28] sm:$0xff] %v1461
          %1494 = vst [vmem:[#allocation2 + $0x30] sm:$0xff] %v1462
          %1495 = vst [vmem:[#allocation2 + $0x38] sm:$0xff] %v1463
          %1496 = vst [vmem:[#allocation2 + $0x40] sm:$0xff] %v1464
          %1497 = vst [vmem:[#allocation2 + $0x48] sm:$0xff] %v1465
          %1498 = vst [vmem:[#allocation2 + $0x50] sm:$0xff] %v1466
          %1499 = vst [vmem:[#allocation2 + $0x58] sm:$0xff] %v1467
          %1500 = vst [vmem:[#allocation2 + $0x60] sm:$0xff] %v1468
          %1501 = vst [vmem:[#allocation2 + $0x68] sm:$0xff] %v1469
          %1502 = vst [vmem:[#allocation2 + $0x70] sm:$0xff] %v1470
          %1503 = vst [vmem:[#allocation2 + $0x78] sm:$0xff] %v1471
        $region92: #{gnn_node_forward.7} parent=51 // pred_fallthru
          _
        %v1504 = vld [vmem:[#allocation2] sm:$0xff]
        %v1505 = vld [vmem:[#allocation2 + $0x8] sm:$0xff]
        %v1506 = vld [vmem:[#allocation2 + $0x10] sm:$0xff]
        %v1507 = vld [vmem:[#allocation2 + $0x18] sm:$0xff]
        %v1508 = vld [vmem:[#allocation2 + $0x20] sm:$0xff]
        %v1509 = vld [vmem:[#allocation2 + $0x28] sm:$0xff]
        %v1510 = vld [vmem:[#allocation2 + $0x30] sm:$0xff]
        %v1511 = vld [vmem:[#allocation2 + $0x38] sm:$0xff]
        %v1512 = vld [vmem:[#allocation2 + $0x40] sm:$0xff]
        %v1513 = vld [vmem:[#allocation2 + $0x48] sm:$0xff]
        %v1514 = vld [vmem:[#allocation2 + $0x50] sm:$0xff]
        %v1515 = vld [vmem:[#allocation2 + $0x58] sm:$0xff]
        %v1516 = vld [vmem:[#allocation2 + $0x60] sm:$0xff]
        %v1517 = vld [vmem:[#allocation2 + $0x68] sm:$0xff]
        %v1518 = vld [vmem:[#allocation2 + $0x70] sm:$0xff]
        %v1519 = vld [vmem:[#allocation2 + $0x78] sm:$0xff]
        %v1520 = vpack.c.bf16 %v1505, %v1504
        %v1521 = vpack.c.bf16 %v1507, %v1506
        %v1522 = vpack.c.bf16 %v1509, %v1508
        %v1523 = vpack.c.bf16 %v1511, %v1510
        %v1524 = vpack.c.bf16 %v1513, %v1512
        %v1525 = vpack.c.bf16 %v1515, %v1514
        %v1526 = vpack.c.bf16 %v1517, %v1516
        %v1527 = vpack.c.bf16 %v1519, %v1518
        %v1536 = vunpack.c.l.b16 %v1520
        %v1537 = vunpack.c.h.b16 %v1520
        %v1538 = vunpack.c.l.b16 %v1521
        %v1539 = vunpack.c.h.b16 %v1521
        %v1540 = vunpack.c.l.b16 %v1522
        %v1541 = vunpack.c.h.b16 %v1522
        %v1542 = vunpack.c.l.b16 %v1523
        %v1543 = vunpack.c.h.b16 %v1523
        %v1544 = vunpack.c.l.b16 %v1524
        %v1545 = vunpack.c.h.b16 %v1524
        %v1546 = vunpack.c.l.b16 %v1525
        %v1547 = vunpack.c.h.b16 %v1525
        %v1548 = vunpack.c.l.b16 %v1526
        %v1549 = vunpack.c.h.b16 %v1526
        %v1550 = vunpack.c.l.b16 %v1527
        %v1551 = vunpack.c.h.b16 %v1527
        %v1552 = vpack.c.b16 %v1536, %v1536
        %v1553 = vpack.c.b16 %v1537, %v1537
        %v1554 = vpack.c.b16 %v1538, %v1538
        %v1555 = vpack.c.b16 %v1539, %v1539
        %v1556 = vpack.c.b16 %v1540, %v1540
        %v1557 = vpack.c.b16 %v1541, %v1541
        %v1558 = vpack.c.b16 %v1542, %v1542
        %v1559 = vpack.c.b16 %v1543, %v1543
        %v1560 = vpack.c.b16 %v1544, %v1544
        %v1561 = vpack.c.b16 %v1545, %v1545
        %v1562 = vpack.c.b16 %v1546, %v1546
        %v1563 = vpack.c.b16 %v1547, %v1547
        %v1564 = vpack.c.b16 %v1548, %v1548
        %v1565 = vpack.c.b16 %v1549, %v1549
        %v1566 = vpack.c.b16 %v1550, %v1550
        %v1567 = vpack.c.b16 %v1551, %v1551
        %1584 = vst [vmem:[%s509] sm:$0xf] %v1552
        %1585 = vst [vmem:[%s509 + $0x4] sm:$0xf] %v1553
        %1586 = vst [vmem:[%s509 + $0x8] sm:$0xf] %v1554
        %1587 = vst [vmem:[%s509 + $0xc] sm:$0xf] %v1555
        %1588 = vst [vmem:[%s509 + $0x10] sm:$0xf] %v1556
        %1589 = vst [vmem:[%s509 + $0x14] sm:$0xf] %v1557
        %1590 = vst [vmem:[%s509 + $0x18] sm:$0xf] %v1558
        %1591 = vst [vmem:[%s509 + $0x1c] sm:$0xf] %v1559
        %1592 = vst [vmem:[%s509 + $0x20] sm:$0xf] %v1560
        %1593 = vst [vmem:[%s509 + $0x24] sm:$0xf] %v1561
        %1594 = vst [vmem:[%s509 + $0x28] sm:$0xf] %v1562
        %1595 = vst [vmem:[%s509 + $0x2c] sm:$0xf] %v1563
        %1596 = vst [vmem:[%s509 + $0x30] sm:$0xf] %v1564
        %1597 = vst [vmem:[%s509 + $0x34] sm:$0xf] %v1565
        %1598 = vst [vmem:[%s509 + $0x38] sm:$0xf] %v1566
        %1599 = vst [vmem:[%s509 + $0x3c] sm:$0xf] %v1567
        %v1600 = vld [vmem:[#allocation3] sm:$0xff]
        %v1601 = vld [vmem:[#allocation3 + $0x8] sm:$0xff]
        %v1602 = vld [vmem:[#allocation3 + $0x10] sm:$0xff]
        %v1603 = vld [vmem:[#allocation3 + $0x18] sm:$0xff]
        %v1604 = vld [vmem:[#allocation3 + $0x20] sm:$0xff]
        %v1605 = vld [vmem:[#allocation3 + $0x28] sm:$0xff]
        %v1606 = vld [vmem:[#allocation3 + $0x30] sm:$0xff]
        %v1607 = vld [vmem:[#allocation3 + $0x38] sm:$0xff]
        %v1608 = vld [vmem:[#allocation3 + $0x40] sm:$0xff]
        %v1609 = vld [vmem:[#allocation3 + $0x48] sm:$0xff]
        %v1610 = vld [vmem:[#allocation3 + $0x50] sm:$0xff]
        %v1611 = vld [vmem:[#allocation3 + $0x58] sm:$0xff]
        %v1612 = vld [vmem:[#allocation3 + $0x60] sm:$0xff]
        %v1613 = vld [vmem:[#allocation3 + $0x68] sm:$0xff]
        %v1614 = vld [vmem:[#allocation3 + $0x70] sm:$0xff]
        %v1615 = vld [vmem:[#allocation3 + $0x78] sm:$0xff]
        %v1616 = vpack.c.bf16 %v1601, %v1600
        %v1617 = vpack.c.bf16 %v1603, %v1602
        %v1618 = vpack.c.bf16 %v1605, %v1604
        %v1619 = vpack.c.bf16 %v1607, %v1606
        %v1620 = vpack.c.bf16 %v1609, %v1608
        %v1621 = vpack.c.bf16 %v1611, %v1610
        %v1622 = vpack.c.bf16 %v1613, %v1612
        %v1623 = vpack.c.bf16 %v1615, %v1614
        %v1632 = vunpack.c.l.b16 %v1616
        %v1633 = vunpack.c.h.b16 %v1616
        %v1634 = vunpack.c.l.b16 %v1617
        %v1635 = vunpack.c.h.b16 %v1617
        %v1636 = vunpack.c.l.b16 %v1618
        %v1637 = vunpack.c.h.b16 %v1618
        %v1638 = vunpack.c.l.b16 %v1619
        %v1639 = vunpack.c.h.b16 %v1619
        %v1640 = vunpack.c.l.b16 %v1620
        %v1641 = vunpack.c.h.b16 %v1620
        %v1642 = vunpack.c.l.b16 %v1621
        %v1643 = vunpack.c.h.b16 %v1621
        %v1644 = vunpack.c.l.b16 %v1622
        %v1645 = vunpack.c.h.b16 %v1622
        %v1646 = vunpack.c.l.b16 %v1623
        %v1647 = vunpack.c.h.b16 %v1623
        %v1648 = vpack.c.b16 %v1632, %v1632
        %v1649 = vpack.c.b16 %v1633, %v1633
        %v1650 = vpack.c.b16 %v1634, %v1634
        %v1651 = vpack.c.b16 %v1635, %v1635
        %v1652 = vpack.c.b16 %v1636, %v1636
        %v1653 = vpack.c.b16 %v1637, %v1637
        %v1654 = vpack.c.b16 %v1638, %v1638
        %v1655 = vpack.c.b16 %v1639, %v1639
        %v1656 = vpack.c.b16 %v1640, %v1640
        %v1657 = vpack.c.b16 %v1641, %v1641
        %v1658 = vpack.c.b16 %v1642, %v1642
        %v1659 = vpack.c.b16 %v1643, %v1643
        %v1660 = vpack.c.b16 %v1644, %v1644
        %v1661 = vpack.c.b16 %v1645, %v1645
        %v1662 = vpack.c.b16 %v1646, %v1646
        %v1663 = vpack.c.b16 %v1647, %v1647
        %1680 = vst [vmem:[%s516] sm:$0xf] %v1648
        %1681 = vst [vmem:[%s516 + $0x4] sm:$0xf] %v1649
        %1682 = vst [vmem:[%s516 + $0x8] sm:$0xf] %v1650
        %1683 = vst [vmem:[%s516 + $0xc] sm:$0xf] %v1651
        %1684 = vst [vmem:[%s516 + $0x10] sm:$0xf] %v1652
        %1685 = vst [vmem:[%s516 + $0x14] sm:$0xf] %v1653
        %1686 = vst [vmem:[%s516 + $0x18] sm:$0xf] %v1654
        %1687 = vst [vmem:[%s516 + $0x1c] sm:$0xf] %v1655
        %1688 = vst [vmem:[%s516 + $0x20] sm:$0xf] %v1656
        %1689 = vst [vmem:[%s516 + $0x24] sm:$0xf] %v1657
        %1690 = vst [vmem:[%s516 + $0x28] sm:$0xf] %v1658
        %1691 = vst [vmem:[%s516 + $0x2c] sm:$0xf] %v1659
        %1692 = vst [vmem:[%s516 + $0x30] sm:$0xf] %v1660
        %1693 = vst [vmem:[%s516 + $0x34] sm:$0xf] %v1661
        %1694 = vst [vmem:[%s516 + $0x38] sm:$0xf] %v1662
        %1695 = vst [vmem:[%s516 + $0x3c] sm:$0xf] %v1663
        %s1696 = sand.u32 %s226, 1
        %s1697 = scalar_lea.sflag [#allocation6], %s1696
        %s1698 = sand.u32 %s226, 1
        %s1699 = smul.addr %s1698, 64
        %s1700 = scalar_lea.vmem [#allocation16], %s1699
        %s1701 = sand.u32 %s252, 1
        %s1702 = scalar_lea.sflag [#allocation18], %s1701
        %s1703 = sand.u32 %s252, 1
        %s1704 = smul.addr %s1703, 64
        %s1705 = scalar_lea.vmem [#allocation17], %s1704
        // Predicated region
        $region93: #{gnn_node_forward.7} parent=51 // pred_check
          %p1706 = pneg %p236
        $region94: #{gnn_node_forward.7} parent=51 // pred_check_branch
          %1708 = sbr.rel (%p1706) target = $region96
        $region95: #{gnn_node_forward.7} parent=51 // pred_region
          %s1710 = ssub.s32 1024, 1024
          %1711 = vsyncadd %s1697, %s1710
          %s1712 = smul.addr %s30, 16
          %s1713 = smul.addr %s1712, 64
          %s1714 = scalar_lea.hbm %s8, %s1713
          %s1715 = sshll.u32 %s1700, 4
          %s1716 = int_to_ptr.vmem [resolvable:$true] %s1715
          %1721 = dma.vmem_to_hbm [thread:$0]  %s1716, 1024, %s1714, %s1697, 64, 64, 4
        $region96: #{gnn_node_forward.7} parent=51 // pred_fallthru
          _
        // Predicated region
        $region97: #{gnn_node_forward.7} parent=51 // pred_check
          %p1722 = pneg %p262
        $region98: #{gnn_node_forward.7} parent=51 // pred_check_branch
          %1724 = sbr.rel (%p1722) target = $region100
        $region99: #{gnn_node_forward.7} parent=51 // pred_region
          %s1726 = ssub.s32 1024, 1024
          %1727 = vsyncadd %s1702, %s1726
          %s1728 = smul.addr %s30, 16
          %s1729 = smul.addr %s1728, 64
          %s1730 = scalar_lea.hbm %s9, %s1729
          %s1731 = sshll.u32 %s1705, 4
          %s1732 = int_to_ptr.vmem [resolvable:$true] %s1731
          %1737 = dma.vmem_to_hbm [thread:$0]  %s1732, 1024, %s1730, %s1702, 64, 64, 4
        $region100: #{gnn_node_forward.7} parent=51 // pred_fallthru
          _
      $region52: #{gnn_node_forward.7} parent=5 // pred_fallthru
        _
      %p1738 = scmp.le.s32.totalorder 2, %s25
      // Predicated region
      $region101: #{gnn_node_forward.7} parent=5 // pred_check
        %p1739 = pneg %p1738
      $region102: #{gnn_node_forward.7} parent=5 // pred_check_branch
        %1741 = sbr.rel (%p1739) target = $region104
      $region103: #{gnn_node_forward.7} parent=5 // pred_region
        %s1742 = ssub.s32 %s25, 2
        // Predicated region
        $region105: #{gnn_node_forward.7} parent=103 // pred_check
          %p1743 = pneg %p242
        $region106: #{gnn_node_forward.7} parent=103 // pred_check_branch
          %1745 = sbr.rel (%p1743) target = $region108
        $region107: #{gnn_node_forward.7} parent=103 // pred_region
          %s1746 = sand.u32 %s227, 1
          %s1747 = scalar_lea.sflag [#allocation6], %s1746
          %s1748 = sand.u32 %s227, 1
          %s1749 = smul.addr %s1748, 64
          %s1750 = scalar_lea.vmem [#allocation16], %s1749
          %1751 = dma.done %s1747, 1024
        $region108: #{gnn_node_forward.7} parent=103 // pred_fallthru
          _
        // Predicated region
        $region109: #{gnn_node_forward.7} parent=103 // pred_check
          %p1752 = pneg %p268
        $region110: #{gnn_node_forward.7} parent=103 // pred_check_branch
          %1754 = sbr.rel (%p1752) target = $region112
        $region111: #{gnn_node_forward.7} parent=103 // pred_region
          %s1755 = sand.u32 %s253, 1
          %s1756 = scalar_lea.sflag [#allocation18], %s1755
          %s1757 = sand.u32 %s253, 1
          %s1758 = smul.addr %s1757, 64
          %s1759 = scalar_lea.vmem [#allocation17], %s1758
          %1760 = dma.done %s1756, 1024
        $region112: #{gnn_node_forward.7} parent=103 // pred_fallthru
          _
      $region104: #{gnn_node_forward.7} parent=5 // pred_fallthru
        _
    $region6: #{gnn_node_forward.7} parent=1 // loop_footer
      %s29 = sadd.s32 1, %s25
    $region7: #{gnn_node_forward.7} parent=1 // loop_footer_branch
      %24 = sbr.rel target = $region3
    $region8: #{gnn_node_forward.7} parent=1 // loop_exit
      _
    %1761 = vsyncpa [#allocation5], 1
    %s1762 = scalar_lea.sflag [#allocation5], 1
    %1763 = vsyncpa %s1762, 1
    %1764 = vsyncpa [#allocation8], 1
    %1765 = vsyncpa [#allocation11], 1
    %1766 = vsyncpa [#allocation6], 1
    %s1767 = scalar_lea.sflag [#allocation6], 1
    %1768 = vsyncpa %s1767, 1
    %1769 = vsyncpa [#allocation18], 1
    %s1770 = scalar_lea.sflag [#allocation18], 1
    %1771 = vsyncpa %s1770, 1

</llo_original>
